<compile_context>
chip_gen: v7x
topology: tpu7x:2x2x1
jax: 0.10.0
libtpu: 0.0.40
codegen_flags: <defaults>
</compile_context>

<pallas_src>
import jax
import jax.numpy as jnp
from jax import lax
from jax.experimental import pallas as pl
from jax.experimental.pallas import tpu as pltpu

# Small shapes consistent with the module's forward pass.
B = 2            # batch
C_IN = 4         # input_channels
L_IN = 80        # input length  -> conv/pool stack gives LSTM seq len T = 8
K = 3            # kernel_size
C1 = 16          # output_channels (conv1)
C2 = 32          # cnn_out_size   (conv2)
C3 = 32          # cnn_out_size   (conv3)
H = 64           # lstm_out_size
FC = 128         # fc_size
OUT_SIZE = 8     # output_size
# seq_length / feture_size / hidden_size / num_layers / dropout_prob do not affect
# the forward pass (LSTM is constructed single-layer, dropout unused in forward).


# ----------------------------- Pallas kernel -----------------------------

def _cnn_lstm_kernel(x_ref, w1_ref, b1_ref, s1_ref, w2_ref, b2_ref, s2_ref,
                     w3_ref, b3_ref, s3_ref, wih_ref, bl_ref, whh_ref,
                     wf1_ref, bf1_ref, wf2_ref, bf2_ref, o_ref):
    """Whole batch in one invocation.

    x_ref  : (B, Cin, L)        input, channel-major (native PyTorch layout)
    wN_ref : (CoutN, K*CinN)    conv weights, im2col-folded (k-major blocks)
    bN_ref : (CoutN, 1)
    sN_ref : (L_outN-1, L_halfN)   0/1 even-column selection (MaxPool1d(2))
    wih_ref: (C3, 4H)           LSTM W_ih^T
    bl_ref : (1, 4H)            b_ih + b_hh (pre-folded)
    whh_ref: (H, 4H)            LSTM W_hh^T
    wf1_ref: (H, FC), bf1_ref: (1, FC), wf2_ref: (FC, OUT), bf2_ref: (1, OUT)
    o_ref  : (B, OUT)           lane-dense output
    """
    f32 = jnp.float32
    n_batch = x_ref.shape[0]

    def conv_relu_pool(h, w_ref, b_ref, s_ref):
        # h: (Cin, L) channel-major.  One matmul for all K taps (im2col LHS).
        cin, l = h.shape
        k_taps = w_ref.shape[1] // cin
        l_out = l - k_taps + 1
        lhs = jnp.concatenate([h[:, k:k + l_out] for k in range(k_taps)], axis=0)
        y = jnp.dot(w_ref[...], lhs, preferred_element_type=f32) + b_ref[...]
        y = jnp.maximum(y, 0.0)                                  # ReLU
        pair = jnp.maximum(y[:, :l_out - 1], y[:, 1:])           # neighbour max (VPU)
        return jnp.dot(pair, s_ref[...], preferred_element_type=f32)  # even columns

    # ---- conv stack per batch element; build LSTM input sequences ----
    seq_rows = []
    t_len = 1
    for b in range(n_batch):
        h0 = x_ref[b]                                        # (Cin, L)
        h1 = conv_relu_pool(h0, w1_ref, b1_ref, s1_ref)      # (16, 39)
        h2 = conv_relu_pool(h1, w2_ref, b2_ref, s2_ref)      # (32, 18)
        h3 = conv_relu_pool(h2, w3_ref, b3_ref, s3_ref)      # (C3, T) perm. channels
        c3, t_len = h3.shape
        groups = c3 // t_len
        # torch `view(B,-1,C)` == lane-concat of the grouped (T, T) row blocks.
        seq_rows.append(jnp.concatenate(
            [h3[g * t_len:(g + 1) * t_len, :] for g in range(groups)], axis=1))

    seq_all = jnp.concatenate(seq_rows, axis=0)              # (B*T, C3)

    # ---- hoisted input projection: ONE matmul for all timesteps & gates ----
    gx_all = jnp.dot(seq_all, wih_ref[...],
                     preferred_element_type=f32) + bl_ref[...]   # (B*T, 4H)

    # ---- LSTM recurrence: fused gates, batched state, fully unrolled ----
    hid = whh_ref.shape[0]
    h_st = jnp.zeros((n_batch, hid), f32)
    c_st = jnp.zeros((n_batch, hid), f32)
    for t in range(t_len):
        xg = jnp.concatenate(
            [gx_all[b * t_len + t:b * t_len + t + 1, :] for b in range(n_batch)],
            axis=0)                                           # (B, 4H)
        gates = xg + jnp.dot(h_st, whh_ref[...], preferred_element_type=f32)
        i_g = jax.nn.sigmoid(gates[:, 0:hid])
        f_g = jax.nn.sigmoid(gates[:, hid:2 * hid])
        g_g = jnp.tanh(gates[:, 2 * hid:3 * hid])
        o_g = jax.nn.sigmoid(gates[:, 3 * hid:4 * hid])
        c_st = f_g * c_st + i_g * g_g
        h_st = o_g * jnp.tanh(c_st)

    # ---- fc1 -> ReLU -> fc2 epilogue (lane-dense, row-major) ----
    m = jnp.maximum(jnp.dot(h_st, wf1_ref[...], preferred_element_type=f32)
                    + bf1_ref[...], 0.0)
    o_ref[...] = jnp.dot(m, wf2_ref[...], preferred_element_type=f32) + bf2_ref[...]


# ----------------------------- wrapper -----------------------------

def cnn_lstm_forward(x, p):
    """x: (B, C_in, L) float32 -> (B, OUT).  Matches CNNLSTM.forward (eval mode)."""
    b, c_in, l_in = x.shape
    k = p["conv1_w"].shape[-1]
    c3 = p["conv3_w"].shape[0]
    out_size = p["fc2_w"].shape[0]

    l1o = l_in - k + 1
    l2o = l1o // 2 - k + 1
    l3o = l2o // 2 - k + 1
    t_len = l3o // 2                                # final pooled length == LSTM T
    assert c3 % t_len == 0, "view-folding requires cnn_out_size % pooled_len == 0"
    groups = c3 // t_len

    def fold_taps(w):                               # (Cout, Cin, K) -> (Cout, K*Cin)
        co, ci, kk = w.shape
        return jnp.transpose(w, (0, 2, 1)).reshape(co, kk * ci)

    def pool_select(l_out):                         # (L_out-1, L_out//2), S[2j, j] = 1
        half = l_out // 2
        rows = jnp.arange(l_out - 1)[:, None]
        cols = jnp.arange(half)[None, :]
        return (rows == 2 * cols).astype(jnp.float32)

    # Fold torch's `x.view(B,-1,C)` into a permutation of conv3's output channels:
    # new channel c' = g*T + r  <->  old channel groups*r + g.
    o_idx = jnp.arange(c3)
    perm = groups * (o_idx % t_len) + o_idx // t_len
    w3p = p["conv3_w"][perm]
    b3p = p["conv3_b"][perm]

    w1m, b1c = fold_taps(p["conv1_w"]), p["conv1_b"].reshape(-1, 1)
    w2m, b2c = fold_taps(p["conv2_w"]), p["conv2_b"].reshape(-1, 1)
    w3m, b3c = fold_taps(w3p), b3p.reshape(-1, 1)
    s1, s2, s3 = pool_select(l1o), pool_select(l2o), pool_select(l3o)

    wih_t = p["w_ih"].T                             # (C3, 4H)
    whh_t = p["w_hh"].T                             # (H, 4H)
    bl = (p["b_ih"] + p["b_hh"]).reshape(1, -1)     # (1, 4H)
    wf1t, bf1 = p["fc1_w"].T, p["fc1_b"].reshape(1, -1)
    wf2t, bf2 = p["fc2_w"].T, p["fc2_b"].reshape(1, -1)

    operands = (x, w1m, b1c, s1, w2m, b2c, s2, w3m, b3c, s3,
                wih_t, bl, whh_t, wf1t, bf1, wf2t, bf2)

    def full_spec(arr):
        nd = arr.ndim
        return pl.BlockSpec(arr.shape, lambda i: (0,) * nd)

    out = pl.pallas_call(
        _cnn_lstm_kernel,
        out_shape=jax.ShapeDtypeStruct((b, out_size), jnp.float32),
        grid=(1,),
        in_specs=[full_spec(a) for a in operands],
        out_specs=pl.BlockSpec((b, out_size), lambda i: (0, 0)),
        compiler_params=pltpu.CompilerParams(
            dimension_semantics=("arbitrary",)),
    )(*operands)
    return out


# ----------------------------- pure-JAX reference -----------------------------

def ref_forward(x, p):
    """Straightforward JAX mirror of CNNLSTM.forward (uses the original params)."""
    h = x
    for w, bias in ((p["conv1_w"], p["conv1_b"]),
                    (p["conv2_w"], p["conv2_b"]),
                    (p["conv3_w"], p["conv3_b"])):
        k = w.shape[-1]
        l_out = h.shape[-1] - k + 1
        y = sum(jnp.einsum("oc,bcl->bol", w[:, :, kk], h[:, :, kk:kk + l_out])
                for kk in range(k))
        y = jnp.maximum(y + bias[None, :, None], 0.0)
        l_half = y.shape[-1] // 2
        h = y[:, :, :2 * l_half].reshape(y.shape[0], y.shape[1], l_half, 2).max(axis=-1)

    b_, c3, _ = h.shape
    seq = h.reshape(b_, -1, c3)                    # == torch x.view(B, -1, C)

    w_ih, w_hh = p["w_ih"], p["w_hh"]
    bias = p["b_ih"] + p["b_hh"]
    hd = w_hh.shape[1]

    def step(carry, x_t):
        hp, cp = carry
        gates = x_t @ w_ih.T + hp @ w_hh.T + bias
        i = jax.nn.sigmoid(gates[:, 0:hd])
        f = jax.nn.sigmoid(gates[:, hd:2 * hd])
        g = jnp.tanh(gates[:, 2 * hd:3 * hd])
        o = jax.nn.sigmoid(gates[:, 3 * hd:4 * hd])
        cn = f * cp + i * g
        hn = o * jnp.tanh(cn)
        return (hn, cn), hn

    h0 = jnp.zeros((b_, hd), jnp.float32)
    c0 = jnp.zeros((b_, hd), jnp.float32)
    (h_last, _), _ = lax.scan(step, (h0, c0), jnp.swapaxes(seq, 0, 1))

    m = jnp.maximum(h_last @ p["fc1_w"].T + p["fc1_b"], 0.0)
    return m @ p["fc2_w"].T + p["fc2_b"]


# ----------------------------- params / main -----------------------------

def init_params(key):
    ks = iter(jax.random.split(key, 20))

    def u(shape, bound):
        return jax.random.uniform(next(ks), shape, jnp.float32, -bound, bound)

    k1 = 1.0 / (C_IN * K) ** 0.5
    k2 = 1.0 / (C1 * K) ** 0.5
    k3 = 1.0 / (C2 * K) ** 0.5
    kl = 1.0 / H ** 0.5
    kf1 = 1.0 / H ** 0.5
    kf2 = 1.0 / FC ** 0.5
    return {
        "conv1_w": u((C1, C_IN, K), k1), "conv1_b": u((C1,), k1),
        "conv2_w": u((C2, C1, K), k2), "conv2_b": u((C2,), k2),
        "conv3_w": u((C3, C2, K), k3), "conv3_b": u((C3,), k3),
        "w_ih": u((4 * H, C3), kl), "w_hh": u((4 * H, H), kl),
        "b_ih": u((4 * H,), kl), "b_hh": u((4 * H,), kl),
        "fc1_w": u((FC, H), kf1), "fc1_b": u((FC,), kf1),
        "fc2_w": u((OUT_SIZE, FC), kf2), "fc2_b": u((OUT_SIZE,), kf2),
    }


if __name__ == "__main__":
    key = jax.random.PRNGKey(0)
    k_param, k_x = jax.random.split(key)
    params = init_params(k_param)
    x = jax.random.normal(k_x, (B, C_IN, L_IN), jnp.float32)

    pallas_fn = jax.jit(cnn_lstm_forward)
    ref_fn = jax.jit(ref_forward)

    out = jax.block_until_ready(pallas_fn(x, params))
    ref = jax.block_until_ready(ref_fn(x, params))

    assert out.shape == (B, OUT_SIZE), out.shape
    max_err = float(jnp.max(jnp.abs(out - ref)))
    assert bool(jnp.allclose(out, ref, rtol=2e-3, atol=2e-3)), max_err
    print("KERNEL_OK")
</pallas_src>

<mosaic_0001>
module attributes {stable_mosaic.version = 11 : i64} {
  func.func @_cnn_lstm_kernel(%arg0: i32, %arg1: memref<2x4x80xf32, #tpu.memory_space<vmem>>, %arg2: memref<16x12xf32, #tpu.memory_space<vmem>>, %arg3: memref<16x1xf32, #tpu.memory_space<vmem>>, %arg4: memref<77x39xf32, #tpu.memory_space<vmem>>, %arg5: memref<32x48xf32, #tpu.memory_space<vmem>>, %arg6: memref<32x1xf32, #tpu.memory_space<vmem>>, %arg7: memref<36x18xf32, #tpu.memory_space<vmem>>, %arg8: memref<32x96xf32, #tpu.memory_space<vmem>>, %arg9: memref<32x1xf32, #tpu.memory_space<vmem>>, %arg10: memref<15x8xf32, #tpu.memory_space<vmem>>, %arg11: memref<32x256xf32, #tpu.memory_space<vmem>>, %arg12: memref<1x256xf32, #tpu.memory_space<vmem>>, %arg13: memref<64x256xf32, #tpu.memory_space<vmem>>, %arg14: memref<64x128xf32, #tpu.memory_space<vmem>>, %arg15: memref<1x128xf32, #tpu.memory_space<vmem>>, %arg16: memref<128x8xf32, #tpu.memory_space<vmem>>, %arg17: memref<1x8xf32, #tpu.memory_space<vmem>>, %arg18: memref<2x8xf32, #tpu.memory_space<vmem>>) attributes {dimension_semantics = [#tpu.dimension_semantics<arbitrary>], iteration_bounds = array<i64: 1>, scalar_prefetch = 0 : i64, scratch_operands = 0 : i64, tpu.core_type = #tpu.core_type<tc>, window_params = [{pipeline_mode = #tpu.pipeline_mode<synchronous>, transform_indices = @transform_0, window_bounds = array<i64: 2, 4, 80>}, {pipeline_mode = #tpu.pipeline_mode<synchronous>, transform_indices = @transform_1, window_bounds = array<i64: 16, 12>}, {pipeline_mode = #tpu.pipeline_mode<synchronous>, transform_indices = @transform_2, window_bounds = array<i64: 16, 1>}, {pipeline_mode = #tpu.pipeline_mode<synchronous>, transform_indices = @transform_3, window_bounds = array<i64: 77, 39>}, {pipeline_mode = #tpu.pipeline_mode<synchronous>, transform_indices = @transform_4, window_bounds = array<i64: 32, 48>}, {pipeline_mode = #tpu.pipeline_mode<synchronous>, transform_indices = @transform_5, window_bounds = array<i64: 32, 1>}, {pipeline_mode = #tpu.pipeline_mode<synchronous>, transform_indices = @transform_6, window_bounds = array<i64: 36, 18>}, {pipeline_mode = #tpu.pipeline_mode<synchronous>, transform_indices = @transform_7, window_bounds = array<i64: 32, 96>}, {pipeline_mode = #tpu.pipeline_mode<synchronous>, transform_indices = @transform_8, window_bounds = array<i64: 32, 1>}, {pipeline_mode = #tpu.pipeline_mode<synchronous>, transform_indices = @transform_9, window_bounds = array<i64: 15, 8>}, {pipeline_mode = #tpu.pipeline_mode<synchronous>, transform_indices = @transform_10, window_bounds = array<i64: 32, 256>}, {pipeline_mode = #tpu.pipeline_mode<synchronous>, transform_indices = @transform_11, window_bounds = array<i64: 1, 256>}, {pipeline_mode = #tpu.pipeline_mode<synchronous>, transform_indices = @transform_12, window_bounds = array<i64: 64, 256>}, {pipeline_mode = #tpu.pipeline_mode<synchronous>, transform_indices = @transform_13, window_bounds = array<i64: 64, 128>}, {pipeline_mode = #tpu.pipeline_mode<synchronous>, transform_indices = @transform_14, window_bounds = array<i64: 1, 128>}, {pipeline_mode = #tpu.pipeline_mode<synchronous>, transform_indices = @transform_15, window_bounds = array<i64: 128, 8>}, {pipeline_mode = #tpu.pipeline_mode<synchronous>, transform_indices = @transform_16, window_bounds = array<i64: 1, 8>}, {pipeline_mode = #tpu.pipeline_mode<synchronous>, transform_indices = @transform_17, window_bounds = array<i64: 2, 8>}]} {
    %c0 = arith.constant 0 : index
    %c0_0 = arith.constant 0 : index
    %c0_1 = arith.constant 0 : index
    %0 = vector.load %arg1[%c0, %c0_0, %c0_1] : memref<2x4x80xf32, #tpu.memory_space<vmem>>, vector<1x4x80xf32>
    %1 = vector.shape_cast %0 : vector<1x4x80xf32> to vector<4x80xf32>
    %2 = vector.extract_strided_slice %1 {offsets = [0, 0], sizes = [4, 78], strides = [1, 1]} : vector<4x80xf32> to vector<4x78xf32>
    %3 = vector.extract_strided_slice %1 {offsets = [0, 1], sizes = [4, 78], strides = [1, 1]} : vector<4x80xf32> to vector<4x78xf32>
    %4 = vector.extract_strided_slice %1 {offsets = [0, 2], sizes = [4, 78], strides = [1, 1]} : vector<4x80xf32> to vector<4x78xf32>
    %5 = tpu.concatenate %2, %3, %4 in 0 : vector<4x78xf32>, vector<4x78xf32>, vector<4x78xf32> -> vector<12x78xf32>
    %c0_2 = arith.constant 0 : index
    %c0_3 = arith.constant 0 : index
    %6 = vector.load %arg2[%c0_2, %c0_3] : memref<16x12xf32, #tpu.memory_space<vmem>>, vector<16x12xf32>
    %cst = arith.constant dense<0.000000e+00> : vector<16x78xf32>
    %7 = tpu.matmul %6, %5, %cst {dimension_numbers = #tpu.dot_dimension_numbers<[1], [0], [0], [1], [0, 0, 1, 1], [], []>} : vector<16x12xf32>, vector<12x78xf32>, vector<16x78xf32> -> vector<16x78xf32>
    %c0_4 = arith.constant 0 : index
    %c0_5 = arith.constant 0 : index
    %8 = vector.load %arg3[%c0_4, %c0_5] : memref<16x1xf32, #tpu.memory_space<vmem>>, vector<16x1xf32>
    %9 = vector.broadcast %8 : vector<16x1xf32> to vector<16x78xf32>
    %10 = arith.addf %7, %9 : vector<16x78xf32>
    %cst_6 = arith.constant 0.000000e+00 : f32
    %11 = vector.broadcast %cst_6 : f32 to vector<16x78xf32>
    %12 = arith.maximumf %10, %11 : vector<16x78xf32>
    %13 = vector.extract_strided_slice %12 {offsets = [0, 0], sizes = [16, 77], strides = [1, 1]} : vector<16x78xf32> to vector<16x77xf32>
    %14 = vector.extract_strided_slice %12 {offsets = [0, 1], sizes = [16, 77], strides = [1, 1]} : vector<16x78xf32> to vector<16x77xf32>
    %15 = arith.maximumf %13, %14 : vector<16x77xf32>
    %c0_7 = arith.constant 0 : index
    %c0_8 = arith.constant 0 : index
    %16 = vector.load %arg4[%c0_7, %c0_8] : memref<77x39xf32, #tpu.memory_space<vmem>>, vector<77x39xf32>
    %cst_9 = arith.constant dense<0.000000e+00> : vector<16x39xf32>
    %17 = tpu.matmul %15, %16, %cst_9 {dimension_numbers = #tpu.dot_dimension_numbers<[1], [0], [0], [1], [0, 0, 1, 1], [], []>} : vector<16x77xf32>, vector<77x39xf32>, vector<16x39xf32> -> vector<16x39xf32>
    %18 = vector.extract_strided_slice %17 {offsets = [0, 0], sizes = [16, 37], strides = [1, 1]} : vector<16x39xf32> to vector<16x37xf32>
    %19 = vector.extract_strided_slice %17 {offsets = [0, 1], sizes = [16, 37], strides = [1, 1]} : vector<16x39xf32> to vector<16x37xf32>
    %20 = vector.extract_strided_slice %17 {offsets = [0, 2], sizes = [16, 37], strides = [1, 1]} : vector<16x39xf32> to vector<16x37xf32>
    %21 = tpu.concatenate %18, %19, %20 in 0 : vector<16x37xf32>, vector<16x37xf32>, vector<16x37xf32> -> vector<48x37xf32>
    %c0_10 = arith.constant 0 : index
    %c0_11 = arith.constant 0 : index
    %22 = vector.load %arg5[%c0_10, %c0_11] : memref<32x48xf32, #tpu.memory_space<vmem>>, vector<32x48xf32>
    %cst_12 = arith.constant dense<0.000000e+00> : vector<32x37xf32>
    %23 = tpu.matmul %22, %21, %cst_12 {dimension_numbers = #tpu.dot_dimension_numbers<[1], [0], [0], [1], [0, 0, 1, 1], [], []>} : vector<32x48xf32>, vector<48x37xf32>, vector<32x37xf32> -> vector<32x37xf32>
    %c0_13 = arith.constant 0 : index
    %c0_14 = arith.constant 0 : index
    %24 = vector.load %arg6[%c0_13, %c0_14] : memref<32x1xf32, #tpu.memory_space<vmem>>, vector<32x1xf32>
    %25 = vector.broadcast %24 : vector<32x1xf32> to vector<32x37xf32>
    %26 = arith.addf %23, %25 : vector<32x37xf32>
    %cst_15 = arith.constant 0.000000e+00 : f32
    %27 = vector.broadcast %cst_15 : f32 to vector<32x37xf32>
    %28 = arith.maximumf %26, %27 : vector<32x37xf32>
    %29 = vector.extract_strided_slice %28 {offsets = [0, 0], sizes = [32, 36], strides = [1, 1]} : vector<32x37xf32> to vector<32x36xf32>
    %30 = vector.extract_strided_slice %28 {offsets = [0, 1], sizes = [32, 36], strides = [1, 1]} : vector<32x37xf32> to vector<32x36xf32>
    %31 = arith.maximumf %29, %30 : vector<32x36xf32>
    %c0_16 = arith.constant 0 : index
    %c0_17 = arith.constant 0 : index
    %32 = vector.load %arg7[%c0_16, %c0_17] : memref<36x18xf32, #tpu.memory_space<vmem>>, vector<36x18xf32>
    %cst_18 = arith.constant dense<0.000000e+00> : vector<32x18xf32>
    %33 = tpu.matmul %31, %32, %cst_18 {dimension_numbers = #tpu.dot_dimension_numbers<[1], [0], [0], [1], [0, 0, 1, 1], [], []>} : vector<32x36xf32>, vector<36x18xf32>, vector<32x18xf32> -> vector<32x18xf32>
    %34 = vector.extract_strided_slice %33 {offsets = [0, 0], sizes = [32, 16], strides = [1, 1]} : vector<32x18xf32> to vector<32x16xf32>
    %35 = vector.extract_strided_slice %33 {offsets = [0, 1], sizes = [32, 16], strides = [1, 1]} : vector<32x18xf32> to vector<32x16xf32>
    %36 = vector.extract_strided_slice %33 {offsets = [0, 2], sizes = [32, 16], strides = [1, 1]} : vector<32x18xf32> to vector<32x16xf32>
    %37 = tpu.concatenate %34, %35, %36 in 0 : vector<32x16xf32>, vector<32x16xf32>, vector<32x16xf32> -> vector<96x16xf32>
    %c0_19 = arith.constant 0 : index
    %c0_20 = arith.constant 0 : index
    %38 = vector.load %arg8[%c0_19, %c0_20] : memref<32x96xf32, #tpu.memory_space<vmem>>, vector<32x96xf32>
    %cst_21 = arith.constant dense<0.000000e+00> : vector<32x16xf32>
    %39 = tpu.matmul %38, %37, %cst_21 {dimension_numbers = #tpu.dot_dimension_numbers<[1], [0], [0], [1], [0, 0, 1, 1], [], []>} : vector<32x96xf32>, vector<96x16xf32>, vector<32x16xf32> -> vector<32x16xf32>
    %c0_22 = arith.constant 0 : index
    %c0_23 = arith.constant 0 : index
    %40 = vector.load %arg9[%c0_22, %c0_23] : memref<32x1xf32, #tpu.memory_space<vmem>>, vector<32x1xf32>
    %41 = vector.broadcast %40 : vector<32x1xf32> to vector<32x16xf32>
    %42 = arith.addf %39, %41 : vector<32x16xf32>
    %cst_24 = arith.constant 0.000000e+00 : f32
    %43 = vector.broadcast %cst_24 : f32 to vector<32x16xf32>
    %44 = arith.maximumf %42, %43 : vector<32x16xf32>
    %45 = vector.extract_strided_slice %44 {offsets = [0, 0], sizes = [32, 15], strides = [1, 1]} : vector<32x16xf32> to vector<32x15xf32>
    %46 = vector.extract_strided_slice %44 {offsets = [0, 1], sizes = [32, 15], strides = [1, 1]} : vector<32x16xf32> to vector<32x15xf32>
    %47 = arith.maximumf %45, %46 : vector<32x15xf32>
    %c0_25 = arith.constant 0 : index
    %c0_26 = arith.constant 0 : index
    %48 = vector.load %arg10[%c0_25, %c0_26] : memref<15x8xf32, #tpu.memory_space<vmem>>, vector<15x8xf32>
    %cst_27 = arith.constant dense<0.000000e+00> : vector<32x8xf32>
    %49 = tpu.matmul %47, %48, %cst_27 {dimension_numbers = #tpu.dot_dimension_numbers<[1], [0], [0], [1], [0, 0, 1, 1], [], []>} : vector<32x15xf32>, vector<15x8xf32>, vector<32x8xf32> -> vector<32x8xf32>
    %50 = vector.extract_strided_slice %49 {offsets = [0, 0], sizes = [8, 8], strides = [1, 1]} : vector<32x8xf32> to vector<8x8xf32>
    %51 = vector.extract_strided_slice %49 {offsets = [8, 0], sizes = [8, 8], strides = [1, 1]} : vector<32x8xf32> to vector<8x8xf32>
    %52 = vector.extract_strided_slice %49 {offsets = [16, 0], sizes = [8, 8], strides = [1, 1]} : vector<32x8xf32> to vector<8x8xf32>
    %53 = vector.extract_strided_slice %49 {offsets = [24, 0], sizes = [8, 8], strides = [1, 1]} : vector<32x8xf32> to vector<8x8xf32>
    %54 = tpu.concatenate %50, %51, %52, %53 in 1 : vector<8x8xf32>, vector<8x8xf32>, vector<8x8xf32>, vector<8x8xf32> -> vector<8x32xf32>
    %c1 = arith.constant 1 : index
    %c0_28 = arith.constant 0 : index
    %c0_29 = arith.constant 0 : index
    %55 = vector.load %arg1[%c1, %c0_28, %c0_29] : memref<2x4x80xf32, #tpu.memory_space<vmem>>, vector<1x4x80xf32>
    %56 = vector.shape_cast %55 : vector<1x4x80xf32> to vector<4x80xf32>
    %57 = vector.extract_strided_slice %56 {offsets = [0, 0], sizes = [4, 78], strides = [1, 1]} : vector<4x80xf32> to vector<4x78xf32>
    %58 = vector.extract_strided_slice %56 {offsets = [0, 1], sizes = [4, 78], strides = [1, 1]} : vector<4x80xf32> to vector<4x78xf32>
    %59 = vector.extract_strided_slice %56 {offsets = [0, 2], sizes = [4, 78], strides = [1, 1]} : vector<4x80xf32> to vector<4x78xf32>
    %60 = tpu.concatenate %57, %58, %59 in 0 : vector<4x78xf32>, vector<4x78xf32>, vector<4x78xf32> -> vector<12x78xf32>
    %c0_30 = arith.constant 0 : index
    %c0_31 = arith.constant 0 : index
    %61 = vector.load %arg2[%c0_30, %c0_31] : memref<16x12xf32, #tpu.memory_space<vmem>>, vector<16x12xf32>
    %cst_32 = arith.constant dense<0.000000e+00> : vector<16x78xf32>
    %62 = tpu.matmul %61, %60, %cst_32 {dimension_numbers = #tpu.dot_dimension_numbers<[1], [0], [0], [1], [0, 0, 1, 1], [], []>} : vector<16x12xf32>, vector<12x78xf32>, vector<16x78xf32> -> vector<16x78xf32>
    %c0_33 = arith.constant 0 : index
    %c0_34 = arith.constant 0 : index
    %63 = vector.load %arg3[%c0_33, %c0_34] : memref<16x1xf32, #tpu.memory_space<vmem>>, vector<16x1xf32>
    %64 = vector.broadcast %63 : vector<16x1xf32> to vector<16x78xf32>
    %65 = arith.addf %62, %64 : vector<16x78xf32>
    %cst_35 = arith.constant 0.000000e+00 : f32
    %66 = vector.broadcast %cst_35 : f32 to vector<16x78xf32>
    %67 = arith.maximumf %65, %66 : vector<16x78xf32>
    %68 = vector.extract_strided_slice %67 {offsets = [0, 0], sizes = [16, 77], strides = [1, 1]} : vector<16x78xf32> to vector<16x77xf32>
    %69 = vector.extract_strided_slice %67 {offsets = [0, 1], sizes = [16, 77], strides = [1, 1]} : vector<16x78xf32> to vector<16x77xf32>
    %70 = arith.maximumf %68, %69 : vector<16x77xf32>
    %c0_36 = arith.constant 0 : index
    %c0_37 = arith.constant 0 : index
    %71 = vector.load %arg4[%c0_36, %c0_37] : memref<77x39xf32, #tpu.memory_space<vmem>>, vector<77x39xf32>
    %cst_38 = arith.constant dense<0.000000e+00> : vector<16x39xf32>
    %72 = tpu.matmul %70, %71, %cst_38 {dimension_numbers = #tpu.dot_dimension_numbers<[1], [0], [0], [1], [0, 0, 1, 1], [], []>} : vector<16x77xf32>, vector<77x39xf32>, vector<16x39xf32> -> vector<16x39xf32>
    %73 = vector.extract_strided_slice %72 {offsets = [0, 0], sizes = [16, 37], strides = [1, 1]} : vector<16x39xf32> to vector<16x37xf32>
    %74 = vector.extract_strided_slice %72 {offsets = [0, 1], sizes = [16, 37], strides = [1, 1]} : vector<16x39xf32> to vector<16x37xf32>
    %75 = vector.extract_strided_slice %72 {offsets = [0, 2], sizes = [16, 37], strides = [1, 1]} : vector<16x39xf32> to vector<16x37xf32>
    %76 = tpu.concatenate %73, %74, %75 in 0 : vector<16x37xf32>, vector<16x37xf32>, vector<16x37xf32> -> vector<48x37xf32>
    %c0_39 = arith.constant 0 : index
    %c0_40 = arith.constant 0 : index
    %77 = vector.load %arg5[%c0_39, %c0_40] : memref<32x48xf32, #tpu.memory_space<vmem>>, vector<32x48xf32>
    %cst_41 = arith.constant dense<0.000000e+00> : vector<32x37xf32>
    %78 = tpu.matmul %77, %76, %cst_41 {dimension_numbers = #tpu.dot_dimension_numbers<[1], [0], [0], [1], [0, 0, 1, 1], [], []>} : vector<32x48xf32>, vector<48x37xf32>, vector<32x37xf32> -> vector<32x37xf32>
    %c0_42 = arith.constant 0 : index
    %c0_43 = arith.constant 0 : index
    %79 = vector.load %arg6[%c0_42, %c0_43] : memref<32x1xf32, #tpu.memory_space<vmem>>, vector<32x1xf32>
    %80 = vector.broadcast %79 : vector<32x1xf32> to vector<32x37xf32>
    %81 = arith.addf %78, %80 : vector<32x37xf32>
    %cst_44 = arith.constant 0.000000e+00 : f32
    %82 = vector.broadcast %cst_44 : f32 to vector<32x37xf32>
    %83 = arith.maximumf %81, %82 : vector<32x37xf32>
    %84 = vector.extract_strided_slice %83 {offsets = [0, 0], sizes = [32, 36], strides = [1, 1]} : vector<32x37xf32> to vector<32x36xf32>
    %85 = vector.extract_strided_slice %83 {offsets = [0, 1], sizes = [32, 36], strides = [1, 1]} : vector<32x37xf32> to vector<32x36xf32>
    %86 = arith.maximumf %84, %85 : vector<32x36xf32>
    %c0_45 = arith.constant 0 : index
    %c0_46 = arith.constant 0 : index
    %87 = vector.load %arg7[%c0_45, %c0_46] : memref<36x18xf32, #tpu.memory_space<vmem>>, vector<36x18xf32>
    %cst_47 = arith.constant dense<0.000000e+00> : vector<32x18xf32>
    %88 = tpu.matmul %86, %87, %cst_47 {dimension_numbers = #tpu.dot_dimension_numbers<[1], [0], [0], [1], [0, 0, 1, 1], [], []>} : vector<32x36xf32>, vector<36x18xf32>, vector<32x18xf32> -> vector<32x18xf32>
    %89 = vector.extract_strided_slice %88 {offsets = [0, 0], sizes = [32, 16], strides = [1, 1]} : vector<32x18xf32> to vector<32x16xf32>
    %90 = vector.extract_strided_slice %88 {offsets = [0, 1], sizes = [32, 16], strides = [1, 1]} : vector<32x18xf32> to vector<32x16xf32>
    %91 = vector.extract_strided_slice %88 {offsets = [0, 2], sizes = [32, 16], strides = [1, 1]} : vector<32x18xf32> to vector<32x16xf32>
    %92 = tpu.concatenate %89, %90, %91 in 0 : vector<32x16xf32>, vector<32x16xf32>, vector<32x16xf32> -> vector<96x16xf32>
    %c0_48 = arith.constant 0 : index
    %c0_49 = arith.constant 0 : index
    %93 = vector.load %arg8[%c0_48, %c0_49] : memref<32x96xf32, #tpu.memory_space<vmem>>, vector<32x96xf32>
    %cst_50 = arith.constant dense<0.000000e+00> : vector<32x16xf32>
    %94 = tpu.matmul %93, %92, %cst_50 {dimension_numbers = #tpu.dot_dimension_numbers<[1], [0], [0], [1], [0, 0, 1, 1], [], []>} : vector<32x96xf32>, vector<96x16xf32>, vector<32x16xf32> -> vector<32x16xf32>
    %c0_51 = arith.constant 0 : index
    %c0_52 = arith.constant 0 : index
    %95 = vector.load %arg9[%c0_51, %c0_52] : memref<32x1xf32, #tpu.memory_space<vmem>>, vector<32x1xf32>
    %96 = vector.broadcast %95 : vector<32x1xf32> to vector<32x16xf32>
    %97 = arith.addf %94, %96 : vector<32x16xf32>
    %cst_53 = arith.constant 0.000000e+00 : f32
    %98 = vector.broadcast %cst_53 : f32 to vector<32x16xf32>
    %99 = arith.maximumf %97, %98 : vector<32x16xf32>
    %100 = vector.extract_strided_slice %99 {offsets = [0, 0], sizes = [32, 15], strides = [1, 1]} : vector<32x16xf32> to vector<32x15xf32>
    %101 = vector.extract_strided_slice %99 {offsets = [0, 1], sizes = [32, 15], strides = [1, 1]} : vector<32x16xf32> to vector<32x15xf32>
    %102 = arith.maximumf %100, %101 : vector<32x15xf32>
    %c0_54 = arith.constant 0 : index
    %c0_55 = arith.constant 0 : index
    %103 = vector.load %arg10[%c0_54, %c0_55] : memref<15x8xf32, #tpu.memory_space<vmem>>, vector<15x8xf32>
    %cst_56 = arith.constant dense<0.000000e+00> : vector<32x8xf32>
    %104 = tpu.matmul %102, %103, %cst_56 {dimension_numbers = #tpu.dot_dimension_numbers<[1], [0], [0], [1], [0, 0, 1, 1], [], []>} : vector<32x15xf32>, vector<15x8xf32>, vector<32x8xf32> -> vector<32x8xf32>
    %105 = vector.extract_strided_slice %104 {offsets = [0, 0], sizes = [8, 8], strides = [1, 1]} : vector<32x8xf32> to vector<8x8xf32>
    %106 = vector.extract_strided_slice %104 {offsets = [8, 0], sizes = [8, 8], strides = [1, 1]} : vector<32x8xf32> to vector<8x8xf32>
    %107 = vector.extract_strided_slice %104 {offsets = [16, 0], sizes = [8, 8], strides = [1, 1]} : vector<32x8xf32> to vector<8x8xf32>
    %108 = vector.extract_strided_slice %104 {offsets = [24, 0], sizes = [8, 8], strides = [1, 1]} : vector<32x8xf32> to vector<8x8xf32>
    %109 = tpu.concatenate %105, %106, %107, %108 in 1 : vector<8x8xf32>, vector<8x8xf32>, vector<8x8xf32>, vector<8x8xf32> -> vector<8x32xf32>
    %110 = tpu.concatenate %54, %109 in 0 : vector<8x32xf32>, vector<8x32xf32> -> vector<16x32xf32>
    %c0_57 = arith.constant 0 : index
    %c0_58 = arith.constant 0 : index
    %111 = vector.load %arg11[%c0_57, %c0_58] : memref<32x256xf32, #tpu.memory_space<vmem>>, vector<32x256xf32>
    %cst_59 = arith.constant dense<0.000000e+00> : vector<16x256xf32>
    %112 = tpu.matmul %110, %111, %cst_59 {dimension_numbers = #tpu.dot_dimension_numbers<[1], [0], [0], [1], [0, 0, 1, 1], [], []>} : vector<16x32xf32>, vector<32x256xf32>, vector<16x256xf32> -> vector<16x256xf32>
    %c0_60 = arith.constant 0 : index
    %c0_61 = arith.constant 0 : index
    %113 = vector.load %arg12[%c0_60, %c0_61] : memref<1x256xf32, #tpu.memory_space<vmem>>, vector<1x256xf32>
    %114 = vector.broadcast %113 : vector<1x256xf32> to vector<16x256xf32>
    %115 = arith.addf %112, %114 : vector<16x256xf32>
    %cst_62 = arith.constant 0.000000e+00 : f32
    %116 = vector.broadcast %cst_62 : f32 to vector<2x64xf32>
    %cst_63 = arith.constant 0.000000e+00 : f32
    %117 = vector.broadcast %cst_63 : f32 to vector<2x64xf32>
    %118 = vector.extract_strided_slice %115 {offsets = [0, 0], sizes = [1, 256], strides = [1, 1]} : vector<16x256xf32> to vector<1x256xf32>
    %119 = vector.extract_strided_slice %115 {offsets = [8, 0], sizes = [1, 256], strides = [1, 1]} : vector<16x256xf32> to vector<1x256xf32>
    %120 = tpu.concatenate %118, %119 in 0 : vector<1x256xf32>, vector<1x256xf32> -> vector<2x256xf32>
    %c0_64 = arith.constant 0 : index
    %c0_65 = arith.constant 0 : index
    %121 = vector.load %arg13[%c0_64, %c0_65] : memref<64x256xf32, #tpu.memory_space<vmem>>, vector<64x256xf32>
    %cst_66 = arith.constant dense<0.000000e+00> : vector<2x256xf32>
    %122 = tpu.matmul %116, %121, %cst_66 {dimension_numbers = #tpu.dot_dimension_numbers<[1], [0], [0], [1], [0, 0, 1, 1], [], []>} : vector<2x64xf32>, vector<64x256xf32>, vector<2x256xf32> -> vector<2x256xf32>
    %123 = arith.addf %120, %122 : vector<2x256xf32>
    %124 = vector.extract_strided_slice %123 {offsets = [0, 0], sizes = [2, 64], strides = [1, 1]} : vector<2x256xf32> to vector<2x64xf32>
    %125 = arith.negf %124 : vector<2x64xf32>
    %126 = math.exp %125 : vector<2x64xf32>
    %cst_67 = arith.constant 1.000000e+00 : f32
    %127 = vector.broadcast %cst_67 : f32 to vector<2x64xf32>
    %128 = arith.addf %127, %126 : vector<2x64xf32>
    %129 = arith.divf %127, %128 : vector<2x64xf32>
    %130 = vector.extract_strided_slice %123 {offsets = [0, 64], sizes = [2, 64], strides = [1, 1]} : vector<2x256xf32> to vector<2x64xf32>
    %131 = arith.negf %130 : vector<2x64xf32>
    %132 = math.exp %131 : vector<2x64xf32>
    %cst_68 = arith.constant 1.000000e+00 : f32
    %133 = vector.broadcast %cst_68 : f32 to vector<2x64xf32>
    %134 = arith.addf %133, %132 : vector<2x64xf32>
    %135 = arith.divf %133, %134 : vector<2x64xf32>
    %136 = vector.extract_strided_slice %123 {offsets = [0, 128], sizes = [2, 64], strides = [1, 1]} : vector<2x256xf32> to vector<2x64xf32>
    %137 = math.tanh %136 : vector<2x64xf32>
    %138 = vector.extract_strided_slice %123 {offsets = [0, 192], sizes = [2, 64], strides = [1, 1]} : vector<2x256xf32> to vector<2x64xf32>
    %139 = arith.negf %138 : vector<2x64xf32>
    %140 = math.exp %139 : vector<2x64xf32>
    %cst_69 = arith.constant 1.000000e+00 : f32
    %141 = vector.broadcast %cst_69 : f32 to vector<2x64xf32>
    %142 = arith.addf %141, %140 : vector<2x64xf32>
    %143 = arith.divf %141, %142 : vector<2x64xf32>
    %144 = arith.mulf %135, %117 : vector<2x64xf32>
    %145 = arith.mulf %129, %137 : vector<2x64xf32>
    %146 = arith.addf %144, %145 : vector<2x64xf32>
    %147 = math.tanh %146 : vector<2x64xf32>
    %148 = arith.mulf %143, %147 : vector<2x64xf32>
    %149 = vector.extract_strided_slice %115 {offsets = [1, 0], sizes = [1, 256], strides = [1, 1]} : vector<16x256xf32> to vector<1x256xf32>
    %150 = vector.extract_strided_slice %115 {offsets = [9, 0], sizes = [1, 256], strides = [1, 1]} : vector<16x256xf32> to vector<1x256xf32>
    %151 = tpu.concatenate %149, %150 in 0 : vector<1x256xf32>, vector<1x256xf32> -> vector<2x256xf32>
    %c0_70 = arith.constant 0 : index
    %c0_71 = arith.constant 0 : index
    %152 = vector.load %arg13[%c0_70, %c0_71] : memref<64x256xf32, #tpu.memory_space<vmem>>, vector<64x256xf32>
    %cst_72 = arith.constant dense<0.000000e+00> : vector<2x256xf32>
    %153 = tpu.matmul %148, %152, %cst_72 {dimension_numbers = #tpu.dot_dimension_numbers<[1], [0], [0], [1], [0, 0, 1, 1], [], []>} : vector<2x64xf32>, vector<64x256xf32>, vector<2x256xf32> -> vector<2x256xf32>
    %154 = arith.addf %151, %153 : vector<2x256xf32>
    %155 = vector.extract_strided_slice %154 {offsets = [0, 0], sizes = [2, 64], strides = [1, 1]} : vector<2x256xf32> to vector<2x64xf32>
    %156 = arith.negf %155 : vector<2x64xf32>
    %157 = math.exp %156 : vector<2x64xf32>
    %cst_73 = arith.constant 1.000000e+00 : f32
    %158 = vector.broadcast %cst_73 : f32 to vector<2x64xf32>
    %159 = arith.addf %158, %157 : vector<2x64xf32>
    %160 = arith.divf %158, %159 : vector<2x64xf32>
    %161 = vector.extract_strided_slice %154 {offsets = [0, 64], sizes = [2, 64], strides = [1, 1]} : vector<2x256xf32> to vector<2x64xf32>
    %162 = arith.negf %161 : vector<2x64xf32>
    %163 = math.exp %162 : vector<2x64xf32>
    %cst_74 = arith.constant 1.000000e+00 : f32
    %164 = vector.broadcast %cst_74 : f32 to vector<2x64xf32>
    %165 = arith.addf %164, %163 : vector<2x64xf32>
    %166 = arith.divf %164, %165 : vector<2x64xf32>
    %167 = vector.extract_strided_slice %154 {offsets = [0, 128], sizes = [2, 64], strides = [1, 1]} : vector<2x256xf32> to vector<2x64xf32>
    %168 = math.tanh %167 : vector<2x64xf32>
    %169 = vector.extract_strided_slice %154 {offsets = [0, 192], sizes = [2, 64], strides = [1, 1]} : vector<2x256xf32> to vector<2x64xf32>
    %170 = arith.negf %169 : vector<2x64xf32>
    %171 = math.exp %170 : vector<2x64xf32>
    %cst_75 = arith.constant 1.000000e+00 : f32
    %172 = vector.broadcast %cst_75 : f32 to vector<2x64xf32>
    %173 = arith.addf %172, %171 : vector<2x64xf32>
    %174 = arith.divf %172, %173 : vector<2x64xf32>
    %175 = arith.mulf %166, %146 : vector<2x64xf32>
    %176 = arith.mulf %160, %168 : vector<2x64xf32>
    %177 = arith.addf %175, %176 : vector<2x64xf32>
    %178 = math.tanh %177 : vector<2x64xf32>
    %179 = arith.mulf %174, %178 : vector<2x64xf32>
    %180 = vector.extract_strided_slice %115 {offsets = [2, 0], sizes = [1, 256], strides = [1, 1]} : vector<16x256xf32> to vector<1x256xf32>
    %181 = vector.extract_strided_slice %115 {offsets = [10, 0], sizes = [1, 256], strides = [1, 1]} : vector<16x256xf32> to vector<1x256xf32>
    %182 = tpu.concatenate %180, %181 in 0 : vector<1x256xf32>, vector<1x256xf32> -> vector<2x256xf32>
    %c0_76 = arith.constant 0 : index
    %c0_77 = arith.constant 0 : index
    %183 = vector.load %arg13[%c0_76, %c0_77] : memref<64x256xf32, #tpu.memory_space<vmem>>, vector<64x256xf32>
    %cst_78 = arith.constant dense<0.000000e+00> : vector<2x256xf32>
    %184 = tpu.matmul %179, %183, %cst_78 {dimension_numbers = #tpu.dot_dimension_numbers<[1], [0], [0], [1], [0, 0, 1, 1], [], []>} : vector<2x64xf32>, vector<64x256xf32>, vector<2x256xf32> -> vector<2x256xf32>
    %185 = arith.addf %182, %184 : vector<2x256xf32>
    %186 = vector.extract_strided_slice %185 {offsets = [0, 0], sizes = [2, 64], strides = [1, 1]} : vector<2x256xf32> to vector<2x64xf32>
    %187 = arith.negf %186 : vector<2x64xf32>
    %188 = math.exp %187 : vector<2x64xf32>
    %cst_79 = arith.constant 1.000000e+00 : f32
    %189 = vector.broadcast %cst_79 : f32 to vector<2x64xf32>
    %190 = arith.addf %189, %188 : vector<2x64xf32>
    %191 = arith.divf %189, %190 : vector<2x64xf32>
    %192 = vector.extract_strided_slice %185 {offsets = [0, 64], sizes = [2, 64], strides = [1, 1]} : vector<2x256xf32> to vector<2x64xf32>
    %193 = arith.negf %192 : vector<2x64xf32>
    %194 = math.exp %193 : vector<2x64xf32>
    %cst_80 = arith.constant 1.000000e+00 : f32
    %195 = vector.broadcast %cst_80 : f32 to vector<2x64xf32>
    %196 = arith.addf %195, %194 : vector<2x64xf32>
    %197 = arith.divf %195, %196 : vector<2x64xf32>
    %198 = vector.extract_strided_slice %185 {offsets = [0, 128], sizes = [2, 64], strides = [1, 1]} : vector<2x256xf32> to vector<2x64xf32>
    %199 = math.tanh %198 : vector<2x64xf32>
    %200 = vector.extract_strided_slice %185 {offsets = [0, 192], sizes = [2, 64], strides = [1, 1]} : vector<2x256xf32> to vector<2x64xf32>
    %201 = arith.negf %200 : vector<2x64xf32>
    %202 = math.exp %201 : vector<2x64xf32>
    %cst_81 = arith.constant 1.000000e+00 : f32
    %203 = vector.broadcast %cst_81 : f32 to vector<2x64xf32>
    %204 = arith.addf %203, %202 : vector<2x64xf32>
    %205 = arith.divf %203, %204 : vector<2x64xf32>
    %206 = arith.mulf %197, %177 : vector<2x64xf32>
    %207 = arith.mulf %191, %199 : vector<2x64xf32>
    %208 = arith.addf %206, %207 : vector<2x64xf32>
    %209 = math.tanh %208 : vector<2x64xf32>
    %210 = arith.mulf %205, %209 : vector<2x64xf32>
    %211 = vector.extract_strided_slice %115 {offsets = [3, 0], sizes = [1, 256], strides = [1, 1]} : vector<16x256xf32> to vector<1x256xf32>
    %212 = vector.extract_strided_slice %115 {offsets = [11, 0], sizes = [1, 256], strides = [1, 1]} : vector<16x256xf32> to vector<1x256xf32>
    %213 = tpu.concatenate %211, %212 in 0 : vector<1x256xf32>, vector<1x256xf32> -> vector<2x256xf32>
    %c0_82 = arith.constant 0 : index
    %c0_83 = arith.constant 0 : index
    %214 = vector.load %arg13[%c0_82, %c0_83] : memref<64x256xf32, #tpu.memory_space<vmem>>, vector<64x256xf32>
    %cst_84 = arith.constant dense<0.000000e+00> : vector<2x256xf32>
    %215 = tpu.matmul %210, %214, %cst_84 {dimension_numbers = #tpu.dot_dimension_numbers<[1], [0], [0], [1], [0, 0, 1, 1], [], []>} : vector<2x64xf32>, vector<64x256xf32>, vector<2x256xf32> -> vector<2x256xf32>
    %216 = arith.addf %213, %215 : vector<2x256xf32>
    %217 = vector.extract_strided_slice %216 {offsets = [0, 0], sizes = [2, 64], strides = [1, 1]} : vector<2x256xf32> to vector<2x64xf32>
    %218 = arith.negf %217 : vector<2x64xf32>
    %219 = math.exp %218 : vector<2x64xf32>
    %cst_85 = arith.constant 1.000000e+00 : f32
    %220 = vector.broadcast %cst_85 : f32 to vector<2x64xf32>
    %221 = arith.addf %220, %219 : vector<2x64xf32>
    %222 = arith.divf %220, %221 : vector<2x64xf32>
    %223 = vector.extract_strided_slice %216 {offsets = [0, 64], sizes = [2, 64], strides = [1, 1]} : vector<2x256xf32> to vector<2x64xf32>
    %224 = arith.negf %223 : vector<2x64xf32>
    %225 = math.exp %224 : vector<2x64xf32>
    %cst_86 = arith.constant 1.000000e+00 : f32
    %226 = vector.broadcast %cst_86 : f32 to vector<2x64xf32>
    %227 = arith.addf %226, %225 : vector<2x64xf32>
    %228 = arith.divf %226, %227 : vector<2x64xf32>
    %229 = vector.extract_strided_slice %216 {offsets = [0, 128], sizes = [2, 64], strides = [1, 1]} : vector<2x256xf32> to vector<2x64xf32>
    %230 = math.tanh %229 : vector<2x64xf32>
    %231 = vector.extract_strided_slice %216 {offsets = [0, 192], sizes = [2, 64], strides = [1, 1]} : vector<2x256xf32> to vector<2x64xf32>
    %232 = arith.negf %231 : vector<2x64xf32>
    %233 = math.exp %232 : vector<2x64xf32>
    %cst_87 = arith.constant 1.000000e+00 : f32
    %234 = vector.broadcast %cst_87 : f32 to vector<2x64xf32>
    %235 = arith.addf %234, %233 : vector<2x64xf32>
    %236 = arith.divf %234, %235 : vector<2x64xf32>
    %237 = arith.mulf %228, %208 : vector<2x64xf32>
    %238 = arith.mulf %222, %230 : vector<2x64xf32>
    %239 = arith.addf %237, %238 : vector<2x64xf32>
    %240 = math.tanh %239 : vector<2x64xf32>
    %241 = arith.mulf %236, %240 : vector<2x64xf32>
    %242 = vector.extract_strided_slice %115 {offsets = [4, 0], sizes = [1, 256], strides = [1, 1]} : vector<16x256xf32> to vector<1x256xf32>
    %243 = vector.extract_strided_slice %115 {offsets = [12, 0], sizes = [1, 256], strides = [1, 1]} : vector<16x256xf32> to vector<1x256xf32>
    %244 = tpu.concatenate %242, %243 in 0 : vector<1x256xf32>, vector<1x256xf32> -> vector<2x256xf32>
    %c0_88 = arith.constant 0 : index
    %c0_89 = arith.constant 0 : index
    %245 = vector.load %arg13[%c0_88, %c0_89] : memref<64x256xf32, #tpu.memory_space<vmem>>, vector<64x256xf32>
    %cst_90 = arith.constant dense<0.000000e+00> : vector<2x256xf32>
    %246 = tpu.matmul %241, %245, %cst_90 {dimension_numbers = #tpu.dot_dimension_numbers<[1], [0], [0], [1], [0, 0, 1, 1], [], []>} : vector<2x64xf32>, vector<64x256xf32>, vector<2x256xf32> -> vector<2x256xf32>
    %247 = arith.addf %244, %246 : vector<2x256xf32>
    %248 = vector.extract_strided_slice %247 {offsets = [0, 0], sizes = [2, 64], strides = [1, 1]} : vector<2x256xf32> to vector<2x64xf32>
    %249 = arith.negf %248 : vector<2x64xf32>
    %250 = math.exp %249 : vector<2x64xf32>
    %cst_91 = arith.constant 1.000000e+00 : f32
    %251 = vector.broadcast %cst_91 : f32 to vector<2x64xf32>
    %252 = arith.addf %251, %250 : vector<2x64xf32>
    %253 = arith.divf %251, %252 : vector<2x64xf32>
    %254 = vector.extract_strided_slice %247 {offsets = [0, 64], sizes = [2, 64], strides = [1, 1]} : vector<2x256xf32> to vector<2x64xf32>
    %255 = arith.negf %254 : vector<2x64xf32>
    %256 = math.exp %255 : vector<2x64xf32>
    %cst_92 = arith.constant 1.000000e+00 : f32
    %257 = vector.broadcast %cst_92 : f32 to vector<2x64xf32>
    %258 = arith.addf %257, %256 : vector<2x64xf32>
    %259 = arith.divf %257, %258 : vector<2x64xf32>
    %260 = vector.extract_strided_slice %247 {offsets = [0, 128], sizes = [2, 64], strides = [1, 1]} : vector<2x256xf32> to vector<2x64xf32>
    %261 = math.tanh %260 : vector<2x64xf32>
    %262 = vector.extract_strided_slice %247 {offsets = [0, 192], sizes = [2, 64], strides = [1, 1]} : vector<2x256xf32> to vector<2x64xf32>
    %263 = arith.negf %262 : vector<2x64xf32>
    %264 = math.exp %263 : vector<2x64xf32>
    %cst_93 = arith.constant 1.000000e+00 : f32
    %265 = vector.broadcast %cst_93 : f32 to vector<2x64xf32>
    %266 = arith.addf %265, %264 : vector<2x64xf32>
    %267 = arith.divf %265, %266 : vector<2x64xf32>
    %268 = arith.mulf %259, %239 : vector<2x64xf32>
    %269 = arith.mulf %253, %261 : vector<2x64xf32>
    %270 = arith.addf %268, %269 : vector<2x64xf32>
    %271 = math.tanh %270 : vector<2x64xf32>
    %272 = arith.mulf %267, %271 : vector<2x64xf32>
    %273 = vector.extract_strided_slice %115 {offsets = [5, 0], sizes = [1, 256], strides = [1, 1]} : vector<16x256xf32> to vector<1x256xf32>
    %274 = vector.extract_strided_slice %115 {offsets = [13, 0], sizes = [1, 256], strides = [1, 1]} : vector<16x256xf32> to vector<1x256xf32>
    %275 = tpu.concatenate %273, %274 in 0 : vector<1x256xf32>, vector<1x256xf32> -> vector<2x256xf32>
    %c0_94 = arith.constant 0 : index
    %c0_95 = arith.constant 0 : index
    %276 = vector.load %arg13[%c0_94, %c0_95] : memref<64x256xf32, #tpu.memory_space<vmem>>, vector<64x256xf32>
    %cst_96 = arith.constant dense<0.000000e+00> : vector<2x256xf32>
    %277 = tpu.matmul %272, %276, %cst_96 {dimension_numbers = #tpu.dot_dimension_numbers<[1], [0], [0], [1], [0, 0, 1, 1], [], []>} : vector<2x64xf32>, vector<64x256xf32>, vector<2x256xf32> -> vector<2x256xf32>
    %278 = arith.addf %275, %277 : vector<2x256xf32>
    %279 = vector.extract_strided_slice %278 {offsets = [0, 0], sizes = [2, 64], strides = [1, 1]} : vector<2x256xf32> to vector<2x64xf32>
    %280 = arith.negf %279 : vector<2x64xf32>
    %281 = math.exp %280 : vector<2x64xf32>
    %cst_97 = arith.constant 1.000000e+00 : f32
    %282 = vector.broadcast %cst_97 : f32 to vector<2x64xf32>
    %283 = arith.addf %282, %281 : vector<2x64xf32>
    %284 = arith.divf %282, %283 : vector<2x64xf32>
    %285 = vector.extract_strided_slice %278 {offsets = [0, 64], sizes = [2, 64], strides = [1, 1]} : vector<2x256xf32> to vector<2x64xf32>
    %286 = arith.negf %285 : vector<2x64xf32>
    %287 = math.exp %286 : vector<2x64xf32>
    %cst_98 = arith.constant 1.000000e+00 : f32
    %288 = vector.broadcast %cst_98 : f32 to vector<2x64xf32>
    %289 = arith.addf %288, %287 : vector<2x64xf32>
    %290 = arith.divf %288, %289 : vector<2x64xf32>
    %291 = vector.extract_strided_slice %278 {offsets = [0, 128], sizes = [2, 64], strides = [1, 1]} : vector<2x256xf32> to vector<2x64xf32>
    %292 = math.tanh %291 : vector<2x64xf32>
    %293 = vector.extract_strided_slice %278 {offsets = [0, 192], sizes = [2, 64], strides = [1, 1]} : vector<2x256xf32> to vector<2x64xf32>
    %294 = arith.negf %293 : vector<2x64xf32>
    %295 = math.exp %294 : vector<2x64xf32>
    %cst_99 = arith.constant 1.000000e+00 : f32
    %296 = vector.broadcast %cst_99 : f32 to vector<2x64xf32>
    %297 = arith.addf %296, %295 : vector<2x64xf32>
    %298 = arith.divf %296, %297 : vector<2x64xf32>
    %299 = arith.mulf %290, %270 : vector<2x64xf32>
    %300 = arith.mulf %284, %292 : vector<2x64xf32>
    %301 = arith.addf %299, %300 : vector<2x64xf32>
    %302 = math.tanh %301 : vector<2x64xf32>
    %303 = arith.mulf %298, %302 : vector<2x64xf32>
    %304 = vector.extract_strided_slice %115 {offsets = [6, 0], sizes = [1, 256], strides = [1, 1]} : vector<16x256xf32> to vector<1x256xf32>
    %305 = vector.extract_strided_slice %115 {offsets = [14, 0], sizes = [1, 256], strides = [1, 1]} : vector<16x256xf32> to vector<1x256xf32>
    %306 = tpu.concatenate %304, %305 in 0 : vector<1x256xf32>, vector<1x256xf32> -> vector<2x256xf32>
    %c0_100 = arith.constant 0 : index
    %c0_101 = arith.constant 0 : index
    %307 = vector.load %arg13[%c0_100, %c0_101] : memref<64x256xf32, #tpu.memory_space<vmem>>, vector<64x256xf32>
    %cst_102 = arith.constant dense<0.000000e+00> : vector<2x256xf32>
    %308 = tpu.matmul %303, %307, %cst_102 {dimension_numbers = #tpu.dot_dimension_numbers<[1], [0], [0], [1], [0, 0, 1, 1], [], []>} : vector<2x64xf32>, vector<64x256xf32>, vector<2x256xf32> -> vector<2x256xf32>
    %309 = arith.addf %306, %308 : vector<2x256xf32>
    %310 = vector.extract_strided_slice %309 {offsets = [0, 0], sizes = [2, 64], strides = [1, 1]} : vector<2x256xf32> to vector<2x64xf32>
    %311 = arith.negf %310 : vector<2x64xf32>
    %312 = math.exp %311 : vector<2x64xf32>
    %cst_103 = arith.constant 1.000000e+00 : f32
    %313 = vector.broadcast %cst_103 : f32 to vector<2x64xf32>
    %314 = arith.addf %313, %312 : vector<2x64xf32>
    %315 = arith.divf %313, %314 : vector<2x64xf32>
    %316 = vector.extract_strided_slice %309 {offsets = [0, 64], sizes = [2, 64], strides = [1, 1]} : vector<2x256xf32> to vector<2x64xf32>
    %317 = arith.negf %316 : vector<2x64xf32>
    %318 = math.exp %317 : vector<2x64xf32>
    %cst_104 = arith.constant 1.000000e+00 : f32
    %319 = vector.broadcast %cst_104 : f32 to vector<2x64xf32>
    %320 = arith.addf %319, %318 : vector<2x64xf32>
    %321 = arith.divf %319, %320 : vector<2x64xf32>
    %322 = vector.extract_strided_slice %309 {offsets = [0, 128], sizes = [2, 64], strides = [1, 1]} : vector<2x256xf32> to vector<2x64xf32>
    %323 = math.tanh %322 : vector<2x64xf32>
    %324 = vector.extract_strided_slice %309 {offsets = [0, 192], sizes = [2, 64], strides = [1, 1]} : vector<2x256xf32> to vector<2x64xf32>
    %325 = arith.negf %324 : vector<2x64xf32>
    %326 = math.exp %325 : vector<2x64xf32>
    %cst_105 = arith.constant 1.000000e+00 : f32
    %327 = vector.broadcast %cst_105 : f32 to vector<2x64xf32>
    %328 = arith.addf %327, %326 : vector<2x64xf32>
    %329 = arith.divf %327, %328 : vector<2x64xf32>
    %330 = arith.mulf %321, %301 : vector<2x64xf32>
    %331 = arith.mulf %315, %323 : vector<2x64xf32>
    %332 = arith.addf %330, %331 : vector<2x64xf32>
    %333 = math.tanh %332 : vector<2x64xf32>
    %334 = arith.mulf %329, %333 : vector<2x64xf32>
    %335 = vector.extract_strided_slice %115 {offsets = [7, 0], sizes = [1, 256], strides = [1, 1]} : vector<16x256xf32> to vector<1x256xf32>
    %336 = vector.extract_strided_slice %115 {offsets = [15, 0], sizes = [1, 256], strides = [1, 1]} : vector<16x256xf32> to vector<1x256xf32>
    %337 = tpu.concatenate %335, %336 in 0 : vector<1x256xf32>, vector<1x256xf32> -> vector<2x256xf32>
    %c0_106 = arith.constant 0 : index
    %c0_107 = arith.constant 0 : index
    %338 = vector.load %arg13[%c0_106, %c0_107] : memref<64x256xf32, #tpu.memory_space<vmem>>, vector<64x256xf32>
    %cst_108 = arith.constant dense<0.000000e+00> : vector<2x256xf32>
    %339 = tpu.matmul %334, %338, %cst_108 {dimension_numbers = #tpu.dot_dimension_numbers<[1], [0], [0], [1], [0, 0, 1, 1], [], []>} : vector<2x64xf32>, vector<64x256xf32>, vector<2x256xf32> -> vector<2x256xf32>
    %340 = arith.addf %337, %339 : vector<2x256xf32>
    %341 = vector.extract_strided_slice %340 {offsets = [0, 0], sizes = [2, 64], strides = [1, 1]} : vector<2x256xf32> to vector<2x64xf32>
    %342 = arith.negf %341 : vector<2x64xf32>
    %343 = math.exp %342 : vector<2x64xf32>
    %cst_109 = arith.constant 1.000000e+00 : f32
    %344 = vector.broadcast %cst_109 : f32 to vector<2x64xf32>
    %345 = arith.addf %344, %343 : vector<2x64xf32>
    %346 = arith.divf %344, %345 : vector<2x64xf32>
    %347 = vector.extract_strided_slice %340 {offsets = [0, 64], sizes = [2, 64], strides = [1, 1]} : vector<2x256xf32> to vector<2x64xf32>
    %348 = arith.negf %347 : vector<2x64xf32>
    %349 = math.exp %348 : vector<2x64xf32>
    %cst_110 = arith.constant 1.000000e+00 : f32
    %350 = vector.broadcast %cst_110 : f32 to vector<2x64xf32>
    %351 = arith.addf %350, %349 : vector<2x64xf32>
    %352 = arith.divf %350, %351 : vector<2x64xf32>
    %353 = vector.extract_strided_slice %340 {offsets = [0, 128], sizes = [2, 64], strides = [1, 1]} : vector<2x256xf32> to vector<2x64xf32>
    %354 = math.tanh %353 : vector<2x64xf32>
    %355 = vector.extract_strided_slice %340 {offsets = [0, 192], sizes = [2, 64], strides = [1, 1]} : vector<2x256xf32> to vector<2x64xf32>
    %356 = arith.negf %355 : vector<2x64xf32>
    %357 = math.exp %356 : vector<2x64xf32>
    %cst_111 = arith.constant 1.000000e+00 : f32
    %358 = vector.broadcast %cst_111 : f32 to vector<2x64xf32>
    %359 = arith.addf %358, %357 : vector<2x64xf32>
    %360 = arith.divf %358, %359 : vector<2x64xf32>
    %361 = arith.mulf %352, %332 : vector<2x64xf32>
    %362 = arith.mulf %346, %354 : vector<2x64xf32>
    %363 = arith.addf %361, %362 : vector<2x64xf32>
    %364 = math.tanh %363 : vector<2x64xf32>
    %365 = arith.mulf %360, %364 : vector<2x64xf32>
    %c0_112 = arith.constant 0 : index
    %c0_113 = arith.constant 0 : index
    %366 = vector.load %arg14[%c0_112, %c0_113] : memref<64x128xf32, #tpu.memory_space<vmem>>, vector<64x128xf32>
    %cst_114 = arith.constant dense<0.000000e+00> : vector<2x128xf32>
    %367 = tpu.matmul %365, %366, %cst_114 {dimension_numbers = #tpu.dot_dimension_numbers<[1], [0], [0], [1], [0, 0, 1, 1], [], []>} : vector<2x64xf32>, vector<64x128xf32>, vector<2x128xf32> -> vector<2x128xf32>
    %c0_115 = arith.constant 0 : index
    %c0_116 = arith.constant 0 : index
    %368 = vector.load %arg15[%c0_115, %c0_116] : memref<1x128xf32, #tpu.memory_space<vmem>>, vector<1x128xf32>
    %369 = vector.broadcast %368 : vector<1x128xf32> to vector<2x128xf32>
    %370 = arith.addf %367, %369 : vector<2x128xf32>
    %cst_117 = arith.constant 0.000000e+00 : f32
    %371 = vector.broadcast %cst_117 : f32 to vector<2x128xf32>
    %372 = arith.maximumf %370, %371 : vector<2x128xf32>
    %c0_118 = arith.constant 0 : index
    %c0_119 = arith.constant 0 : index
    %373 = vector.load %arg16[%c0_118, %c0_119] : memref<128x8xf32, #tpu.memory_space<vmem>>, vector<128x8xf32>
    %cst_120 = arith.constant dense<0.000000e+00> : vector<2x8xf32>
    %374 = tpu.matmul %372, %373, %cst_120 {dimension_numbers = #tpu.dot_dimension_numbers<[1], [0], [0], [1], [0, 0, 1, 1], [], []>} : vector<2x128xf32>, vector<128x8xf32>, vector<2x8xf32> -> vector<2x8xf32>
    %c0_121 = arith.constant 0 : index
    %c0_122 = arith.constant 0 : index
    %375 = vector.load %arg17[%c0_121, %c0_122] : memref<1x8xf32, #tpu.memory_space<vmem>>, vector<1x8xf32>
    %376 = vector.broadcast %375 : vector<1x8xf32> to vector<2x8xf32>
    %377 = arith.addf %374, %376 : vector<2x8xf32>
    %c0_123 = arith.constant 0 : index
    %c0_124 = arith.constant 0 : index
    %378 = vector.load %arg18[%c0_123, %c0_124] : memref<2x8xf32, #tpu.memory_space<vmem>>, vector<2x8xf32>
    tpu.vector_store %arg18[%c0_123, %c0_124], %377 {strides = array<i32>} : memref<2x8xf32, #tpu.memory_space<vmem>>, vector<2x8xf32>,
    return
  }
  func.func @transform_0(%arg0: i32) -> (i32, i32, i32) {
    %c0_i32 = arith.constant 0 : i32
    %c0_i32_0 = arith.constant 0 : i32
    %c0_i32_1 = arith.constant 0 : i32
    %c0_i32_2 = arith.constant 0 : i32
    return %c0_i32, %c0_i32_0, %c0_i32_1 : i32, i32, i32
  }
  func.func @transform_1(%arg0: i32) -> (i32, i32) {
    %c0_i32 = arith.constant 0 : i32
    %c0_i32_0 = arith.constant 0 : i32
    %c0_i32_1 = arith.constant 0 : i32
    return %c0_i32, %c0_i32_0 : i32, i32
  }
  func.func @transform_2(%arg0: i32) -> (i32, i32) {
    %c0_i32 = arith.constant 0 : i32
    %c0_i32_0 = arith.constant 0 : i32
    %c0_i32_1 = arith.constant 0 : i32
    return %c0_i32, %c0_i32_0 : i32, i32
  }
  func.func @transform_3(%arg0: i32) -> (i32, i32) {
    %c0_i32 = arith.constant 0 : i32
    %c0_i32_0 = arith.constant 0 : i32
    %c0_i32_1 = arith.constant 0 : i32
    return %c0_i32, %c0_i32_0 : i32, i32
  }
  func.func @transform_4(%arg0: i32) -> (i32, i32) {
    %c0_i32 = arith.constant 0 : i32
    %c0_i32_0 = arith.constant 0 : i32
    %c0_i32_1 = arith.constant 0 : i32
    return %c0_i32, %c0_i32_0 : i32, i32
  }
  func.func @transform_5(%arg0: i32) -> (i32, i32) {
    %c0_i32 = arith.constant 0 : i32
    %c0_i32_0 = arith.constant 0 : i32
    %c0_i32_1 = arith.constant 0 : i32
    return %c0_i32, %c0_i32_0 : i32, i32
  }
  func.func @transform_6(%arg0: i32) -> (i32, i32) {
    %c0_i32 = arith.constant 0 : i32
    %c0_i32_0 = arith.constant 0 : i32
    %c0_i32_1 = arith.constant 0 : i32
    return %c0_i32, %c0_i32_0 : i32, i32
  }
  func.func @transform_7(%arg0: i32) -> (i32, i32) {
    %c0_i32 = arith.constant 0 : i32
    %c0_i32_0 = arith.constant 0 : i32
    %c0_i32_1 = arith.constant 0 : i32
    return %c0_i32, %c0_i32_0 : i32, i32
  }
  func.func @transform_8(%arg0: i32) -> (i32, i32) {
    %c0_i32 = arith.constant 0 : i32
    %c0_i32_0 = arith.constant 0 : i32
    %c0_i32_1 = arith.constant 0 : i32
    return %c0_i32, %c0_i32_0 : i32, i32
  }
  func.func @transform_9(%arg0: i32) -> (i32, i32) {
    %c0_i32 = arith.constant 0 : i32
    %c0_i32_0 = arith.constant 0 : i32
    %c0_i32_1 = arith.constant 0 : i32
    return %c0_i32, %c0_i32_0 : i32, i32
  }
  func.func @transform_10(%arg0: i32) -> (i32, i32) {
    %c0_i32 = arith.constant 0 : i32
    %c0_i32_0 = arith.constant 0 : i32
    %c0_i32_1 = arith.constant 0 : i32
    return %c0_i32, %c0_i32_0 : i32, i32
  }
  func.func @transform_11(%arg0: i32) -> (i32, i32) {
    %c0_i32 = arith.constant 0 : i32
    %c0_i32_0 = arith.constant 0 : i32
    %c0_i32_1 = arith.constant 0 : i32
    return %c0_i32, %c0_i32_0 : i32, i32
  }
  func.func @transform_12(%arg0: i32) -> (i32, i32) {
    %c0_i32 = arith.constant 0 : i32
    %c0_i32_0 = arith.constant 0 : i32
    %c0_i32_1 = arith.constant 0 : i32
    return %c0_i32, %c0_i32_0 : i32, i32
  }
  func.func @transform_13(%arg0: i32) -> (i32, i32) {
    %c0_i32 = arith.constant 0 : i32
    %c0_i32_0 = arith.constant 0 : i32
    %c0_i32_1 = arith.constant 0 : i32
    return %c0_i32, %c0_i32_0 : i32, i32
  }
  func.func @transform_14(%arg0: i32) -> (i32, i32) {
    %c0_i32 = arith.constant 0 : i32
    %c0_i32_0 = arith.constant 0 : i32
    %c0_i32_1 = arith.constant 0 : i32
    return %c0_i32, %c0_i32_0 : i32, i32
  }
  func.func @transform_15(%arg0: i32) -> (i32, i32) {
    %c0_i32 = arith.constant 0 : i32
    %c0_i32_0 = arith.constant 0 : i32
    %c0_i32_1 = arith.constant 0 : i32
    return %c0_i32, %c0_i32_0 : i32, i32
  }
  func.func @transform_16(%arg0: i32) -> (i32, i32) {
    %c0_i32 = arith.constant 0 : i32
    %c0_i32_0 = arith.constant 0 : i32
    %c0_i32_1 = arith.constant 0 : i32
    return %c0_i32, %c0_i32_0 : i32, i32
  }
  func.func @transform_17(%arg0: i32) -> (i32, i32) {
    %c0_i32 = arith.constant 0 : i32
    %c0_i32_0 = arith.constant 0 : i32
    %c0_i32_1 = arith.constant 0 : i32
    return %c0_i32, %c0_i32_0 : i32, i32
  }
}

</mosaic_0001>

<llo_original>
// kernel: cnn_lstm_forward.1
$region0: #{cnn_lstm_forward.1}
  #allocation0 [shape = 'u32[]', space=smem, size = 0x4, offset = 0x4, fixed_abs, tag = 'smem constant byte address 0x4 - core index']
  #allocation1 [shape = 'u32[144,128]{1,0:T(1,128)}', space=vmem, size = 0x12000, scoped, tag = 'internal scratch']
  %s0 = inlined_call_operand.vmem [shape: f32[2,4,80], index: 0, kind: input, shape index: {}]
  %s1 = inlined_call_operand.vmem [shape: f32[16,12], index: 1, kind: input, shape index: {}]
  %s2 = inlined_call_operand.vmem [shape: f32[16,1], index: 2, kind: input, shape index: {}]
  %s3 = inlined_call_operand.vmem [shape: f32[77,39], index: 3, kind: input, shape index: {}]
  %s4 = inlined_call_operand.vmem [shape: f32[32,48], index: 4, kind: input, shape index: {}]
  %s5 = inlined_call_operand.vmem [shape: f32[32,1], index: 5, kind: input, shape index: {}]
  %s6 = inlined_call_operand.vmem [shape: f32[36,18], index: 6, kind: input, shape index: {}]
  %s7 = inlined_call_operand.vmem [shape: f32[32,96], index: 7, kind: input, shape index: {}]
  %s8 = inlined_call_operand.vmem [shape: f32[32,1], index: 8, kind: input, shape index: {}]
  %s9 = inlined_call_operand.vmem [shape: f32[15,8], index: 9, kind: input, shape index: {}]
  %s10 = inlined_call_operand.vmem [shape: f32[32,256], index: 10, kind: input, shape index: {}]
  %s11 = inlined_call_operand.vmem [shape: f32[1,256], index: 11, kind: input, shape index: {}]
  %s12 = inlined_call_operand.vmem [shape: f32[64,256], index: 12, kind: input, shape index: {}]
  %s13 = inlined_call_operand.vmem [shape: f32[64,128], index: 13, kind: input, shape index: {}]
  %s14 = inlined_call_operand.vmem [shape: f32[1,128], index: 14, kind: input, shape index: {}]
  %s15 = inlined_call_operand.vmem [shape: f32[128,8], index: 15, kind: input, shape index: {}]
  %s16 = inlined_call_operand.vmem [shape: f32[1,8], index: 16, kind: input, shape index: {}]
  %s17 = inlined_call_operand.hbm [shape: f32[2,8], index: 17, kind: output, shape index: {}]
  %s18 = sld [smem:[#allocation0]]
  $region78: #{cnn_lstm_forward.1} parent=0
    _
  %s20 = ssub.s32 1, %s18
  %s21 = scalar_select 0, %s20, %s18
  $region1: #{cnn_lstm_forward.1} parent=0
    #allocation2 [shape = 'u8[1024]{0}', space=vmem, size = 0x400, scoped, tag = 'output window, operand 0, single buffered']
    #allocation3 [shape = 's32[1]{0}', space=sflag, size = 0x4, scoped, tag = 'scoped memory for cnn_lstm_forward.1']
    %22 = vsyncpa [#allocation3], 0
    // Predicated region
    $region2: #{cnn_lstm_forward.1} parent=1 // pred_check
      _
    $region3: #{cnn_lstm_forward.1} parent=1 // pred_check_branch
      %24 = sbr.rel (0) target = $region5
    $region4: #{cnn_lstm_forward.1} parent=1 // pred_region
      _
    $region5: #{cnn_lstm_forward.1} parent=1 // pred_fallthru
      _
    // Predicated region
    $region6: #{cnn_lstm_forward.1} parent=1 // pred_check
      _
    $region7: #{cnn_lstm_forward.1} parent=1 // pred_check_branch
      %26 = sbr.rel (0) target = $region9
    $region8: #{cnn_lstm_forward.1} parent=1 // pred_region
      _
    $region9: #{cnn_lstm_forward.1} parent=1 // pred_fallthru
      _
    // Predicated region
    $region10: #{cnn_lstm_forward.1} parent=1 // pred_check
      _
    $region11: #{cnn_lstm_forward.1} parent=1 // pred_check_branch
      %28 = sbr.rel (0) target = $region13
    $region12: #{cnn_lstm_forward.1} parent=1 // pred_region
      _
    $region13: #{cnn_lstm_forward.1} parent=1 // pred_fallthru
      _
    // Predicated region
    $region14: #{cnn_lstm_forward.1} parent=1 // pred_check
      _
    $region15: #{cnn_lstm_forward.1} parent=1 // pred_check_branch
      %30 = sbr.rel (0) target = $region17
    $region16: #{cnn_lstm_forward.1} parent=1 // pred_region
      _
    $region17: #{cnn_lstm_forward.1} parent=1 // pred_fallthru
      _
    // Predicated region
    $region18: #{cnn_lstm_forward.1} parent=1 // pred_check
      _
    $region19: #{cnn_lstm_forward.1} parent=1 // pred_check_branch
      %32 = sbr.rel (0) target = $region21
    $region20: #{cnn_lstm_forward.1} parent=1 // pred_region
      _
    $region21: #{cnn_lstm_forward.1} parent=1 // pred_fallthru
      _
    // Predicated region
    $region22: #{cnn_lstm_forward.1} parent=1 // pred_check
      _
    $region23: #{cnn_lstm_forward.1} parent=1 // pred_check_branch
      %34 = sbr.rel (0) target = $region25
    $region24: #{cnn_lstm_forward.1} parent=1 // pred_region
      _
    $region25: #{cnn_lstm_forward.1} parent=1 // pred_fallthru
      _
    // Predicated region
    $region26: #{cnn_lstm_forward.1} parent=1 // pred_check
      _
    $region27: #{cnn_lstm_forward.1} parent=1 // pred_check_branch
      %36 = sbr.rel (0) target = $region29
    $region28: #{cnn_lstm_forward.1} parent=1 // pred_region
      _
    $region29: #{cnn_lstm_forward.1} parent=1 // pred_fallthru
      _
    // Predicated region
    $region30: #{cnn_lstm_forward.1} parent=1 // pred_check
      _
    $region31: #{cnn_lstm_forward.1} parent=1 // pred_check_branch
      %38 = sbr.rel (0) target = $region33
    $region32: #{cnn_lstm_forward.1} parent=1 // pred_region
      _
    $region33: #{cnn_lstm_forward.1} parent=1 // pred_fallthru
      _
    // Predicated region
    $region34: #{cnn_lstm_forward.1} parent=1 // pred_check
      _
    $region35: #{cnn_lstm_forward.1} parent=1 // pred_check_branch
      %40 = sbr.rel (0) target = $region37
    $region36: #{cnn_lstm_forward.1} parent=1 // pred_region
      _
    $region37: #{cnn_lstm_forward.1} parent=1 // pred_fallthru
      _
    // Predicated region
    $region38: #{cnn_lstm_forward.1} parent=1 // pred_check
      _
    $region39: #{cnn_lstm_forward.1} parent=1 // pred_check_branch
      %42 = sbr.rel (0) target = $region41
    $region40: #{cnn_lstm_forward.1} parent=1 // pred_region
      _
    $region41: #{cnn_lstm_forward.1} parent=1 // pred_fallthru
      _
    // Predicated region
    $region42: #{cnn_lstm_forward.1} parent=1 // pred_check
      _
    $region43: #{cnn_lstm_forward.1} parent=1 // pred_check_branch
      %44 = sbr.rel (0) target = $region45
    $region44: #{cnn_lstm_forward.1} parent=1 // pred_region
      _
    $region45: #{cnn_lstm_forward.1} parent=1 // pred_fallthru
      _
    // Predicated region
    $region46: #{cnn_lstm_forward.1} parent=1 // pred_check
      _
    $region47: #{cnn_lstm_forward.1} parent=1 // pred_check_branch
      %46 = sbr.rel (0) target = $region49
    $region48: #{cnn_lstm_forward.1} parent=1 // pred_region
      _
    $region49: #{cnn_lstm_forward.1} parent=1 // pred_fallthru
      _
    // Predicated region
    $region50: #{cnn_lstm_forward.1} parent=1 // pred_check
      _
    $region51: #{cnn_lstm_forward.1} parent=1 // pred_check_branch
      %48 = sbr.rel (0) target = $region53
    $region52: #{cnn_lstm_forward.1} parent=1 // pred_region
      _
    $region53: #{cnn_lstm_forward.1} parent=1 // pred_fallthru
      _
    // Predicated region
    $region54: #{cnn_lstm_forward.1} parent=1 // pred_check
      _
    $region55: #{cnn_lstm_forward.1} parent=1 // pred_check_branch
      %50 = sbr.rel (0) target = $region57
    $region56: #{cnn_lstm_forward.1} parent=1 // pred_region
      _
    $region57: #{cnn_lstm_forward.1} parent=1 // pred_fallthru
      _
    // Predicated region
    $region58: #{cnn_lstm_forward.1} parent=1 // pred_check
      _
    $region59: #{cnn_lstm_forward.1} parent=1 // pred_check_branch
      %52 = sbr.rel (0) target = $region61
    $region60: #{cnn_lstm_forward.1} parent=1 // pred_region
      _
    $region61: #{cnn_lstm_forward.1} parent=1 // pred_fallthru
      _
    // Predicated region
    $region62: #{cnn_lstm_forward.1} parent=1 // pred_check
      _
    $region63: #{cnn_lstm_forward.1} parent=1 // pred_check_branch
      %54 = sbr.rel (0) target = $region65
    $region64: #{cnn_lstm_forward.1} parent=1 // pred_region
      _
    $region65: #{cnn_lstm_forward.1} parent=1 // pred_fallthru
      _
    // Predicated region
    $region66: #{cnn_lstm_forward.1} parent=1 // pred_check
      _
    $region67: #{cnn_lstm_forward.1} parent=1 // pred_check_branch
      %56 = sbr.rel (0) target = $region69
    $region68: #{cnn_lstm_forward.1} parent=1 // pred_region
      _
    $region69: #{cnn_lstm_forward.1} parent=1 // pred_fallthru
      _
    %v57 = vld [vmem:[%s0] sm:$0xf]
    %v59 = vrot.slane %v57, 4
    %60 = vrot.lane.b32.xlu0 %v59, 127
    %v61 = vpop.permute.xlu0 %60
    %63 = vrot.lane.b32.xlu0 %v57, 126
    %v64 = vpop.permute.xlu0 %63
    %vm65 = vcmask 1043456
    %v66 = vsel %vm65, %v57, %v61
    %v67 = vld [vmem:[%s1] sm:$0xff]
    %v68 = vld [vmem:[%s1 + $0x8] sm:$0xff]
    %v69 = vld [vmem:[%s2] sm:$0xff]
    %v70 = vld [vmem:[%s2 + $0x8] sm:$0xff]
    %72 = vset.pattern.permute.xlu0 0
    %73 = vperm.xlu0 %72, %v69
    %v74 = vpop.permute.xlu0 %73
    %77 = vset.pattern.permute.xlu0 0
    %78 = vperm.xlu0 %77, %v70
    %v79 = vpop.permute.xlu0 %78
    %vm81 = vcmask 97280
    %v83 = vsel %vm81, %v67, 0
    %v86 = vsel %vm81, %v68, 0
    %v88 = vsel %vm65, %v64, 0
    %90 = vmatprep.subr.mxu0 0.0
    %91 = vmatpush1.msra.mxu0 %v66
    %92 = vmatprep.subr.mxu0 0.0
    %93 = vmatpush1.msra.mxu0 %v88
    %94 = vmatprep.subr.mxu0 0.0
    %95 = vmatpush1.msra.mxu0 0.0
    %96 = vmatprep.subr.mxu0 0.0
    %97 = vmatpush1.msra.mxu0 0.0
    %98 = vmatprep.subr.mxu0 0.0
    %99 = vmatpush1.msra.mxu0 0.0
    %100 = vmatprep.subr.mxu0 0.0
    %101 = vmatpush1.msra.mxu0 0.0
    %102 = vmatprep.subr.mxu0 0.0
    %103 = vmatpush1.msra.mxu0 0.0
    %104 = vmatprep.subr.mxu0 0.0
    %105 = vmatpush1.msra.mxu0 0.0
    %106 = vmatprep.subr.mxu0 0.0
    %107 = vmatpush1.msra.mxu0 0.0
    %108 = vmatprep.subr.mxu0 0.0
    %109 = vmatpush1.msra.mxu0 0.0
    %110 = vmatprep.subr.mxu0 0.0
    %111 = vmatpush1.msra.mxu0 0.0
    %112 = vmatprep.subr.mxu0 0.0
    %113 = vmatpush1.msra.mxu0 0.0
    %114 = vmatprep.subr.mxu0 0.0
    %115 = vmatpush1.msra.mxu0 0.0
    %116 = vmatprep.subr.mxu0 0.0
    %117 = vmatpush1.msra.mxu0 0.0
    %118 = vmatprep.subr.mxu0 0.0
    %119 = vmatpush1.msra.mxu0 0.0
    %120 = vmatprep.subr.mxu0 0.0
    %121 = vmatpush1.msra.mxu0 0.0
    %122 = vmatprep.subr.mxu0 0.0
    %123 = vmatpush1.msra.mxu0 0.0
    %124 = vmatprep.subr.mxu0 0.0
    %125 = vmatpush1.msra.mxu0 0.0
    %126 = vmatprep.subr.mxu0 0.0
    %127 = vmatpush1.msra.mxu0 0.0
    %128 = vmatprep.subr.mxu0 0.0
    %129 = vmatpush1.msra.mxu0 0.0
    %130 = vmatprep.subr.mxu0 0.0
    %131 = vmatpush1.msra.mxu0 0.0
    %132 = vmatprep.subr.mxu0 0.0
    %133 = vmatpush1.msra.mxu0 0.0
    %134 = vmatprep.subr.mxu0 0.0
    %135 = vmatpush1.msra.mxu0 0.0
    %136 = vmatprep.subr.mxu0 0.0
    %137 = vmatpush1.msra.mxu0 0.0
    %138 = vmatprep.subr.mxu0 0.0
    %139 = vmatpush1.msra.mxu0 0.0
    %140 = vmatprep.subr.mxu0 0.0
    %141 = vmatpush1.msra.mxu0 0.0
    %142 = vmatprep.subr.mxu0 0.0
    %143 = vmatpush1.msra.mxu0 0.0
    %144 = vmatprep.subr.mxu0 0.0
    %145 = vmatpush1.msra.mxu0 0.0
    %146 = vmatprep.subr.mxu0 0.0
    %147 = vmatpush1.msra.mxu0 0.0
    %148 = vmatprep.subr.mxu0 0.0
    %149 = vmatpush1.msra.mxu0 0.0
    %150 = vmatprep.subr.mxu0 0.0
    %151 = vmatpush1.msra.mxu0 0.0
    %152 = vmatprep.subr.mxu0 0.0
    %153 = vmatpush1.msra.mxu0 0.0
    %154 = vmatprep.mubr.f32.mxu0 0.0
    %155 = vmatmul.mubr.f32.gmra.mrb[0].mxu0 %v83
    %v156 = vpop.f32.mrb[0].mxu0
    %v157 = vadd.f32 %v74, %v156
    %v158 = vpop.f32.mrb[0].mxu0
    %159 = vmatprep.mubr.f32.mxu0 0.0
    %160 = vmatmul.mubr.f32.gmra.mrb[0].mxu0 %v86
    %v161 = vpop.f32.mrb[0].mxu0
    %v162 = vadd.f32 %v79, %v161
    %v163 = vpop.f32.mrb[0].mxu0
    %164 = vdwg.mxu0
    %v165 = vmax.f32 %v157, 0.0
    %v166 = vmax.f32 %v162, 0.0
    %169 = vrot.lane.b32.xlu0 %v165, 127
    %v170 = vpop.permute.xlu0 %169
    %171 = vrot.lane.b32.xlu0 %v166, 127
    %v172 = vpop.permute.xlu0 %171
    %v175 = vmax.f32 %v165, %v170
    %v176 = vmax.f32 %v166, %v172
    %v177 = vld [vmem:[%s3] sm:$0xff]
    %v178 = vld [vmem:[%s3 + $0x8] sm:$0xff]
    %v179 = vld [vmem:[%s3 + $0x10] sm:$0xff]
    %v180 = vld [vmem:[%s3 + $0x18] sm:$0xff]
    %v181 = vld [vmem:[%s3 + $0x20] sm:$0xff]
    %v182 = vld [vmem:[%s3 + $0x28] sm:$0xff]
    %v183 = vld [vmem:[%s3 + $0x30] sm:$0xff]
    %v184 = vld [vmem:[%s3 + $0x38] sm:$0xff]
    %v185 = vld [vmem:[%s3 + $0x40] sm:$0xff]
    %v186 = vld [vmem:[%s3 + $0x48] sm:$0x1f]
    %vm187 = vcmask 629760
    %v189 = vsel %vm187, %v175, 0
    %v192 = vsel %vm187, %v176, 0
    %vm194 = vcmask 1044480
    %v196 = vsel %vm194, %v186, 0
    %198 = vmatprep.subr.mxu0 0.0
    %199 = vmatpush1.msra.mxu0 %v177
    %200 = vmatprep.subr.mxu0 0.0
    %201 = vmatpush1.msra.mxu0 %v178
    %202 = vmatprep.subr.mxu0 0.0
    %203 = vmatpush1.msra.mxu0 %v179
    %204 = vmatprep.subr.mxu0 0.0
    %205 = vmatpush1.msra.mxu0 %v180
    %206 = vmatprep.subr.mxu0 0.0
    %207 = vmatpush1.msra.mxu0 %v181
    %208 = vmatprep.subr.mxu0 0.0
    %209 = vmatpush1.msra.mxu0 %v182
    %210 = vmatprep.subr.mxu0 0.0
    %211 = vmatpush1.msra.mxu0 %v183
    %212 = vmatprep.subr.mxu0 0.0
    %213 = vmatpush1.msra.mxu0 %v184
    %214 = vmatprep.subr.mxu0 0.0
    %215 = vmatpush1.msra.mxu0 %v185
    %216 = vmatprep.subr.mxu0 0.0
    %217 = vmatpush1.msra.mxu0 %v196
    %218 = vmatprep.subr.mxu0 0.0
    %219 = vmatpush1.msra.mxu0 0.0
    %220 = vmatprep.subr.mxu0 0.0
    %221 = vmatpush1.msra.mxu0 0.0
    %222 = vmatprep.subr.mxu0 0.0
    %223 = vmatpush1.msra.mxu0 0.0
    %224 = vmatprep.subr.mxu0 0.0
    %225 = vmatpush1.msra.mxu0 0.0
    %226 = vmatprep.subr.mxu0 0.0
    %227 = vmatpush1.msra.mxu0 0.0
    %228 = vmatprep.subr.mxu0 0.0
    %229 = vmatpush1.msra.mxu0 0.0
    %230 = vmatprep.subr.mxu0 0.0
    %231 = vmatpush1.msra.mxu0 0.0
    %232 = vmatprep.subr.mxu0 0.0
    %233 = vmatpush1.msra.mxu0 0.0
    %234 = vmatprep.subr.mxu0 0.0
    %235 = vmatpush1.msra.mxu0 0.0
    %236 = vmatprep.subr.mxu0 0.0
    %237 = vmatpush1.msra.mxu0 0.0
    %238 = vmatprep.subr.mxu0 0.0
    %239 = vmatpush1.msra.mxu0 0.0
    %240 = vmatprep.subr.mxu0 0.0
    %241 = vmatpush1.msra.mxu0 0.0
    %242 = vmatprep.subr.mxu0 0.0
    %243 = vmatpush1.msra.mxu0 0.0
    %244 = vmatprep.subr.mxu0 0.0
    %245 = vmatpush1.msra.mxu0 0.0
    %246 = vmatprep.subr.mxu0 0.0
    %247 = vmatpush1.msra.mxu0 0.0
    %248 = vmatprep.subr.mxu0 0.0
    %249 = vmatpush1.msra.mxu0 0.0
    %250 = vmatprep.subr.mxu0 0.0
    %251 = vmatpush1.msra.mxu0 0.0
    %252 = vmatprep.subr.mxu0 0.0
    %253 = vmatpush1.msra.mxu0 0.0
    %254 = vmatprep.subr.mxu0 0.0
    %255 = vmatpush1.msra.mxu0 0.0
    %256 = vmatprep.subr.mxu0 0.0
    %257 = vmatpush1.msra.mxu0 0.0
    %258 = vmatprep.subr.mxu0 0.0
    %259 = vmatpush1.msra.mxu0 0.0
    %260 = vmatprep.subr.mxu0 0.0
    %261 = vmatpush1.msra.mxu0 0.0
    %262 = vmatprep.mubr.f32.mxu0 0.0
    %263 = vmatmul.mubr.f32.gmra.mrb[0].mxu0 %v189
    %v264 = vpop.f32.mrb[0].mxu0
    %v265 = vadd.f32 0.0, %v264
    %v266 = vpop.f32.mrb[0].mxu0
    %267 = vmatprep.mubr.f32.mxu0 0.0
    %268 = vmatmul.mubr.f32.gmra.mrb[0].mxu0 %v192
    %v269 = vpop.f32.mrb[0].mxu0
    %v270 = vadd.f32 0.0, %v269
    %v271 = vpop.f32.mrb[0].mxu0
    %272 = vdwg.mxu0
    %275 = vrot.lane.b32.xlu0 %v265, 127
    %v276 = vpop.permute.xlu0 %275
    %277 = vrot.lane.b32.xlu0 %v270, 127
    %v278 = vpop.permute.xlu0 %277
    %281 = vrot.lane.b32.xlu0 %v265, 126
    %v282 = vpop.permute.xlu0 %281
    %283 = vrot.lane.b32.xlu0 %v270, 126
    %v284 = vpop.permute.xlu0 %283
    %v287 = vld [vmem:[%s4] sm:$0xff]
    %v288 = vld [vmem:[%s4 + $0x8] sm:$0xff]
    %v289 = vld [vmem:[%s4 + $0x10] sm:$0xff]
    %v290 = vld [vmem:[%s4 + $0x18] sm:$0xff]
    %v291 = vld [vmem:[%s5] sm:$0xff]
    %v292 = vld [vmem:[%s5 + $0x8] sm:$0xff]
    %v293 = vld [vmem:[%s5 + $0x10] sm:$0xff]
    %v294 = vld [vmem:[%s5 + $0x18] sm:$0xff]
    %296 = vset.pattern.permute.xlu0 0
    %297 = vperm.xlu0 %296, %v291
    %v298 = vpop.permute.xlu0 %297
    %301 = vset.pattern.permute.xlu0 0
    %302 = vperm.xlu0 %301, %v292
    %v303 = vpop.permute.xlu0 %302
    %306 = vset.pattern.permute.xlu0 0
    %307 = vperm.xlu0 %306, %v293
    %v308 = vpop.permute.xlu0 %307
    %311 = vset.pattern.permute.xlu0 0
    %312 = vperm.xlu0 %311, %v294
    %v313 = vpop.permute.xlu0 %312
    %vm315 = vcmask 392192
    %v317 = vsel %vm315, %v287, 0
    %v320 = vsel %vm315, %v288, 0
    %v323 = vsel %vm315, %v289, 0
    %v326 = vsel %vm315, %v290, 0
    %328 = vmatprep.subr.mxu0 0.0
    %329 = vmatpush1.msra.mxu0 %v265
    %330 = vmatprep.subr.mxu0 0.0
    %331 = vmatpush1.msra.mxu0 %v270
    %332 = vmatprep.subr.mxu0 0.0
    %333 = vmatpush1.msra.mxu0 %v276
    %334 = vmatprep.subr.mxu0 0.0
    %335 = vmatpush1.msra.mxu0 %v278
    %336 = vmatprep.subr.mxu0 0.0
    %337 = vmatpush1.msra.mxu0 %v282
    %338 = vmatprep.subr.mxu0 0.0
    %339 = vmatpush1.msra.mxu0 %v284
    %340 = vmatprep.subr.mxu0 0.0
    %341 = vmatpush1.msra.mxu0 0.0
    %342 = vmatprep.subr.mxu0 0.0
    %343 = vmatpush1.msra.mxu0 0.0
    %344 = vmatprep.subr.mxu0 0.0
    %345 = vmatpush1.msra.mxu0 0.0
    %346 = vmatprep.subr.mxu0 0.0
    %347 = vmatpush1.msra.mxu0 0.0
    %348 = vmatprep.subr.mxu0 0.0
    %349 = vmatpush1.msra.mxu0 0.0
    %350 = vmatprep.subr.mxu0 0.0
    %351 = vmatpush1.msra.mxu0 0.0
    %352 = vmatprep.subr.mxu0 0.0
    %353 = vmatpush1.msra.mxu0 0.0
    %354 = vmatprep.subr.mxu0 0.0
    %355 = vmatpush1.msra.mxu0 0.0
    %356 = vmatprep.subr.mxu0 0.0
    %357 = vmatpush1.msra.mxu0 0.0
    %358 = vmatprep.subr.mxu0 0.0
    %359 = vmatpush1.msra.mxu0 0.0
    %360 = vmatprep.subr.mxu0 0.0
    %361 = vmatpush1.msra.mxu0 0.0
    %362 = vmatprep.subr.mxu0 0.0
    %363 = vmatpush1.msra.mxu0 0.0
    %364 = vmatprep.subr.mxu0 0.0
    %365 = vmatpush1.msra.mxu0 0.0
    %366 = vmatprep.subr.mxu0 0.0
    %367 = vmatpush1.msra.mxu0 0.0
    %368 = vmatprep.subr.mxu0 0.0
    %369 = vmatpush1.msra.mxu0 0.0
    %370 = vmatprep.subr.mxu0 0.0
    %371 = vmatpush1.msra.mxu0 0.0
    %372 = vmatprep.subr.mxu0 0.0
    %373 = vmatpush1.msra.mxu0 0.0
    %374 = vmatprep.subr.mxu0 0.0
    %375 = vmatpush1.msra.mxu0 0.0
    %376 = vmatprep.subr.mxu0 0.0
    %377 = vmatpush1.msra.mxu0 0.0
    %378 = vmatprep.subr.mxu0 0.0
    %379 = vmatpush1.msra.mxu0 0.0
    %380 = vmatprep.subr.mxu0 0.0
    %381 = vmatpush1.msra.mxu0 0.0
    %382 = vmatprep.subr.mxu0 0.0
    %383 = vmatpush1.msra.mxu0 0.0
    %384 = vmatprep.subr.mxu0 0.0
    %385 = vmatpush1.msra.mxu0 0.0
    %386 = vmatprep.subr.mxu0 0.0
    %387 = vmatpush1.msra.mxu0 0.0
    %388 = vmatprep.subr.mxu0 0.0
    %389 = vmatpush1.msra.mxu0 0.0
    %390 = vmatprep.subr.mxu0 0.0
    %391 = vmatpush1.msra.mxu0 0.0
    %392 = vmatprep.mubr.f32.mxu0 0.0
    %393 = vmatmul.mubr.f32.gmra.mrb[0].mxu0 %v317
    %v394 = vpop.f32.mrb[0].mxu0
    %v395 = vadd.f32 %v298, %v394
    %v396 = vpop.f32.mrb[0].mxu0
    %397 = vmatprep.mubr.f32.mxu0 0.0
    %398 = vmatmul.mubr.f32.gmra.mrb[0].mxu0 %v320
    %v399 = vpop.f32.mrb[0].mxu0
    %v400 = vadd.f32 %v303, %v399
    %v401 = vpop.f32.mrb[0].mxu0
    %402 = vmatprep.mubr.f32.mxu0 0.0
    %403 = vmatmul.mubr.f32.gmra.mrb[0].mxu0 %v323
    %v404 = vpop.f32.mrb[0].mxu0
    %v405 = vadd.f32 %v308, %v404
    %v406 = vpop.f32.mrb[0].mxu0
    %407 = vmatprep.mubr.f32.mxu0 0.0
    %408 = vmatmul.mubr.f32.gmra.mrb[0].mxu0 %v326
    %v409 = vpop.f32.mrb[0].mxu0
    %v410 = vadd.f32 %v313, %v409
    %v411 = vpop.f32.mrb[0].mxu0
    %412 = vdwg.mxu0
    %v413 = vmax.f32 %v395, 0.0
    %v414 = vmax.f32 %v400, 0.0
    %v415 = vmax.f32 %v405, 0.0
    %v416 = vmax.f32 %v410, 0.0
    %421 = vrot.lane.b32.xlu0 %v413, 127
    %v422 = vpop.permute.xlu0 %421
    %423 = vrot.lane.b32.xlu0 %v414, 127
    %v424 = vpop.permute.xlu0 %423
    %425 = vrot.lane.b32.xlu0 %v415, 127
    %v426 = vpop.permute.xlu0 %425
    %427 = vrot.lane.b32.xlu0 %v416, 127
    %v428 = vpop.permute.xlu0 %427
    %v433 = vmax.f32 %v413, %v422
    %v434 = vmax.f32 %v414, %v424
    %v435 = vmax.f32 %v415, %v426
    %v436 = vmax.f32 %v416, %v428
    %v437 = vld [vmem:[%s6] sm:$0xff]
    %v438 = vld [vmem:[%s6 + $0x8] sm:$0xff]
    %v439 = vld [vmem:[%s6 + $0x10] sm:$0xff]
    %v440 = vld [vmem:[%s6 + $0x18] sm:$0xff]
    %v441 = vld [vmem:[%s6 + $0x20] sm:$0xf]
    %vm442 = vcmask 293888
    %v444 = vsel %vm442, %v433, 0
    %v447 = vsel %vm442, %v434, 0
    %v450 = vsel %vm442, %v435, 0
    %v453 = vsel %vm442, %v436, 0
    %v456 = vsel %vm65, %v441, 0
    %458 = vmatprep.subr.mxu0 0.0
    %459 = vmatpush1.msra.mxu0 %v437
    %460 = vmatprep.subr.mxu0 0.0
    %461 = vmatpush1.msra.mxu0 %v438
    %462 = vmatprep.subr.mxu0 0.0
    %463 = vmatpush1.msra.mxu0 %v439
    %464 = vmatprep.subr.mxu0 0.0
    %465 = vmatpush1.msra.mxu0 %v440
    %466 = vmatprep.subr.mxu0 0.0
    %467 = vmatpush1.msra.mxu0 %v456
    %468 = vmatprep.subr.mxu0 0.0
    %469 = vmatpush1.msra.mxu0 0.0
    %470 = vmatprep.subr.mxu0 0.0
    %471 = vmatpush1.msra.mxu0 0.0
    %472 = vmatprep.subr.mxu0 0.0
    %473 = vmatpush1.msra.mxu0 0.0
    %474 = vmatprep.subr.mxu0 0.0
    %475 = vmatpush1.msra.mxu0 0.0
    %476 = vmatprep.subr.mxu0 0.0
    %477 = vmatpush1.msra.mxu0 0.0
    %478 = vmatprep.subr.mxu0 0.0
    %479 = vmatpush1.msra.mxu0 0.0
    %480 = vmatprep.subr.mxu0 0.0
    %481 = vmatpush1.msra.mxu0 0.0
    %482 = vmatprep.subr.mxu0 0.0
    %483 = vmatpush1.msra.mxu0 0.0
    %484 = vmatprep.subr.mxu0 0.0
    %485 = vmatpush1.msra.mxu0 0.0
    %486 = vmatprep.subr.mxu0 0.0
    %487 = vmatpush1.msra.mxu0 0.0
    %488 = vmatprep.subr.mxu0 0.0
    %489 = vmatpush1.msra.mxu0 0.0
    %490 = vmatprep.subr.mxu0 0.0
    %491 = vmatpush1.msra.mxu0 0.0
    %492 = vmatprep.subr.mxu0 0.0
    %493 = vmatpush1.msra.mxu0 0.0
    %494 = vmatprep.subr.mxu0 0.0
    %495 = vmatpush1.msra.mxu0 0.0
    %496 = vmatprep.subr.mxu0 0.0
    %497 = vmatpush1.msra.mxu0 0.0
    %498 = vmatprep.subr.mxu0 0.0
    %499 = vmatpush1.msra.mxu0 0.0
    %500 = vmatprep.subr.mxu0 0.0
    %501 = vmatpush1.msra.mxu0 0.0
    %502 = vmatprep.subr.mxu0 0.0
    %503 = vmatpush1.msra.mxu0 0.0
    %504 = vmatprep.subr.mxu0 0.0
    %505 = vmatpush1.msra.mxu0 0.0
    %506 = vmatprep.subr.mxu0 0.0
    %507 = vmatpush1.msra.mxu0 0.0
    %508 = vmatprep.subr.mxu0 0.0
    %509 = vmatpush1.msra.mxu0 0.0
    %510 = vmatprep.subr.mxu0 0.0
    %511 = vmatpush1.msra.mxu0 0.0
    %512 = vmatprep.subr.mxu0 0.0
    %513 = vmatpush1.msra.mxu0 0.0
    %514 = vmatprep.subr.mxu0 0.0
    %515 = vmatpush1.msra.mxu0 0.0
    %516 = vmatprep.subr.mxu0 0.0
    %517 = vmatpush1.msra.mxu0 0.0
    %518 = vmatprep.subr.mxu0 0.0
    %519 = vmatpush1.msra.mxu0 0.0
    %520 = vmatprep.subr.mxu0 0.0
    %521 = vmatpush1.msra.mxu0 0.0
    %522 = vmatprep.mubr.f32.mxu0 0.0
    %523 = vmatmul.mubr.f32.gmra.mrb[0].mxu0 %v444
    %v524 = vpop.f32.mrb[0].mxu0
    %v525 = vadd.f32 0.0, %v524
    %v526 = vpop.f32.mrb[0].mxu0
    %527 = vmatprep.mubr.f32.mxu0 0.0
    %528 = vmatmul.mubr.f32.gmra.mrb[0].mxu0 %v447
    %v529 = vpop.f32.mrb[0].mxu0
    %v530 = vadd.f32 0.0, %v529
    %v531 = vpop.f32.mrb[0].mxu0
    %532 = vmatprep.mubr.f32.mxu0 0.0
    %533 = vmatmul.mubr.f32.gmra.mrb[0].mxu0 %v450
    %v534 = vpop.f32.mrb[0].mxu0
    %v535 = vadd.f32 0.0, %v534
    %v536 = vpop.f32.mrb[0].mxu0
    %537 = vmatprep.mubr.f32.mxu0 0.0
    %538 = vmatmul.mubr.f32.gmra.mrb[0].mxu0 %v453
    %v539 = vpop.f32.mrb[0].mxu0
    %v540 = vadd.f32 0.0, %v539
    %v541 = vpop.f32.mrb[0].mxu0
    %542 = vdwg.mxu0
    %547 = vrot.lane.b32.xlu0 %v525, 127
    %v548 = vpop.permute.xlu0 %547
    %549 = vrot.lane.b32.xlu0 %v530, 127
    %v550 = vpop.permute.xlu0 %549
    %551 = vrot.lane.b32.xlu0 %v535, 127
    %v552 = vpop.permute.xlu0 %551
    %553 = vrot.lane.b32.xlu0 %v540, 127
    %v554 = vpop.permute.xlu0 %553
    %559 = vrot.lane.b32.xlu0 %v525, 126
    %v560 = vpop.permute.xlu0 %559
    %561 = vrot.lane.b32.xlu0 %v530, 126
    %v562 = vpop.permute.xlu0 %561
    %563 = vrot.lane.b32.xlu0 %v535, 126
    %v564 = vpop.permute.xlu0 %563
    %565 = vrot.lane.b32.xlu0 %v540, 126
    %v566 = vpop.permute.xlu0 %565
    %v571 = vld [vmem:[%s7] sm:$0xff]
    %v572 = vld [vmem:[%s7 + $0x8] sm:$0xff]
    %v573 = vld [vmem:[%s7 + $0x10] sm:$0xff]
    %v574 = vld [vmem:[%s7 + $0x18] sm:$0xff]
    %v575 = vld [vmem:[%s8] sm:$0xff]
    %v576 = vld [vmem:[%s8 + $0x8] sm:$0xff]
    %v577 = vld [vmem:[%s8 + $0x10] sm:$0xff]
    %v578 = vld [vmem:[%s8 + $0x18] sm:$0xff]
    %580 = vset.pattern.permute.xlu0 0
    %581 = vperm.xlu0 %580, %v575
    %v582 = vpop.permute.xlu0 %581
    %585 = vset.pattern.permute.xlu0 0
    %586 = vperm.xlu0 %585, %v576
    %v587 = vpop.permute.xlu0 %586
    %590 = vset.pattern.permute.xlu0 0
    %591 = vperm.xlu0 %590, %v577
    %v592 = vpop.permute.xlu0 %591
    %595 = vset.pattern.permute.xlu0 0
    %596 = vperm.xlu0 %595, %v578
    %v597 = vpop.permute.xlu0 %596
    %vm599 = vcmask 785408
    %v601 = vsel %vm599, %v571, 0
    %v604 = vsel %vm599, %v572, 0
    %v607 = vsel %vm599, %v573, 0
    %v610 = vsel %vm599, %v574, 0
    %612 = vmatprep.subr.mxu0 0.0
    %613 = vmatpush1.msra.mxu0 %v525
    %614 = vmatprep.subr.mxu0 0.0
    %615 = vmatpush1.msra.mxu0 %v530
    %616 = vmatprep.subr.mxu0 0.0
    %617 = vmatpush1.msra.mxu0 %v535
    %618 = vmatprep.subr.mxu0 0.0
    %619 = vmatpush1.msra.mxu0 %v540
    %620 = vmatprep.subr.mxu0 0.0
    %621 = vmatpush1.msra.mxu0 %v548
    %622 = vmatprep.subr.mxu0 0.0
    %623 = vmatpush1.msra.mxu0 %v550
    %624 = vmatprep.subr.mxu0 0.0
    %625 = vmatpush1.msra.mxu0 %v552
    %626 = vmatprep.subr.mxu0 0.0
    %627 = vmatpush1.msra.mxu0 %v554
    %628 = vmatprep.subr.mxu0 0.0
    %629 = vmatpush1.msra.mxu0 %v560
    %630 = vmatprep.subr.mxu0 0.0
    %631 = vmatpush1.msra.mxu0 %v562
    %632 = vmatprep.subr.mxu0 0.0
    %633 = vmatpush1.msra.mxu0 %v564
    %634 = vmatprep.subr.mxu0 0.0
    %635 = vmatpush1.msra.mxu0 %v566
    %636 = vmatprep.subr.mxu0 0.0
    %637 = vmatpush1.msra.mxu0 0.0
    %638 = vmatprep.subr.mxu0 0.0
    %639 = vmatpush1.msra.mxu0 0.0
    %640 = vmatprep.subr.mxu0 0.0
    %641 = vmatpush1.msra.mxu0 0.0
    %642 = vmatprep.subr.mxu0 0.0
    %643 = vmatpush1.msra.mxu0 0.0
    %644 = vmatprep.subr.mxu0 0.0
    %645 = vmatpush1.msra.mxu0 0.0
    %646 = vmatprep.subr.mxu0 0.0
    %647 = vmatpush1.msra.mxu0 0.0
    %648 = vmatprep.subr.mxu0 0.0
    %649 = vmatpush1.msra.mxu0 0.0
    %650 = vmatprep.subr.mxu0 0.0
    %651 = vmatpush1.msra.mxu0 0.0
    %652 = vmatprep.subr.mxu0 0.0
    %653 = vmatpush1.msra.mxu0 0.0
    %654 = vmatprep.subr.mxu0 0.0
    %655 = vmatpush1.msra.mxu0 0.0
    %656 = vmatprep.subr.mxu0 0.0
    %657 = vmatpush1.msra.mxu0 0.0
    %658 = vmatprep.subr.mxu0 0.0
    %659 = vmatpush1.msra.mxu0 0.0
    %660 = vmatprep.subr.mxu0 0.0
    %661 = vmatpush1.msra.mxu0 0.0
    %662 = vmatprep.subr.mxu0 0.0
    %663 = vmatpush1.msra.mxu0 0.0
    %664 = vmatprep.subr.mxu0 0.0
    %665 = vmatpush1.msra.mxu0 0.0
    %666 = vmatprep.subr.mxu0 0.0
    %667 = vmatpush1.msra.mxu0 0.0
    %668 = vmatprep.subr.mxu0 0.0
    %669 = vmatpush1.msra.mxu0 0.0
    %670 = vmatprep.subr.mxu0 0.0
    %671 = vmatpush1.msra.mxu0 0.0
    %672 = vmatprep.subr.mxu0 0.0
    %673 = vmatpush1.msra.mxu0 0.0
    %674 = vmatprep.subr.mxu0 0.0
    %675 = vmatpush1.msra.mxu0 0.0
    %676 = vmatprep.mubr.f32.mxu0 0.0
    %677 = vmatmul.mubr.f32.gmra.mrb[0].mxu0 %v601
    %v678 = vpop.f32.mrb[0].mxu0
    %v679 = vadd.f32 %v582, %v678
    %v680 = vpop.f32.mrb[0].mxu0
    %681 = vmatprep.mubr.f32.mxu0 0.0
    %682 = vmatmul.mubr.f32.gmra.mrb[0].mxu0 %v604
    %v683 = vpop.f32.mrb[0].mxu0
    %v684 = vadd.f32 %v587, %v683
    %v685 = vpop.f32.mrb[0].mxu0
    %686 = vmatprep.mubr.f32.mxu0 0.0
    %687 = vmatmul.mubr.f32.gmra.mrb[0].mxu0 %v607
    %v688 = vpop.f32.mrb[0].mxu0
    %v689 = vadd.f32 %v592, %v688
    %v690 = vpop.f32.mrb[0].mxu0
    %691 = vmatprep.mubr.f32.mxu0 0.0
    %692 = vmatmul.mubr.f32.gmra.mrb[0].mxu0 %v610
    %v693 = vpop.f32.mrb[0].mxu0
    %v694 = vadd.f32 %v597, %v693
    %v695 = vpop.f32.mrb[0].mxu0
    %696 = vdwg.mxu0
    %v697 = vmax.f32 %v679, 0.0
    %v698 = vmax.f32 %v684, 0.0
    %v699 = vmax.f32 %v689, 0.0
    %v700 = vmax.f32 %v694, 0.0
    %705 = vrot.lane.b32.xlu0 %v697, 127
    %v706 = vpop.permute.xlu0 %705
    %707 = vrot.lane.b32.xlu0 %v698, 127
    %v708 = vpop.permute.xlu0 %707
    %709 = vrot.lane.b32.xlu0 %v699, 127
    %v710 = vpop.permute.xlu0 %709
    %711 = vrot.lane.b32.xlu0 %v700, 127
    %v712 = vpop.permute.xlu0 %711
    %v717 = vmax.f32 %v697, %v706
    %v718 = vmax.f32 %v698, %v708
    %v719 = vmax.f32 %v699, %v710
    %v720 = vmax.f32 %v700, %v712
    %v721 = vld [vmem:[%s9] sm:$0xff]
    %v722 = vld [vmem:[%s9 + $0x8] sm:$0x7f]
    %vm723 = vcmask 121856
    %v725 = vsel %vm723, %v717, 0
    %v728 = vsel %vm723, %v718, 0
    %v731 = vsel %vm723, %v719, 0
    %v734 = vsel %vm723, %v720, 0
    %vm736 = vcmask 1046528
    %v738 = vsel %vm736, %v722, 0
    %740 = vmatprep.subr.mxu0 0.0
    %741 = vmatpush1.msra.mxu0 %v721
    %742 = vmatprep.subr.mxu0 0.0
    %743 = vmatpush1.msra.mxu0 %v738
    %744 = vmatprep.subr.mxu0 0.0
    %745 = vmatpush1.msra.mxu0 0.0
    %746 = vmatprep.subr.mxu0 0.0
    %747 = vmatpush1.msra.mxu0 0.0
    %748 = vmatprep.subr.mxu0 0.0
    %749 = vmatpush1.msra.mxu0 0.0
    %750 = vmatprep.subr.mxu0 0.0
    %751 = vmatpush1.msra.mxu0 0.0
    %752 = vmatprep.subr.mxu0 0.0
    %753 = vmatpush1.msra.mxu0 0.0
    %754 = vmatprep.subr.mxu0 0.0
    %755 = vmatpush1.msra.mxu0 0.0
    %756 = vmatprep.subr.mxu0 0.0
    %757 = vmatpush1.msra.mxu0 0.0
    %758 = vmatprep.subr.mxu0 0.0
    %759 = vmatpush1.msra.mxu0 0.0
    %760 = vmatprep.subr.mxu0 0.0
    %761 = vmatpush1.msra.mxu0 0.0
    %762 = vmatprep.subr.mxu0 0.0
    %763 = vmatpush1.msra.mxu0 0.0
    %764 = vmatprep.subr.mxu0 0.0
    %765 = vmatpush1.msra.mxu0 0.0
    %766 = vmatprep.subr.mxu0 0.0
    %767 = vmatpush1.msra.mxu0 0.0
    %768 = vmatprep.subr.mxu0 0.0
    %769 = vmatpush1.msra.mxu0 0.0
    %770 = vmatprep.subr.mxu0 0.0
    %771 = vmatpush1.msra.mxu0 0.0
    %772 = vmatprep.subr.mxu0 0.0
    %773 = vmatpush1.msra.mxu0 0.0
    %774 = vmatprep.subr.mxu0 0.0
    %775 = vmatpush1.msra.mxu0 0.0
    %776 = vmatprep.subr.mxu0 0.0
    %777 = vmatpush1.msra.mxu0 0.0
    %778 = vmatprep.subr.mxu0 0.0
    %779 = vmatpush1.msra.mxu0 0.0
    %780 = vmatprep.subr.mxu0 0.0
    %781 = vmatpush1.msra.mxu0 0.0
    %782 = vmatprep.subr.mxu0 0.0
    %783 = vmatpush1.msra.mxu0 0.0
    %784 = vmatprep.subr.mxu0 0.0
    %785 = vmatpush1.msra.mxu0 0.0
    %786 = vmatprep.subr.mxu0 0.0
    %787 = vmatpush1.msra.mxu0 0.0
    %788 = vmatprep.subr.mxu0 0.0
    %789 = vmatpush1.msra.mxu0 0.0
    %790 = vmatprep.subr.mxu0 0.0
    %791 = vmatpush1.msra.mxu0 0.0
    %792 = vmatprep.subr.mxu0 0.0
    %793 = vmatpush1.msra.mxu0 0.0
    %794 = vmatprep.subr.mxu0 0.0
    %795 = vmatpush1.msra.mxu0 0.0
    %796 = vmatprep.subr.mxu0 0.0
    %797 = vmatpush1.msra.mxu0 0.0
    %798 = vmatprep.subr.mxu0 0.0
    %799 = vmatpush1.msra.mxu0 0.0
    %800 = vmatprep.subr.mxu0 0.0
    %801 = vmatpush1.msra.mxu0 0.0
    %802 = vmatprep.subr.mxu0 0.0
    %803 = vmatpush1.msra.mxu0 0.0
    %804 = vmatprep.mubr.f32.mxu0 0.0
    %805 = vmatmul.mubr.f32.gmra.mrb[0].mxu0 %v725
    %v806 = vpop.f32.mrb[0].mxu0
    %v807 = vadd.f32 0.0, %v806
    %v808 = vpop.f32.mrb[0].mxu0
    %809 = vmatprep.mubr.f32.mxu0 0.0
    %810 = vmatmul.mubr.f32.gmra.mrb[0].mxu0 %v728
    %v811 = vpop.f32.mrb[0].mxu0
    %v812 = vadd.f32 0.0, %v811
    %v813 = vpop.f32.mrb[0].mxu0
    %814 = vmatprep.mubr.f32.mxu0 0.0
    %815 = vmatmul.mubr.f32.gmra.mrb[0].mxu0 %v731
    %v816 = vpop.f32.mrb[0].mxu0
    %v817 = vadd.f32 0.0, %v816
    %v818 = vpop.f32.mrb[0].mxu0
    %819 = vmatprep.mubr.f32.mxu0 0.0
    %820 = vmatmul.mubr.f32.gmra.mrb[0].mxu0 %v734
    %v821 = vpop.f32.mrb[0].mxu0
    %v822 = vadd.f32 0.0, %v821
    %v823 = vpop.f32.mrb[0].mxu0
    %824 = vdwg.mxu0
    %826 = vrot.lane.b32.xlu0 %v812, 8
    %v827 = vpop.permute.xlu0 %826
    %830 = vrot.lane.b32.xlu0 %v817, 16
    %v831 = vpop.permute.xlu0 %830
    %834 = vrot.lane.b32.xlu0 %v822, 24
    %v835 = vpop.permute.xlu0 %834
    %vm837 = vcmask 64512
    %v838 = vsel %vm837, %v807, %v827
    %vm839 = vcmask 130048
    %v840 = vsel %vm839, %v838, %v831
    %vm841 = vcmask 195584
    %v842 = vsel %vm841, %v840, %v835
    %s843 = scalar_lea.vmem %s0, 4
    %v844 = vld [vmem:[%s843] sm:$0xf]
    %v846 = vrot.slane %v844, 4
    %847 = vrot.lane.b32.xlu0 %v846, 127
    %v848 = vpop.permute.xlu0 %847
    %850 = vrot.lane.b32.xlu0 %v844, 126
    %v851 = vpop.permute.xlu0 %850
    %v852 = vsel %vm65, %v844, %v848
    %v853 = vsel %vm65, %v851, 0
    %855 = vmatprep.subr.mxu0 0.0
    %856 = vmatpush1.msra.mxu0 %v852
    %857 = vmatprep.subr.mxu0 0.0
    %858 = vmatpush1.msra.mxu0 %v853
    %859 = vmatprep.subr.mxu0 0.0
    %860 = vmatpush1.msra.mxu0 0.0
    %861 = vmatprep.subr.mxu0 0.0
    %862 = vmatpush1.msra.mxu0 0.0
    %863 = vmatprep.subr.mxu0 0.0
    %864 = vmatpush1.msra.mxu0 0.0
    %865 = vmatprep.subr.mxu0 0.0
    %866 = vmatpush1.msra.mxu0 0.0
    %867 = vmatprep.subr.mxu0 0.0
    %868 = vmatpush1.msra.mxu0 0.0
    %869 = vmatprep.subr.mxu0 0.0
    %870 = vmatpush1.msra.mxu0 0.0
    %871 = vmatprep.subr.mxu0 0.0
    %872 = vmatpush1.msra.mxu0 0.0
    %873 = vmatprep.subr.mxu0 0.0
    %874 = vmatpush1.msra.mxu0 0.0
    %875 = vmatprep.subr.mxu0 0.0
    %876 = vmatpush1.msra.mxu0 0.0
    %877 = vmatprep.subr.mxu0 0.0
    %878 = vmatpush1.msra.mxu0 0.0
    %879 = vmatprep.subr.mxu0 0.0
    %880 = vmatpush1.msra.mxu0 0.0
    %881 = vmatprep.subr.mxu0 0.0
    %882 = vmatpush1.msra.mxu0 0.0
    %883 = vmatprep.subr.mxu0 0.0
    %884 = vmatpush1.msra.mxu0 0.0
    %885 = vmatprep.subr.mxu0 0.0
    %886 = vmatpush1.msra.mxu0 0.0
    %887 = vmatprep.subr.mxu0 0.0
    %888 = vmatpush1.msra.mxu0 0.0
    %889 = vmatprep.subr.mxu0 0.0
    %890 = vmatpush1.msra.mxu0 0.0
    %891 = vmatprep.subr.mxu0 0.0
    %892 = vmatpush1.msra.mxu0 0.0
    %893 = vmatprep.subr.mxu0 0.0
    %894 = vmatpush1.msra.mxu0 0.0
    %895 = vmatprep.subr.mxu0 0.0
    %896 = vmatpush1.msra.mxu0 0.0
    %897 = vmatprep.subr.mxu0 0.0
    %898 = vmatpush1.msra.mxu0 0.0
    %899 = vmatprep.subr.mxu0 0.0
    %900 = vmatpush1.msra.mxu0 0.0
    %901 = vmatprep.subr.mxu0 0.0
    %902 = vmatpush1.msra.mxu0 0.0
    %903 = vmatprep.subr.mxu0 0.0
    %904 = vmatpush1.msra.mxu0 0.0
    %905 = vmatprep.subr.mxu0 0.0
    %906 = vmatpush1.msra.mxu0 0.0
    %907 = vmatprep.subr.mxu0 0.0
    %908 = vmatpush1.msra.mxu0 0.0
    %909 = vmatprep.subr.mxu0 0.0
    %910 = vmatpush1.msra.mxu0 0.0
    %911 = vmatprep.subr.mxu0 0.0
    %912 = vmatpush1.msra.mxu0 0.0
    %913 = vmatprep.subr.mxu0 0.0
    %914 = vmatpush1.msra.mxu0 0.0
    %915 = vmatprep.subr.mxu0 0.0
    %916 = vmatpush1.msra.mxu0 0.0
    %917 = vmatprep.subr.mxu0 0.0
    %918 = vmatpush1.msra.mxu0 0.0
    %919 = vmatprep.mubr.f32.mxu0 0.0
    %920 = vmatmul.mubr.f32.gmra.mrb[0].mxu0 %v83
    %v921 = vpop.f32.mrb[0].mxu0
    %v922 = vadd.f32 %v74, %v921
    %v923 = vpop.f32.mrb[0].mxu0
    %924 = vmatprep.mubr.f32.mxu0 0.0
    %925 = vmatmul.mubr.f32.gmra.mrb[0].mxu0 %v86
    %v926 = vpop.f32.mrb[0].mxu0
    %v927 = vadd.f32 %v79, %v926
    %v928 = vpop.f32.mrb[0].mxu0
    %929 = vdwg.mxu0
    %v930 = vmax.f32 %v922, 0.0
    %v931 = vmax.f32 %v927, 0.0
    %934 = vrot.lane.b32.xlu0 %v930, 127
    %v935 = vpop.permute.xlu0 %934
    %936 = vrot.lane.b32.xlu0 %v931, 127
    %v937 = vpop.permute.xlu0 %936
    %v940 = vmax.f32 %v930, %v935
    %v941 = vmax.f32 %v931, %v937
    %v943 = vsel %vm187, %v940, 0
    %v946 = vsel %vm187, %v941, 0
    %948 = vmatprep.subr.mxu0 0.0
    %949 = vmatpush1.msra.mxu0 %v177
    %950 = vmatprep.subr.mxu0 0.0
    %951 = vmatpush1.msra.mxu0 %v178
    %952 = vmatprep.subr.mxu0 0.0
    %953 = vmatpush1.msra.mxu0 %v179
    %954 = vmatprep.subr.mxu0 0.0
    %955 = vmatpush1.msra.mxu0 %v180
    %956 = vmatprep.subr.mxu0 0.0
    %957 = vmatpush1.msra.mxu0 %v181
    %958 = vmatprep.subr.mxu0 0.0
    %959 = vmatpush1.msra.mxu0 %v182
    %960 = vmatprep.subr.mxu0 0.0
    %961 = vmatpush1.msra.mxu0 %v183
    %962 = vmatprep.subr.mxu0 0.0
    %963 = vmatpush1.msra.mxu0 %v184
    %964 = vmatprep.subr.mxu0 0.0
    %965 = vmatpush1.msra.mxu0 %v185
    %966 = vmatprep.subr.mxu0 0.0
    %967 = vmatpush1.msra.mxu0 %v196
    %968 = vmatprep.subr.mxu0 0.0
    %969 = vmatpush1.msra.mxu0 0.0
    %970 = vmatprep.subr.mxu0 0.0
    %971 = vmatpush1.msra.mxu0 0.0
    %972 = vmatprep.subr.mxu0 0.0
    %973 = vmatpush1.msra.mxu0 0.0
    %974 = vmatprep.subr.mxu0 0.0
    %975 = vmatpush1.msra.mxu0 0.0
    %976 = vmatprep.subr.mxu0 0.0
    %977 = vmatpush1.msra.mxu0 0.0
    %978 = vmatprep.subr.mxu0 0.0
    %979 = vmatpush1.msra.mxu0 0.0
    %980 = vmatprep.subr.mxu0 0.0
    %981 = vmatpush1.msra.mxu0 0.0
    %982 = vmatprep.subr.mxu0 0.0
    %983 = vmatpush1.msra.mxu0 0.0
    %984 = vmatprep.subr.mxu0 0.0
    %985 = vmatpush1.msra.mxu0 0.0
    %986 = vmatprep.subr.mxu0 0.0
    %987 = vmatpush1.msra.mxu0 0.0
    %988 = vmatprep.subr.mxu0 0.0
    %989 = vmatpush1.msra.mxu0 0.0
    %990 = vmatprep.subr.mxu0 0.0
    %991 = vmatpush1.msra.mxu0 0.0
    %992 = vmatprep.subr.mxu0 0.0
    %993 = vmatpush1.msra.mxu0 0.0
    %994 = vmatprep.subr.mxu0 0.0
    %995 = vmatpush1.msra.mxu0 0.0
    %996 = vmatprep.subr.mxu0 0.0
    %997 = vmatpush1.msra.mxu0 0.0
    %998 = vmatprep.subr.mxu0 0.0
    %999 = vmatpush1.msra.mxu0 0.0
    %1000 = vmatprep.subr.mxu0 0.0
    %1001 = vmatpush1.msra.mxu0 0.0
    %1002 = vmatprep.subr.mxu0 0.0
    %1003 = vmatpush1.msra.mxu0 0.0
    %1004 = vmatprep.subr.mxu0 0.0
    %1005 = vmatpush1.msra.mxu0 0.0
    %1006 = vmatprep.subr.mxu0 0.0
    %1007 = vmatpush1.msra.mxu0 0.0
    %1008 = vmatprep.subr.mxu0 0.0
    %1009 = vmatpush1.msra.mxu0 0.0
    %1010 = vmatprep.subr.mxu0 0.0
    %1011 = vmatpush1.msra.mxu0 0.0
    %1012 = vmatprep.mubr.f32.mxu0 0.0
    %1013 = vmatmul.mubr.f32.gmra.mrb[0].mxu0 %v943
    %v1014 = vpop.f32.mrb[0].mxu0
    %v1015 = vadd.f32 0.0, %v1014
    %v1016 = vpop.f32.mrb[0].mxu0
    %1017 = vmatprep.mubr.f32.mxu0 0.0
    %1018 = vmatmul.mubr.f32.gmra.mrb[0].mxu0 %v946
    %v1019 = vpop.f32.mrb[0].mxu0
    %v1020 = vadd.f32 0.0, %v1019
    %v1021 = vpop.f32.mrb[0].mxu0
    %1022 = vdwg.mxu0
    %1025 = vrot.lane.b32.xlu0 %v1015, 127
    %v1026 = vpop.permute.xlu0 %1025
    %1027 = vrot.lane.b32.xlu0 %v1020, 127
    %v1028 = vpop.permute.xlu0 %1027
    %1031 = vrot.lane.b32.xlu0 %v1015, 126
    %v1032 = vpop.permute.xlu0 %1031
    %1033 = vrot.lane.b32.xlu0 %v1020, 126
    %v1034 = vpop.permute.xlu0 %1033
    %1037 = vmatprep.subr.mxu0 0.0
    %1038 = vmatpush1.msra.mxu0 %v1015
    %1039 = vmatprep.subr.mxu0 0.0
    %1040 = vmatpush1.msra.mxu0 %v1020
    %1041 = vmatprep.subr.mxu0 0.0
    %1042 = vmatpush1.msra.mxu0 %v1026
    %1043 = vmatprep.subr.mxu0 0.0
    %1044 = vmatpush1.msra.mxu0 %v1028
    %1045 = vmatprep.subr.mxu0 0.0
    %1046 = vmatpush1.msra.mxu0 %v1032
    %1047 = vmatprep.subr.mxu0 0.0
    %1048 = vmatpush1.msra.mxu0 %v1034
    %1049 = vmatprep.subr.mxu0 0.0
    %1050 = vmatpush1.msra.mxu0 0.0
    %1051 = vmatprep.subr.mxu0 0.0
    %1052 = vmatpush1.msra.mxu0 0.0
    %1053 = vmatprep.subr.mxu0 0.0
    %1054 = vmatpush1.msra.mxu0 0.0
    %1055 = vmatprep.subr.mxu0 0.0
    %1056 = vmatpush1.msra.mxu0 0.0
    %1057 = vmatprep.subr.mxu0 0.0
    %1058 = vmatpush1.msra.mxu0 0.0
    %1059 = vmatprep.subr.mxu0 0.0
    %1060 = vmatpush1.msra.mxu0 0.0
    %1061 = vmatprep.subr.mxu0 0.0
    %1062 = vmatpush1.msra.mxu0 0.0
    %1063 = vmatprep.subr.mxu0 0.0
    %1064 = vmatpush1.msra.mxu0 0.0
    %1065 = vmatprep.subr.mxu0 0.0
    %1066 = vmatpush1.msra.mxu0 0.0
    %1067 = vmatprep.subr.mxu0 0.0
    %1068 = vmatpush1.msra.mxu0 0.0
    %1069 = vmatprep.subr.mxu0 0.0
    %1070 = vmatpush1.msra.mxu0 0.0
    %1071 = vmatprep.subr.mxu0 0.0
    %1072 = vmatpush1.msra.mxu0 0.0
    %1073 = vmatprep.subr.mxu0 0.0
    %1074 = vmatpush1.msra.mxu0 0.0
    %1075 = vmatprep.subr.mxu0 0.0
    %1076 = vmatpush1.msra.mxu0 0.0
    %1077 = vmatprep.subr.mxu0 0.0
    %1078 = vmatpush1.msra.mxu0 0.0
    %1079 = vmatprep.subr.mxu0 0.0
    %1080 = vmatpush1.msra.mxu0 0.0
    %1081 = vmatprep.subr.mxu0 0.0
    %1082 = vmatpush1.msra.mxu0 0.0
    %1083 = vmatprep.subr.mxu0 0.0
    %1084 = vmatpush1.msra.mxu0 0.0
    %1085 = vmatprep.subr.mxu0 0.0
    %1086 = vmatpush1.msra.mxu0 0.0
    %1087 = vmatprep.subr.mxu0 0.0
    %1088 = vmatpush1.msra.mxu0 0.0
    %1089 = vmatprep.subr.mxu0 0.0
    %1090 = vmatpush1.msra.mxu0 0.0
    %1091 = vmatprep.subr.mxu0 0.0
    %1092 = vmatpush1.msra.mxu0 0.0
    %1093 = vmatprep.subr.mxu0 0.0
    %1094 = vmatpush1.msra.mxu0 0.0
    %1095 = vmatprep.subr.mxu0 0.0
    %1096 = vmatpush1.msra.mxu0 0.0
    %1097 = vmatprep.subr.mxu0 0.0
    %1098 = vmatpush1.msra.mxu0 0.0
    %1099 = vmatprep.subr.mxu0 0.0
    %1100 = vmatpush1.msra.mxu0 0.0
    %1101 = vmatprep.mubr.f32.mxu0 0.0
    %1102 = vmatmul.mubr.f32.gmra.mrb[0].mxu0 %v317
    %v1103 = vpop.f32.mrb[0].mxu0
    %v1104 = vadd.f32 %v298, %v1103
    %v1105 = vpop.f32.mrb[0].mxu0
    %1106 = vmatprep.mubr.f32.mxu0 0.0
    %1107 = vmatmul.mubr.f32.gmra.mrb[0].mxu0 %v320
    %v1108 = vpop.f32.mrb[0].mxu0
    %v1109 = vadd.f32 %v303, %v1108
    %v1110 = vpop.f32.mrb[0].mxu0
    %1111 = vmatprep.mubr.f32.mxu0 0.0
    %1112 = vmatmul.mubr.f32.gmra.mrb[0].mxu0 %v323
    %v1113 = vpop.f32.mrb[0].mxu0
    %v1114 = vadd.f32 %v308, %v1113
    %v1115 = vpop.f32.mrb[0].mxu0
    %1116 = vmatprep.mubr.f32.mxu0 0.0
    %1117 = vmatmul.mubr.f32.gmra.mrb[0].mxu0 %v326
    %v1118 = vpop.f32.mrb[0].mxu0
    %v1119 = vadd.f32 %v313, %v1118
    %v1120 = vpop.f32.mrb[0].mxu0
    %1121 = vdwg.mxu0
    %v1122 = vmax.f32 %v1104, 0.0
    %v1123 = vmax.f32 %v1109, 0.0
    %v1124 = vmax.f32 %v1114, 0.0
    %v1125 = vmax.f32 %v1119, 0.0
    %1130 = vrot.lane.b32.xlu0 %v1122, 127
    %v1131 = vpop.permute.xlu0 %1130
    %1132 = vrot.lane.b32.xlu0 %v1123, 127
    %v1133 = vpop.permute.xlu0 %1132
    %1134 = vrot.lane.b32.xlu0 %v1124, 127
    %v1135 = vpop.permute.xlu0 %1134
    %1136 = vrot.lane.b32.xlu0 %v1125, 127
    %v1137 = vpop.permute.xlu0 %1136
    %v1142 = vmax.f32 %v1122, %v1131
    %v1143 = vmax.f32 %v1123, %v1133
    %v1144 = vmax.f32 %v1124, %v1135
    %v1145 = vmax.f32 %v1125, %v1137
    %v1147 = vsel %vm442, %v1142, 0
    %v1150 = vsel %vm442, %v1143, 0
    %v1153 = vsel %vm442, %v1144, 0
    %v1156 = vsel %vm442, %v1145, 0
    %1158 = vmatprep.subr.mxu0 0.0
    %1159 = vmatpush1.msra.mxu0 %v437
    %1160 = vmatprep.subr.mxu0 0.0
    %1161 = vmatpush1.msra.mxu0 %v438
    %1162 = vmatprep.subr.mxu0 0.0
    %1163 = vmatpush1.msra.mxu0 %v439
    %1164 = vmatprep.subr.mxu0 0.0
    %1165 = vmatpush1.msra.mxu0 %v440
    %1166 = vmatprep.subr.mxu0 0.0
    %1167 = vmatpush1.msra.mxu0 %v456
    %1168 = vmatprep.subr.mxu0 0.0
    %1169 = vmatpush1.msra.mxu0 0.0
    %1170 = vmatprep.subr.mxu0 0.0
    %1171 = vmatpush1.msra.mxu0 0.0
    %1172 = vmatprep.subr.mxu0 0.0
    %1173 = vmatpush1.msra.mxu0 0.0
    %1174 = vmatprep.subr.mxu0 0.0
    %1175 = vmatpush1.msra.mxu0 0.0
    %1176 = vmatprep.subr.mxu0 0.0
    %1177 = vmatpush1.msra.mxu0 0.0
    %1178 = vmatprep.subr.mxu0 0.0
    %1179 = vmatpush1.msra.mxu0 0.0
    %1180 = vmatprep.subr.mxu0 0.0
    %1181 = vmatpush1.msra.mxu0 0.0
    %1182 = vmatprep.subr.mxu0 0.0
    %1183 = vmatpush1.msra.mxu0 0.0
    %1184 = vmatprep.subr.mxu0 0.0
    %1185 = vmatpush1.msra.mxu0 0.0
    %1186 = vmatprep.subr.mxu0 0.0
    %1187 = vmatpush1.msra.mxu0 0.0
    %1188 = vmatprep.subr.mxu0 0.0
    %1189 = vmatpush1.msra.mxu0 0.0
    %1190 = vmatprep.subr.mxu0 0.0
    %1191 = vmatpush1.msra.mxu0 0.0
    %1192 = vmatprep.subr.mxu0 0.0
    %1193 = vmatpush1.msra.mxu0 0.0
    %1194 = vmatprep.subr.mxu0 0.0
    %1195 = vmatpush1.msra.mxu0 0.0
    %1196 = vmatprep.subr.mxu0 0.0
    %1197 = vmatpush1.msra.mxu0 0.0
    %1198 = vmatprep.subr.mxu0 0.0
    %1199 = vmatpush1.msra.mxu0 0.0
    %1200 = vmatprep.subr.mxu0 0.0
    %1201 = vmatpush1.msra.mxu0 0.0
    %1202 = vmatprep.subr.mxu0 0.0
    %1203 = vmatpush1.msra.mxu0 0.0
    %1204 = vmatprep.subr.mxu0 0.0
    %1205 = vmatpush1.msra.mxu0 0.0
    %1206 = vmatprep.subr.mxu0 0.0
    %1207 = vmatpush1.msra.mxu0 0.0
    %1208 = vmatprep.subr.mxu0 0.0
    %1209 = vmatpush1.msra.mxu0 0.0
    %1210 = vmatprep.subr.mxu0 0.0
    %1211 = vmatpush1.msra.mxu0 0.0
    %1212 = vmatprep.subr.mxu0 0.0
    %1213 = vmatpush1.msra.mxu0 0.0
    %1214 = vmatprep.subr.mxu0 0.0
    %1215 = vmatpush1.msra.mxu0 0.0
    %1216 = vmatprep.subr.mxu0 0.0
    %1217 = vmatpush1.msra.mxu0 0.0
    %1218 = vmatprep.subr.mxu0 0.0
    %1219 = vmatpush1.msra.mxu0 0.0
    %1220 = vmatprep.subr.mxu0 0.0
    %1221 = vmatpush1.msra.mxu0 0.0
    %1222 = vmatprep.mubr.f32.mxu0 0.0
    %1223 = vmatmul.mubr.f32.gmra.mrb[0].mxu0 %v1147
    %v1224 = vpop.f32.mrb[0].mxu0
    %v1225 = vadd.f32 0.0, %v1224
    %v1226 = vpop.f32.mrb[0].mxu0
    %1227 = vmatprep.mubr.f32.mxu0 0.0
    %1228 = vmatmul.mubr.f32.gmra.mrb[0].mxu0 %v1150
    %v1229 = vpop.f32.mrb[0].mxu0
    %v1230 = vadd.f32 0.0, %v1229
    %v1231 = vpop.f32.mrb[0].mxu0
    %1232 = vmatprep.mubr.f32.mxu0 0.0
    %1233 = vmatmul.mubr.f32.gmra.mrb[0].mxu0 %v1153
    %v1234 = vpop.f32.mrb[0].mxu0
    %v1235 = vadd.f32 0.0, %v1234
    %v1236 = vpop.f32.mrb[0].mxu0
    %1237 = vmatprep.mubr.f32.mxu0 0.0
    %1238 = vmatmul.mubr.f32.gmra.mrb[0].mxu0 %v1156
    %v1239 = vpop.f32.mrb[0].mxu0
    %v1240 = vadd.f32 0.0, %v1239
    %v1241 = vpop.f32.mrb[0].mxu0
    %1242 = vdwg.mxu0
    %1247 = vrot.lane.b32.xlu0 %v1225, 127
    %v1248 = vpop.permute.xlu0 %1247
    %1249 = vrot.lane.b32.xlu0 %v1230, 127
    %v1250 = vpop.permute.xlu0 %1249
    %1251 = vrot.lane.b32.xlu0 %v1235, 127
    %v1252 = vpop.permute.xlu0 %1251
    %1253 = vrot.lane.b32.xlu0 %v1240, 127
    %v1254 = vpop.permute.xlu0 %1253
    %1259 = vrot.lane.b32.xlu0 %v1225, 126
    %v1260 = vpop.permute.xlu0 %1259
    %1261 = vrot.lane.b32.xlu0 %v1230, 126
    %v1262 = vpop.permute.xlu0 %1261
    %1263 = vrot.lane.b32.xlu0 %v1235, 126
    %v1264 = vpop.permute.xlu0 %1263
    %1265 = vrot.lane.b32.xlu0 %v1240, 126
    %v1266 = vpop.permute.xlu0 %1265
    %1271 = vmatprep.subr.mxu0 0.0
    %1272 = vmatpush1.msra.mxu0 %v1225
    %1273 = vmatprep.subr.mxu0 0.0
    %1274 = vmatpush1.msra.mxu0 %v1230
    %1275 = vmatprep.subr.mxu0 0.0
    %1276 = vmatpush1.msra.mxu0 %v1235
    %1277 = vmatprep.subr.mxu0 0.0
    %1278 = vmatpush1.msra.mxu0 %v1240
    %1279 = vmatprep.subr.mxu0 0.0
    %1280 = vmatpush1.msra.mxu0 %v1248
    %1281 = vmatprep.subr.mxu0 0.0
    %1282 = vmatpush1.msra.mxu0 %v1250
    %1283 = vmatprep.subr.mxu0 0.0
    %1284 = vmatpush1.msra.mxu0 %v1252
    %1285 = vmatprep.subr.mxu0 0.0
    %1286 = vmatpush1.msra.mxu0 %v1254
    %1287 = vmatprep.subr.mxu0 0.0
    %1288 = vmatpush1.msra.mxu0 %v1260
    %1289 = vmatprep.subr.mxu0 0.0
    %1290 = vmatpush1.msra.mxu0 %v1262
    %1291 = vmatprep.subr.mxu0 0.0
    %1292 = vmatpush1.msra.mxu0 %v1264
    %1293 = vmatprep.subr.mxu0 0.0
    %1294 = vmatpush1.msra.mxu0 %v1266
    %1295 = vmatprep.subr.mxu0 0.0
    %1296 = vmatpush1.msra.mxu0 0.0
    %1297 = vmatprep.subr.mxu0 0.0
    %1298 = vmatpush1.msra.mxu0 0.0
    %1299 = vmatprep.subr.mxu0 0.0
    %1300 = vmatpush1.msra.mxu0 0.0
    %1301 = vmatprep.subr.mxu0 0.0
    %1302 = vmatpush1.msra.mxu0 0.0
    %1303 = vmatprep.subr.mxu0 0.0
    %1304 = vmatpush1.msra.mxu0 0.0
    %1305 = vmatprep.subr.mxu0 0.0
    %1306 = vmatpush1.msra.mxu0 0.0
    %1307 = vmatprep.subr.mxu0 0.0
    %1308 = vmatpush1.msra.mxu0 0.0
    %1309 = vmatprep.subr.mxu0 0.0
    %1310 = vmatpush1.msra.mxu0 0.0
    %1311 = vmatprep.subr.mxu0 0.0
    %1312 = vmatpush1.msra.mxu0 0.0
    %1313 = vmatprep.subr.mxu0 0.0
    %1314 = vmatpush1.msra.mxu0 0.0
    %1315 = vmatprep.subr.mxu0 0.0
    %1316 = vmatpush1.msra.mxu0 0.0
    %1317 = vmatprep.subr.mxu0 0.0
    %1318 = vmatpush1.msra.mxu0 0.0
    %1319 = vmatprep.subr.mxu0 0.0
    %1320 = vmatpush1.msra.mxu0 0.0
    %1321 = vmatprep.subr.mxu0 0.0
    %1322 = vmatpush1.msra.mxu0 0.0
    %1323 = vmatprep.subr.mxu0 0.0
    %1324 = vmatpush1.msra.mxu0 0.0
    %1325 = vmatprep.subr.mxu0 0.0
    %1326 = vmatpush1.msra.mxu0 0.0
    %1327 = vmatprep.subr.mxu0 0.0
    %1328 = vmatpush1.msra.mxu0 0.0
    %1329 = vmatprep.subr.mxu0 0.0
    %1330 = vmatpush1.msra.mxu0 0.0
    %1331 = vmatprep.subr.mxu0 0.0
    %1332 = vmatpush1.msra.mxu0 0.0
    %1333 = vmatprep.subr.mxu0 0.0
    %1334 = vmatpush1.msra.mxu0 0.0
    %1335 = vmatprep.mubr.f32.mxu0 0.0
    %1336 = vmatmul.mubr.f32.gmra.mrb[0].mxu0 %v601
    %v1337 = vpop.f32.mrb[0].mxu0
    %v1338 = vadd.f32 %v582, %v1337
    %v1339 = vpop.f32.mrb[0].mxu0
    %1340 = vmatprep.mubr.f32.mxu0 0.0
    %1341 = vmatmul.mubr.f32.gmra.mrb[0].mxu0 %v604
    %v1342 = vpop.f32.mrb[0].mxu0
    %v1343 = vadd.f32 %v587, %v1342
    %v1344 = vpop.f32.mrb[0].mxu0
    %1345 = vmatprep.mubr.f32.mxu0 0.0
    %1346 = vmatmul.mubr.f32.gmra.mrb[0].mxu0 %v607
    %v1347 = vpop.f32.mrb[0].mxu0
    %v1348 = vadd.f32 %v592, %v1347
    %v1349 = vpop.f32.mrb[0].mxu0
    %1350 = vmatprep.mubr.f32.mxu0 0.0
    %1351 = vmatmul.mubr.f32.gmra.mrb[0].mxu0 %v610
    %v1352 = vpop.f32.mrb[0].mxu0
    %v1353 = vadd.f32 %v597, %v1352
    %v1354 = vpop.f32.mrb[0].mxu0
    %1355 = vdwg.mxu0
    %v1356 = vmax.f32 %v1338, 0.0
    %v1357 = vmax.f32 %v1343, 0.0
    %v1358 = vmax.f32 %v1348, 0.0
    %v1359 = vmax.f32 %v1353, 0.0
    %1364 = vrot.lane.b32.xlu0 %v1356, 127
    %v1365 = vpop.permute.xlu0 %1364
    %1366 = vrot.lane.b32.xlu0 %v1357, 127
    %v1367 = vpop.permute.xlu0 %1366
    %1368 = vrot.lane.b32.xlu0 %v1358, 127
    %v1369 = vpop.permute.xlu0 %1368
    %1370 = vrot.lane.b32.xlu0 %v1359, 127
    %v1371 = vpop.permute.xlu0 %1370
    %v1376 = vmax.f32 %v1356, %v1365
    %v1377 = vmax.f32 %v1357, %v1367
    %v1378 = vmax.f32 %v1358, %v1369
    %v1379 = vmax.f32 %v1359, %v1371
    %v1381 = vsel %vm723, %v1376, 0
    %v1384 = vsel %vm723, %v1377, 0
    %v1387 = vsel %vm723, %v1378, 0
    %v1390 = vsel %vm723, %v1379, 0
    %1392 = vmatprep.subr.mxu0 0.0
    %1393 = vmatpush1.msra.mxu0 %v721
    %1394 = vmatprep.subr.mxu0 0.0
    %1395 = vmatpush1.msra.mxu0 %v738
    %1396 = vmatprep.subr.mxu0 0.0
    %1397 = vmatpush1.msra.mxu0 0.0
    %1398 = vmatprep.subr.mxu0 0.0
    %1399 = vmatpush1.msra.mxu0 0.0
    %1400 = vmatprep.subr.mxu0 0.0
    %1401 = vmatpush1.msra.mxu0 0.0
    %1402 = vmatprep.subr.mxu0 0.0
    %1403 = vmatpush1.msra.mxu0 0.0
    %1404 = vmatprep.subr.mxu0 0.0
    %1405 = vmatpush1.msra.mxu0 0.0
    %1406 = vmatprep.subr.mxu0 0.0
    %1407 = vmatpush1.msra.mxu0 0.0
    %1408 = vmatprep.subr.mxu0 0.0
    %1409 = vmatpush1.msra.mxu0 0.0
    %1410 = vmatprep.subr.mxu0 0.0
    %1411 = vmatpush1.msra.mxu0 0.0
    %1412 = vmatprep.subr.mxu0 0.0
    %1413 = vmatpush1.msra.mxu0 0.0
    %1414 = vmatprep.subr.mxu0 0.0
    %1415 = vmatpush1.msra.mxu0 0.0
    %1416 = vmatprep.subr.mxu0 0.0
    %1417 = vmatpush1.msra.mxu0 0.0
    %1418 = vmatprep.subr.mxu0 0.0
    %1419 = vmatpush1.msra.mxu0 0.0
    %1420 = vmatprep.subr.mxu0 0.0
    %1421 = vmatpush1.msra.mxu0 0.0
    %1422 = vmatprep.subr.mxu0 0.0
    %1423 = vmatpush1.msra.mxu0 0.0
    %1424 = vmatprep.subr.mxu0 0.0
    %1425 = vmatpush1.msra.mxu0 0.0
    %1426 = vmatprep.subr.mxu0 0.0
    %1427 = vmatpush1.msra.mxu0 0.0
    %1428 = vmatprep.subr.mxu0 0.0
    %1429 = vmatpush1.msra.mxu0 0.0
    %1430 = vmatprep.subr.mxu0 0.0
    %1431 = vmatpush1.msra.mxu0 0.0
    %1432 = vmatprep.subr.mxu0 0.0
    %1433 = vmatpush1.msra.mxu0 0.0
    %1434 = vmatprep.subr.mxu0 0.0
    %1435 = vmatpush1.msra.mxu0 0.0
    %1436 = vmatprep.subr.mxu0 0.0
    %1437 = vmatpush1.msra.mxu0 0.0
    %1438 = vmatprep.subr.mxu0 0.0
    %1439 = vmatpush1.msra.mxu0 0.0
    %1440 = vmatprep.subr.mxu0 0.0
    %1441 = vmatpush1.msra.mxu0 0.0
    %1442 = vmatprep.subr.mxu0 0.0
    %1443 = vmatpush1.msra.mxu0 0.0
    %1444 = vmatprep.subr.mxu0 0.0
    %1445 = vmatpush1.msra.mxu0 0.0
    %1446 = vmatprep.subr.mxu0 0.0
    %1447 = vmatpush1.msra.mxu0 0.0
    %1448 = vmatprep.subr.mxu0 0.0
    %1449 = vmatpush1.msra.mxu0 0.0
    %1450 = vmatprep.subr.mxu0 0.0
    %1451 = vmatpush1.msra.mxu0 0.0
    %1452 = vmatprep.subr.mxu0 0.0
    %1453 = vmatpush1.msra.mxu0 0.0
    %1454 = vmatprep.subr.mxu0 0.0
    %1455 = vmatpush1.msra.mxu0 0.0
    %1456 = vmatprep.mubr.f32.mxu0 0.0
    %1457 = vmatmul.mubr.f32.gmra.mrb[0].mxu0 %v1381
    %v1458 = vpop.f32.mrb[0].mxu0
    %v1459 = vadd.f32 0.0, %v1458
    %v1460 = vpop.f32.mrb[0].mxu0
    %1461 = vmatprep.mubr.f32.mxu0 0.0
    %1462 = vmatmul.mubr.f32.gmra.mrb[0].mxu0 %v1384
    %v1463 = vpop.f32.mrb[0].mxu0
    %v1464 = vadd.f32 0.0, %v1463
    %v1465 = vpop.f32.mrb[0].mxu0
    %1466 = vmatprep.mubr.f32.mxu0 0.0
    %1467 = vmatmul.mubr.f32.gmra.mrb[0].mxu0 %v1387
    %v1468 = vpop.f32.mrb[0].mxu0
    %v1469 = vadd.f32 0.0, %v1468
    %v1470 = vpop.f32.mrb[0].mxu0
    %1471 = vmatprep.mubr.f32.mxu0 0.0
    %1472 = vmatmul.mubr.f32.gmra.mrb[0].mxu0 %v1390
    %v1473 = vpop.f32.mrb[0].mxu0
    %v1474 = vadd.f32 0.0, %v1473
    %v1475 = vpop.f32.mrb[0].mxu0
    %1476 = vdwg.mxu0
    %1478 = vrot.lane.b32.xlu0 %v1464, 8
    %v1479 = vpop.permute.xlu0 %1478
    %1482 = vrot.lane.b32.xlu0 %v1469, 16
    %v1483 = vpop.permute.xlu0 %1482
    %1486 = vrot.lane.b32.xlu0 %v1474, 24
    %v1487 = vpop.permute.xlu0 %1486
    %v1489 = vsel %vm837, %v1459, %v1479
    %v1490 = vsel %vm839, %v1489, %v1483
    %v1491 = vsel %vm841, %v1490, %v1487
    %v1492 = vld [vmem:[%s10] sm:$0xff]
    %v1493 = vld [vmem:[%s10 + $0x8] sm:$0xff]
    %v1494 = vld [vmem:[%s10 + $0x10] sm:$0xff]
    %v1495 = vld [vmem:[%s10 + $0x18] sm:$0xff]
    %v1496 = vld [vmem:[%s10 + $0x20] sm:$0xff]
    %v1497 = vld [vmem:[%s10 + $0x28] sm:$0xff]
    %v1498 = vld [vmem:[%s10 + $0x30] sm:$0xff]
    %v1499 = vld [vmem:[%s10 + $0x38] sm:$0xff]
    %v1500 = vld [vmem:[%s11] sm:$0x3]
    %v1502 = vlaneseq
    %v1503 = vshrl.u32 %v1502, 7
    %v1504 = vsub.s32 0, %v1503
    %v1505 = vrot.slane %v1500, %v1504
    %v1506 = vlaneseq
    %v1507 = vshrl.u32 %v1506, 7
    %v1508 = vsub.s32 1, %v1507
    %v1509 = vrot.slane %v1500, %v1508
    %vm1512 = vcmask 261120
    %v1514 = vsel %vm1512, %v842, 0
    %v1517 = vsel %vm1512, %v1491, 0
    %1519 = vmatprep.subr.mxu0 %v1493
    %1520 = vmatpush1.msra.mxu0 %v1492
    %1521 = vmatprep.subr.mxu0 %v1495
    %1522 = vmatpush1.msra.mxu0 %v1494
    %1523 = vmatprep.subr.mxu0 %v1497
    %1524 = vmatpush1.msra.mxu0 %v1496
    %1525 = vmatprep.subr.mxu0 %v1499
    %1526 = vmatpush1.msra.mxu0 %v1498
    %1527 = vmatprep.subr.mxu0 0.0
    %1528 = vmatpush1.msra.mxu0 0.0
    %1529 = vmatprep.subr.mxu0 0.0
    %1530 = vmatpush1.msra.mxu0 0.0
    %1531 = vmatprep.subr.mxu0 0.0
    %1532 = vmatpush1.msra.mxu0 0.0
    %1533 = vmatprep.subr.mxu0 0.0
    %1534 = vmatpush1.msra.mxu0 0.0
    %1535 = vmatprep.subr.mxu0 0.0
    %1536 = vmatpush1.msra.mxu0 0.0
    %1537 = vmatprep.subr.mxu0 0.0
    %1538 = vmatpush1.msra.mxu0 0.0
    %1539 = vmatprep.subr.mxu0 0.0
    %1540 = vmatpush1.msra.mxu0 0.0
    %1541 = vmatprep.subr.mxu0 0.0
    %1542 = vmatpush1.msra.mxu0 0.0
    %1543 = vmatprep.subr.mxu0 0.0
    %1544 = vmatpush1.msra.mxu0 0.0
    %1545 = vmatprep.subr.mxu0 0.0
    %1546 = vmatpush1.msra.mxu0 0.0
    %1547 = vmatprep.subr.mxu0 0.0
    %1548 = vmatpush1.msra.mxu0 0.0
    %1549 = vmatprep.subr.mxu0 0.0
    %1550 = vmatpush1.msra.mxu0 0.0
    %1551 = vmatprep.subr.mxu0 0.0
    %1552 = vmatpush1.msra.mxu0 0.0
    %1553 = vmatprep.subr.mxu0 0.0
    %1554 = vmatpush1.msra.mxu0 0.0
    %1555 = vmatprep.subr.mxu0 0.0
    %1556 = vmatpush1.msra.mxu0 0.0
    %1557 = vmatprep.subr.mxu0 0.0
    %1558 = vmatpush1.msra.mxu0 0.0
    %1559 = vmatprep.subr.mxu0 0.0
    %1560 = vmatpush1.msra.mxu0 0.0
    %1561 = vmatprep.subr.mxu0 0.0
    %1562 = vmatpush1.msra.mxu0 0.0
    %1563 = vmatprep.subr.mxu0 0.0
    %1564 = vmatpush1.msra.mxu0 0.0
    %1565 = vmatprep.subr.mxu0 0.0
    %1566 = vmatpush1.msra.mxu0 0.0
    %1567 = vmatprep.subr.mxu0 0.0
    %1568 = vmatpush1.msra.mxu0 0.0
    %1569 = vmatprep.subr.mxu0 0.0
    %1570 = vmatpush1.msra.mxu0 0.0
    %1571 = vmatprep.subr.mxu0 0.0
    %1572 = vmatpush1.msra.mxu0 0.0
    %1573 = vmatprep.subr.mxu0 0.0
    %1574 = vmatpush1.msra.mxu0 0.0
    %1575 = vmatprep.subr.mxu0 0.0
    %1576 = vmatpush1.msra.mxu0 0.0
    %1577 = vmatprep.subr.mxu0 0.0
    %1578 = vmatpush1.msra.mxu0 0.0
    %1579 = vmatprep.subr.mxu0 0.0
    %1580 = vmatpush1.msra.mxu0 0.0
    %1581 = vmatprep.subr.mxu0 0.0
    %1582 = vmatpush1.msra.mxu0 0.0
    %1583 = vmatprep.mubr.f32.mxu0 0.0
    %1584 = vmatmul.mubr.f32.gmra.mrb[0].mxu0 %v1514
    %v1585 = vpop.f32.mrb[0].mxu0
    %v1586 = vadd.f32 %v1505, %v1585
    %v1587 = vpop.f32.mrb[0].mxu0
    %v1588 = vadd.f32 %v1509, %v1587
    %1589 = vmatprep.mubr.f32.mxu0 0.0
    %1590 = vmatmul.mubr.f32.gmra.mrb[0].mxu0 %v1517
    %v1591 = vpop.f32.mrb[0].mxu0
    %v1592 = vadd.f32 %v1505, %v1591
    %v1593 = vpop.f32.mrb[0].mxu0
    %v1594 = vadd.f32 %v1509, %v1593
    %1595 = vdwg.mxu0
    %v1598 = vrot.slane %v1592, 7
    %v1599 = vrot.slane %v1594, 7
    %vm1602 = vcmask 1040384
    %v1603 = vsel %vm1602, %v1586, %v1598
    %v1604 = vsel %vm1602, %v1588, %v1599
    %v1605 = vld [vmem:[%s12] sm:$0xff]
    %v1606 = vld [vmem:[%s12 + $0x8] sm:$0xff]
    %v1607 = vld [vmem:[%s12 + $0x10] sm:$0xff]
    %v1608 = vld [vmem:[%s12 + $0x18] sm:$0xff]
    %v1609 = vld [vmem:[%s12 + $0x20] sm:$0xff]
    %v1610 = vld [vmem:[%s12 + $0x28] sm:$0xff]
    %v1611 = vld [vmem:[%s12 + $0x30] sm:$0xff]
    %v1612 = vld [vmem:[%s12 + $0x38] sm:$0xff]
    %v1613 = vld [vmem:[%s12 + $0x40] sm:$0xff]
    %v1614 = vld [vmem:[%s12 + $0x48] sm:$0xff]
    %v1615 = vld [vmem:[%s12 + $0x50] sm:$0xff]
    %v1616 = vld [vmem:[%s12 + $0x58] sm:$0xff]
    %v1617 = vld [vmem:[%s12 + $0x60] sm:$0xff]
    %v1618 = vld [vmem:[%s12 + $0x68] sm:$0xff]
    %v1619 = vld [vmem:[%s12 + $0x70] sm:$0xff]
    %v1620 = vld [vmem:[%s12 + $0x78] sm:$0xff]
    %vm1621 = vcmask 523264
    %v1623 = vsel %vm1621, 0.0, 0
    %1625 = vmatprep.subr.mxu0 %v1606
    %1626 = vmatpush1.msra.mxu0 %v1605
    %1627 = vmatprep.subr.mxu0 %v1608
    %1628 = vmatpush1.msra.mxu0 %v1607
    %1629 = vmatprep.subr.mxu0 %v1610
    %1630 = vmatpush1.msra.mxu0 %v1609
    %1631 = vmatprep.subr.mxu0 %v1612
    %1632 = vmatpush1.msra.mxu0 %v1611
    %1633 = vmatprep.subr.mxu0 %v1614
    %1634 = vmatpush1.msra.mxu0 %v1613
    %1635 = vmatprep.subr.mxu0 %v1616
    %1636 = vmatpush1.msra.mxu0 %v1615
    %1637 = vmatprep.subr.mxu0 %v1618
    %1638 = vmatpush1.msra.mxu0 %v1617
    %1639 = vmatprep.subr.mxu0 %v1620
    %1640 = vmatpush1.msra.mxu0 %v1619
    %1641 = vmatprep.subr.mxu0 0.0
    %1642 = vmatpush1.msra.mxu0 0.0
    %1643 = vmatprep.subr.mxu0 0.0
    %1644 = vmatpush1.msra.mxu0 0.0
    %1645 = vmatprep.subr.mxu0 0.0
    %1646 = vmatpush1.msra.mxu0 0.0
    %1647 = vmatprep.subr.mxu0 0.0
    %1648 = vmatpush1.msra.mxu0 0.0
    %1649 = vmatprep.subr.mxu0 0.0
    %1650 = vmatpush1.msra.mxu0 0.0
    %1651 = vmatprep.subr.mxu0 0.0
    %1652 = vmatpush1.msra.mxu0 0.0
    %1653 = vmatprep.subr.mxu0 0.0
    %1654 = vmatpush1.msra.mxu0 0.0
    %1655 = vmatprep.subr.mxu0 0.0
    %1656 = vmatpush1.msra.mxu0 0.0
    %1657 = vmatprep.subr.mxu0 0.0
    %1658 = vmatpush1.msra.mxu0 0.0
    %1659 = vmatprep.subr.mxu0 0.0
    %1660 = vmatpush1.msra.mxu0 0.0
    %1661 = vmatprep.subr.mxu0 0.0
    %1662 = vmatpush1.msra.mxu0 0.0
    %1663 = vmatprep.subr.mxu0 0.0
    %1664 = vmatpush1.msra.mxu0 0.0
    %1665 = vmatprep.subr.mxu0 0.0
    %1666 = vmatpush1.msra.mxu0 0.0
    %1667 = vmatprep.subr.mxu0 0.0
    %1668 = vmatpush1.msra.mxu0 0.0
    %1669 = vmatprep.subr.mxu0 0.0
    %1670 = vmatpush1.msra.mxu0 0.0
    %1671 = vmatprep.subr.mxu0 0.0
    %1672 = vmatpush1.msra.mxu0 0.0
    %1673 = vmatprep.subr.mxu0 0.0
    %1674 = vmatpush1.msra.mxu0 0.0
    %1675 = vmatprep.subr.mxu0 0.0
    %1676 = vmatpush1.msra.mxu0 0.0
    %1677 = vmatprep.subr.mxu0 0.0
    %1678 = vmatpush1.msra.mxu0 0.0
    %1679 = vmatprep.subr.mxu0 0.0
    %1680 = vmatpush1.msra.mxu0 0.0
    %1681 = vmatprep.subr.mxu0 0.0
    %1682 = vmatpush1.msra.mxu0 0.0
    %1683 = vmatprep.subr.mxu0 0.0
    %1684 = vmatpush1.msra.mxu0 0.0
    %1685 = vmatprep.subr.mxu0 0.0
    %1686 = vmatpush1.msra.mxu0 0.0
    %1687 = vmatprep.subr.mxu0 0.0
    %1688 = vmatpush1.msra.mxu0 0.0
    %1689 = vmatprep.mubr.f32.mxu0 0.0
    %1690 = vmatmul.mubr.f32.gmra.mrb[0].mxu0 %v1623
    %v1691 = vpop.f32.mrb[0].mxu0
    %v1692 = vadd.f32 0.0, %v1691
    %v1693 = vpop.f32.mrb[0].mxu0
    %v1694 = vadd.f32 0.0, %v1693
    %1695 = vdwg.mxu0
    %v1696 = vadd.f32 %v1603, %v1692
    %v1697 = vadd.f32 %v1604, %v1694
    %v1698 = vxor.u32 %v1696, 2147483648
    %v1699 = vmul.f32 %v1698, 1.442695
    %v1700 = vpow.pop %v1699
    %v1701 = vadd.f32 %v1700, 1.0
    %v1702 = vrcp.pop %v1701
    %v1703 = vmul.f32 1.0, %v1702
    %v1704 = vtanh.pop %v1697
    %v1705 = vxor.u32 %v1697, 2147483648
    %v1706 = vmul.f32 %v1705, 1.442695
    %v1707 = vpow.pop %v1706
    %v1708 = vadd.f32 %v1707, 1.0
    %v1709 = vrcp.pop %v1708
    %v1710 = vmul.f32 1.0, %v1709
    %v1711 = vmul.f32 %v1703, 0.0
    %v1712 = vmul.f32 %v1703, %v1704
    %1714 = vrot.lane.b32.xlu0 %v1712, 64
    %v1715 = vpop.permute.xlu0 %1714
    %v1717 = vadd.f32 %v1711, %v1715
    %v1718 = vtanh.pop %v1717
    %v1719 = vmul.f32 %v1710, %v1718
    %v1722 = vrot.slane %v1586, 1
    %v1723 = vrot.slane %v1588, 1
    %v1726 = vsel %vm1602, %v1722, %v1592
    %v1727 = vsel %vm1602, %v1723, %v1594
    %1729 = vrot.lane.b32.xlu0 %v1719, 64
    %v1730 = vpop.permute.xlu0 %1729
    %v1731 = vsel %vm1621, %v1730, 0
    %1733 = vmatprep.subr.mxu0 %v1606
    %1734 = vmatpush1.msra.mxu0 %v1605
    %1735 = vmatprep.subr.mxu0 %v1608
    %1736 = vmatpush1.msra.mxu0 %v1607
    %1737 = vmatprep.subr.mxu0 %v1610
    %1738 = vmatpush1.msra.mxu0 %v1609
    %1739 = vmatprep.subr.mxu0 %v1612
    %1740 = vmatpush1.msra.mxu0 %v1611
    %1741 = vmatprep.subr.mxu0 %v1614
    %1742 = vmatpush1.msra.mxu0 %v1613
    %1743 = vmatprep.subr.mxu0 %v1616
    %1744 = vmatpush1.msra.mxu0 %v1615
    %1745 = vmatprep.subr.mxu0 %v1618
    %1746 = vmatpush1.msra.mxu0 %v1617
    %1747 = vmatprep.subr.mxu0 %v1620
    %1748 = vmatpush1.msra.mxu0 %v1619
    %1749 = vmatprep.subr.mxu0 0.0
    %1750 = vmatpush1.msra.mxu0 0.0
    %1751 = vmatprep.subr.mxu0 0.0
    %1752 = vmatpush1.msra.mxu0 0.0
    %1753 = vmatprep.subr.mxu0 0.0
    %1754 = vmatpush1.msra.mxu0 0.0
    %1755 = vmatprep.subr.mxu0 0.0
    %1756 = vmatpush1.msra.mxu0 0.0
    %1757 = vmatprep.subr.mxu0 0.0
    %1758 = vmatpush1.msra.mxu0 0.0
    %1759 = vmatprep.subr.mxu0 0.0
    %1760 = vmatpush1.msra.mxu0 0.0
    %1761 = vmatprep.subr.mxu0 0.0
    %1762 = vmatpush1.msra.mxu0 0.0
    %1763 = vmatprep.subr.mxu0 0.0
    %1764 = vmatpush1.msra.mxu0 0.0
    %1765 = vmatprep.subr.mxu0 0.0
    %1766 = vmatpush1.msra.mxu0 0.0
    %1767 = vmatprep.subr.mxu0 0.0
    %1768 = vmatpush1.msra.mxu0 0.0
    %1769 = vmatprep.subr.mxu0 0.0
    %1770 = vmatpush1.msra.mxu0 0.0
    %1771 = vmatprep.subr.mxu0 0.0
    %1772 = vmatpush1.msra.mxu0 0.0
    %1773 = vmatprep.subr.mxu0 0.0
    %1774 = vmatpush1.msra.mxu0 0.0
    %1775 = vmatprep.subr.mxu0 0.0
    %1776 = vmatpush1.msra.mxu0 0.0
    %1777 = vmatprep.subr.mxu0 0.0
    %1778 = vmatpush1.msra.mxu0 0.0
    %1779 = vmatprep.subr.mxu0 0.0
    %1780 = vmatpush1.msra.mxu0 0.0
    %1781 = vmatprep.subr.mxu0 0.0
    %1782 = vmatpush1.msra.mxu0 0.0
    %1783 = vmatprep.subr.mxu0 0.0
    %1784 = vmatpush1.msra.mxu0 0.0
    %1785 = vmatprep.subr.mxu0 0.0
    %1786 = vmatpush1.msra.mxu0 0.0
    %1787 = vmatprep.subr.mxu0 0.0
    %1788 = vmatpush1.msra.mxu0 0.0
    %1789 = vmatprep.subr.mxu0 0.0
    %1790 = vmatpush1.msra.mxu0 0.0
    %1791 = vmatprep.subr.mxu0 0.0
    %1792 = vmatpush1.msra.mxu0 0.0
    %1793 = vmatprep.subr.mxu0 0.0
    %1794 = vmatpush1.msra.mxu0 0.0
    %1795 = vmatprep.subr.mxu0 0.0
    %1796 = vmatpush1.msra.mxu0 0.0
    %1797 = vmatprep.mubr.f32.mxu0 0.0
    %1798 = vmatmul.mubr.f32.gmra.mrb[0].mxu0 %v1731
    %v1799 = vpop.f32.mrb[0].mxu0
    %v1800 = vadd.f32 0.0, %v1799
    %v1801 = vpop.f32.mrb[0].mxu0
    %v1802 = vadd.f32 0.0, %v1801
    %1803 = vdwg.mxu0
    %v1804 = vadd.f32 %v1726, %v1800
    %v1805 = vadd.f32 %v1727, %v1802
    %v1806 = vxor.u32 %v1804, 2147483648
    %v1807 = vmul.f32 %v1806, 1.442695
    %v1808 = vpow.pop %v1807
    %v1809 = vadd.f32 %v1808, 1.0
    %v1810 = vrcp.pop %v1809
    %v1811 = vmul.f32 1.0, %v1810
    %v1812 = vtanh.pop %v1805
    %v1813 = vxor.u32 %v1805, 2147483648
    %v1814 = vmul.f32 %v1813, 1.442695
    %v1815 = vpow.pop %v1814
    %v1816 = vadd.f32 %v1815, 1.0
    %v1817 = vrcp.pop %v1816
    %v1818 = vmul.f32 1.0, %v1817
    %v1819 = vmul.f32 %v1811, %v1717
    %v1820 = vmul.f32 %v1811, %v1812
    %1822 = vrot.lane.b32.xlu0 %v1820, 64
    %v1823 = vpop.permute.xlu0 %1822
    %v1825 = vadd.f32 %v1819, %v1823
    %v1826 = vtanh.pop %v1825
    %v1827 = vmul.f32 %v1818, %v1826
    %v1828 = vrot.slane %v1586, 2
    %v1829 = vrot.slane %v1588, 2
    %v1832 = vrot.slane %v1592, 1
    %v1833 = vrot.slane %v1594, 1
    %v1836 = vsel %vm1602, %v1828, %v1832
    %v1837 = vsel %vm1602, %v1829, %v1833
    %1839 = vrot.lane.b32.xlu0 %v1827, 64
    %v1840 = vpop.permute.xlu0 %1839
    %v1841 = vsel %vm1621, %v1840, 0
    %1843 = vmatprep.subr.mxu0 %v1606
    %1844 = vmatpush1.msra.mxu0 %v1605
    %1845 = vmatprep.subr.mxu0 %v1608
    %1846 = vmatpush1.msra.mxu0 %v1607
    %1847 = vmatprep.subr.mxu0 %v1610
    %1848 = vmatpush1.msra.mxu0 %v1609
    %1849 = vmatprep.subr.mxu0 %v1612
    %1850 = vmatpush1.msra.mxu0 %v1611
    %1851 = vmatprep.subr.mxu0 %v1614
    %1852 = vmatpush1.msra.mxu0 %v1613
    %1853 = vmatprep.subr.mxu0 %v1616
    %1854 = vmatpush1.msra.mxu0 %v1615
    %1855 = vmatprep.subr.mxu0 %v1618
    %1856 = vmatpush1.msra.mxu0 %v1617
    %1857 = vmatprep.subr.mxu0 %v1620
    %1858 = vmatpush1.msra.mxu0 %v1619
    %1859 = vmatprep.subr.mxu0 0.0
    %1860 = vmatpush1.msra.mxu0 0.0
    %1861 = vmatprep.subr.mxu0 0.0
    %1862 = vmatpush1.msra.mxu0 0.0
    %1863 = vmatprep.subr.mxu0 0.0
    %1864 = vmatpush1.msra.mxu0 0.0
    %1865 = vmatprep.subr.mxu0 0.0
    %1866 = vmatpush1.msra.mxu0 0.0
    %1867 = vmatprep.subr.mxu0 0.0
    %1868 = vmatpush1.msra.mxu0 0.0
    %1869 = vmatprep.subr.mxu0 0.0
    %1870 = vmatpush1.msra.mxu0 0.0
    %1871 = vmatprep.subr.mxu0 0.0
    %1872 = vmatpush1.msra.mxu0 0.0
    %1873 = vmatprep.subr.mxu0 0.0
    %1874 = vmatpush1.msra.mxu0 0.0
    %1875 = vmatprep.subr.mxu0 0.0
    %1876 = vmatpush1.msra.mxu0 0.0
    %1877 = vmatprep.subr.mxu0 0.0
    %1878 = vmatpush1.msra.mxu0 0.0
    %1879 = vmatprep.subr.mxu0 0.0
    %1880 = vmatpush1.msra.mxu0 0.0
    %1881 = vmatprep.subr.mxu0 0.0
    %1882 = vmatpush1.msra.mxu0 0.0
    %1883 = vmatprep.subr.mxu0 0.0
    %1884 = vmatpush1.msra.mxu0 0.0
    %1885 = vmatprep.subr.mxu0 0.0
    %1886 = vmatpush1.msra.mxu0 0.0
    %1887 = vmatprep.subr.mxu0 0.0
    %1888 = vmatpush1.msra.mxu0 0.0
    %1889 = vmatprep.subr.mxu0 0.0
    %1890 = vmatpush1.msra.mxu0 0.0
    %1891 = vmatprep.subr.mxu0 0.0
    %1892 = vmatpush1.msra.mxu0 0.0
    %1893 = vmatprep.subr.mxu0 0.0
    %1894 = vmatpush1.msra.mxu0 0.0
    %1895 = vmatprep.subr.mxu0 0.0
    %1896 = vmatpush1.msra.mxu0 0.0
    %1897 = vmatprep.subr.mxu0 0.0
    %1898 = vmatpush1.msra.mxu0 0.0
    %1899 = vmatprep.subr.mxu0 0.0
    %1900 = vmatpush1.msra.mxu0 0.0
    %1901 = vmatprep.subr.mxu0 0.0
    %1902 = vmatpush1.msra.mxu0 0.0
    %1903 = vmatprep.subr.mxu0 0.0
    %1904 = vmatpush1.msra.mxu0 0.0
    %1905 = vmatprep.subr.mxu0 0.0
    %1906 = vmatpush1.msra.mxu0 0.0
    %1907 = vmatprep.mubr.f32.mxu0 0.0
    %1908 = vmatmul.mubr.f32.gmra.mrb[0].mxu0 %v1841
    %v1909 = vpop.f32.mrb[0].mxu0
    %v1910 = vadd.f32 0.0, %v1909
    %v1911 = vpop.f32.mrb[0].mxu0
    %v1912 = vadd.f32 0.0, %v1911
    %1913 = vdwg.mxu0
    %v1914 = vadd.f32 %v1836, %v1910
    %v1915 = vadd.f32 %v1837, %v1912
    %v1916 = vxor.u32 %v1914, 2147483648
    %v1917 = vmul.f32 %v1916, 1.442695
    %v1918 = vpow.pop %v1917
    %v1919 = vadd.f32 %v1918, 1.0
    %v1920 = vrcp.pop %v1919
    %v1921 = vmul.f32 1.0, %v1920
    %v1922 = vtanh.pop %v1915
    %v1923 = vxor.u32 %v1915, 2147483648
    %v1924 = vmul.f32 %v1923, 1.442695
    %v1925 = vpow.pop %v1924
    %v1926 = vadd.f32 %v1925, 1.0
    %v1927 = vrcp.pop %v1926
    %v1928 = vmul.f32 1.0, %v1927
    %v1929 = vmul.f32 %v1921, %v1825
    %v1930 = vmul.f32 %v1921, %v1922
    %1932 = vrot.lane.b32.xlu0 %v1930, 64
    %v1933 = vpop.permute.xlu0 %1932
    %v1935 = vadd.f32 %v1929, %v1933
    %v1936 = vtanh.pop %v1935
    %v1937 = vmul.f32 %v1928, %v1936
    %v1938 = vrot.slane %v1586, 3
    %v1939 = vrot.slane %v1588, 3
    %v1942 = vrot.slane %v1592, 2
    %v1943 = vrot.slane %v1594, 2
    %v1946 = vsel %vm1602, %v1938, %v1942
    %v1947 = vsel %vm1602, %v1939, %v1943
    %1949 = vrot.lane.b32.xlu0 %v1937, 64
    %v1950 = vpop.permute.xlu0 %1949
    %v1951 = vsel %vm1621, %v1950, 0
    %1953 = vmatprep.subr.mxu0 %v1606
    %1954 = vmatpush1.msra.mxu0 %v1605
    %1955 = vmatprep.subr.mxu0 %v1608
    %1956 = vmatpush1.msra.mxu0 %v1607
    %1957 = vmatprep.subr.mxu0 %v1610
    %1958 = vmatpush1.msra.mxu0 %v1609
    %1959 = vmatprep.subr.mxu0 %v1612
    %1960 = vmatpush1.msra.mxu0 %v1611
    %1961 = vmatprep.subr.mxu0 %v1614
    %1962 = vmatpush1.msra.mxu0 %v1613
    %1963 = vmatprep.subr.mxu0 %v1616
    %1964 = vmatpush1.msra.mxu0 %v1615
    %1965 = vmatprep.subr.mxu0 %v1618
    %1966 = vmatpush1.msra.mxu0 %v1617
    %1967 = vmatprep.subr.mxu0 %v1620
    %1968 = vmatpush1.msra.mxu0 %v1619
    %1969 = vmatprep.subr.mxu0 0.0
    %1970 = vmatpush1.msra.mxu0 0.0
    %1971 = vmatprep.subr.mxu0 0.0
    %1972 = vmatpush1.msra.mxu0 0.0
    %1973 = vmatprep.subr.mxu0 0.0
    %1974 = vmatpush1.msra.mxu0 0.0
    %1975 = vmatprep.subr.mxu0 0.0
    %1976 = vmatpush1.msra.mxu0 0.0
    %1977 = vmatprep.subr.mxu0 0.0
    %1978 = vmatpush1.msra.mxu0 0.0
    %1979 = vmatprep.subr.mxu0 0.0
    %1980 = vmatpush1.msra.mxu0 0.0
    %1981 = vmatprep.subr.mxu0 0.0
    %1982 = vmatpush1.msra.mxu0 0.0
    %1983 = vmatprep.subr.mxu0 0.0
    %1984 = vmatpush1.msra.mxu0 0.0
    %1985 = vmatprep.subr.mxu0 0.0
    %1986 = vmatpush1.msra.mxu0 0.0
    %1987 = vmatprep.subr.mxu0 0.0
    %1988 = vmatpush1.msra.mxu0 0.0
    %1989 = vmatprep.subr.mxu0 0.0
    %1990 = vmatpush1.msra.mxu0 0.0
    %1991 = vmatprep.subr.mxu0 0.0
    %1992 = vmatpush1.msra.mxu0 0.0
    %1993 = vmatprep.subr.mxu0 0.0
    %1994 = vmatpush1.msra.mxu0 0.0
    %1995 = vmatprep.subr.mxu0 0.0
    %1996 = vmatpush1.msra.mxu0 0.0
    %1997 = vmatprep.subr.mxu0 0.0
    %1998 = vmatpush1.msra.mxu0 0.0
    %1999 = vmatprep.subr.mxu0 0.0
    %2000 = vmatpush1.msra.mxu0 0.0
    %2001 = vmatprep.subr.mxu0 0.0
    %2002 = vmatpush1.msra.mxu0 0.0
    %2003 = vmatprep.subr.mxu0 0.0
    %2004 = vmatpush1.msra.mxu0 0.0
    %2005 = vmatprep.subr.mxu0 0.0
    %2006 = vmatpush1.msra.mxu0 0.0
    %2007 = vmatprep.subr.mxu0 0.0
    %2008 = vmatpush1.msra.mxu0 0.0
    %2009 = vmatprep.subr.mxu0 0.0
    %2010 = vmatpush1.msra.mxu0 0.0
    %2011 = vmatprep.subr.mxu0 0.0
    %2012 = vmatpush1.msra.mxu0 0.0
    %2013 = vmatprep.subr.mxu0 0.0
    %2014 = vmatpush1.msra.mxu0 0.0
    %2015 = vmatprep.subr.mxu0 0.0
    %2016 = vmatpush1.msra.mxu0 0.0
    %2017 = vmatprep.mubr.f32.mxu0 0.0
    %2018 = vmatmul.mubr.f32.gmra.mrb[0].mxu0 %v1951
    %v2019 = vpop.f32.mrb[0].mxu0
    %v2020 = vadd.f32 0.0, %v2019
    %v2021 = vpop.f32.mrb[0].mxu0
    %v2022 = vadd.f32 0.0, %v2021
    %2023 = vdwg.mxu0
    %v2024 = vadd.f32 %v1946, %v2020
    %v2025 = vadd.f32 %v1947, %v2022
    %v2026 = vxor.u32 %v2024, 2147483648
    %v2027 = vmul.f32 %v2026, 1.442695
    %v2028 = vpow.pop %v2027
    %v2029 = vadd.f32 %v2028, 1.0
    %v2030 = vrcp.pop %v2029
    %v2031 = vmul.f32 1.0, %v2030
    %v2032 = vtanh.pop %v2025
    %v2033 = vxor.u32 %v2025, 2147483648
    %v2034 = vmul.f32 %v2033, 1.442695
    %v2035 = vpow.pop %v2034
    %v2036 = vadd.f32 %v2035, 1.0
    %v2037 = vrcp.pop %v2036
    %v2038 = vmul.f32 1.0, %v2037
    %v2039 = vmul.f32 %v2031, %v1935
    %v2040 = vmul.f32 %v2031, %v2032
    %2042 = vrot.lane.b32.xlu0 %v2040, 64
    %v2043 = vpop.permute.xlu0 %2042
    %v2045 = vadd.f32 %v2039, %v2043
    %v2046 = vtanh.pop %v2045
    %v2047 = vmul.f32 %v2038, %v2046
    %v2048 = vrot.slane %v1586, 4
    %v2049 = vrot.slane %v1588, 4
    %v2052 = vrot.slane %v1592, 3
    %v2053 = vrot.slane %v1594, 3
    %v2056 = vsel %vm1602, %v2048, %v2052
    %v2057 = vsel %vm1602, %v2049, %v2053
    %2059 = vrot.lane.b32.xlu0 %v2047, 64
    %v2060 = vpop.permute.xlu0 %2059
    %v2061 = vsel %vm1621, %v2060, 0
    %2063 = vmatprep.subr.mxu0 %v1606
    %2064 = vmatpush1.msra.mxu0 %v1605
    %2065 = vmatprep.subr.mxu0 %v1608
    %2066 = vmatpush1.msra.mxu0 %v1607
    %2067 = vmatprep.subr.mxu0 %v1610
    %2068 = vmatpush1.msra.mxu0 %v1609
    %2069 = vmatprep.subr.mxu0 %v1612
    %2070 = vmatpush1.msra.mxu0 %v1611
    %2071 = vmatprep.subr.mxu0 %v1614
    %2072 = vmatpush1.msra.mxu0 %v1613
    %2073 = vmatprep.subr.mxu0 %v1616
    %2074 = vmatpush1.msra.mxu0 %v1615
    %2075 = vmatprep.subr.mxu0 %v1618
    %2076 = vmatpush1.msra.mxu0 %v1617
    %2077 = vmatprep.subr.mxu0 %v1620
    %2078 = vmatpush1.msra.mxu0 %v1619
    %2079 = vmatprep.subr.mxu0 0.0
    %2080 = vmatpush1.msra.mxu0 0.0
    %2081 = vmatprep.subr.mxu0 0.0
    %2082 = vmatpush1.msra.mxu0 0.0
    %2083 = vmatprep.subr.mxu0 0.0
    %2084 = vmatpush1.msra.mxu0 0.0
    %2085 = vmatprep.subr.mxu0 0.0
    %2086 = vmatpush1.msra.mxu0 0.0
    %2087 = vmatprep.subr.mxu0 0.0
    %2088 = vmatpush1.msra.mxu0 0.0
    %2089 = vmatprep.subr.mxu0 0.0
    %2090 = vmatpush1.msra.mxu0 0.0
    %2091 = vmatprep.subr.mxu0 0.0
    %2092 = vmatpush1.msra.mxu0 0.0
    %2093 = vmatprep.subr.mxu0 0.0
    %2094 = vmatpush1.msra.mxu0 0.0
    %2095 = vmatprep.subr.mxu0 0.0
    %2096 = vmatpush1.msra.mxu0 0.0
    %2097 = vmatprep.subr.mxu0 0.0
    %2098 = vmatpush1.msra.mxu0 0.0
    %2099 = vmatprep.subr.mxu0 0.0
    %2100 = vmatpush1.msra.mxu0 0.0
    %2101 = vmatprep.subr.mxu0 0.0
    %2102 = vmatpush1.msra.mxu0 0.0
    %2103 = vmatprep.subr.mxu0 0.0
    %2104 = vmatpush1.msra.mxu0 0.0
    %2105 = vmatprep.subr.mxu0 0.0
    %2106 = vmatpush1.msra.mxu0 0.0
    %2107 = vmatprep.subr.mxu0 0.0
    %2108 = vmatpush1.msra.mxu0 0.0
    %2109 = vmatprep.subr.mxu0 0.0
    %2110 = vmatpush1.msra.mxu0 0.0
    %2111 = vmatprep.subr.mxu0 0.0
    %2112 = vmatpush1.msra.mxu0 0.0
    %2113 = vmatprep.subr.mxu0 0.0
    %2114 = vmatpush1.msra.mxu0 0.0
    %2115 = vmatprep.subr.mxu0 0.0
    %2116 = vmatpush1.msra.mxu0 0.0
    %2117 = vmatprep.subr.mxu0 0.0
    %2118 = vmatpush1.msra.mxu0 0.0
    %2119 = vmatprep.subr.mxu0 0.0
    %2120 = vmatpush1.msra.mxu0 0.0
    %2121 = vmatprep.subr.mxu0 0.0
    %2122 = vmatpush1.msra.mxu0 0.0
    %2123 = vmatprep.subr.mxu0 0.0
    %2124 = vmatpush1.msra.mxu0 0.0
    %2125 = vmatprep.subr.mxu0 0.0
    %2126 = vmatpush1.msra.mxu0 0.0
    %2127 = vmatprep.mubr.f32.mxu0 0.0
    %2128 = vmatmul.mubr.f32.gmra.mrb[0].mxu0 %v2061
    %v2129 = vpop.f32.mrb[0].mxu0
    %v2130 = vadd.f32 0.0, %v2129
    %v2131 = vpop.f32.mrb[0].mxu0
    %v2132 = vadd.f32 0.0, %v2131
    %2133 = vdwg.mxu0
    %v2134 = vadd.f32 %v2056, %v2130
    %v2135 = vadd.f32 %v2057, %v2132
    %v2136 = vxor.u32 %v2134, 2147483648
    %v2137 = vmul.f32 %v2136, 1.442695
    %v2138 = vpow.pop %v2137
    %v2139 = vadd.f32 %v2138, 1.0
    %v2140 = vrcp.pop %v2139
    %v2141 = vmul.f32 1.0, %v2140
    %v2142 = vtanh.pop %v2135
    %v2143 = vxor.u32 %v2135, 2147483648
    %v2144 = vmul.f32 %v2143, 1.442695
    %v2145 = vpow.pop %v2144
    %v2146 = vadd.f32 %v2145, 1.0
    %v2147 = vrcp.pop %v2146
    %v2148 = vmul.f32 1.0, %v2147
    %v2149 = vmul.f32 %v2141, %v2045
    %v2150 = vmul.f32 %v2141, %v2142
    %2152 = vrot.lane.b32.xlu0 %v2150, 64
    %v2153 = vpop.permute.xlu0 %2152
    %v2155 = vadd.f32 %v2149, %v2153
    %v2156 = vtanh.pop %v2155
    %v2157 = vmul.f32 %v2148, %v2156
    %v2158 = vrot.slane %v1586, 5
    %v2159 = vrot.slane %v1588, 5
    %v2162 = vrot.slane %v1592, 4
    %v2163 = vrot.slane %v1594, 4
    %v2166 = vsel %vm1602, %v2158, %v2162
    %v2167 = vsel %vm1602, %v2159, %v2163
    %2169 = vrot.lane.b32.xlu0 %v2157, 64
    %v2170 = vpop.permute.xlu0 %2169
    %v2171 = vsel %vm1621, %v2170, 0
    %2173 = vmatprep.subr.mxu0 %v1606
    %2174 = vmatpush1.msra.mxu0 %v1605
    %2175 = vmatprep.subr.mxu0 %v1608
    %2176 = vmatpush1.msra.mxu0 %v1607
    %2177 = vmatprep.subr.mxu0 %v1610
    %2178 = vmatpush1.msra.mxu0 %v1609
    %2179 = vmatprep.subr.mxu0 %v1612
    %2180 = vmatpush1.msra.mxu0 %v1611
    %2181 = vmatprep.subr.mxu0 %v1614
    %2182 = vmatpush1.msra.mxu0 %v1613
    %2183 = vmatprep.subr.mxu0 %v1616
    %2184 = vmatpush1.msra.mxu0 %v1615
    %2185 = vmatprep.subr.mxu0 %v1618
    %2186 = vmatpush1.msra.mxu0 %v1617
    %2187 = vmatprep.subr.mxu0 %v1620
    %2188 = vmatpush1.msra.mxu0 %v1619
    %2189 = vmatprep.subr.mxu0 0.0
    %2190 = vmatpush1.msra.mxu0 0.0
    %2191 = vmatprep.subr.mxu0 0.0
    %2192 = vmatpush1.msra.mxu0 0.0
    %2193 = vmatprep.subr.mxu0 0.0
    %2194 = vmatpush1.msra.mxu0 0.0
    %2195 = vmatprep.subr.mxu0 0.0
    %2196 = vmatpush1.msra.mxu0 0.0
    %2197 = vmatprep.subr.mxu0 0.0
    %2198 = vmatpush1.msra.mxu0 0.0
    %2199 = vmatprep.subr.mxu0 0.0
    %2200 = vmatpush1.msra.mxu0 0.0
    %2201 = vmatprep.subr.mxu0 0.0
    %2202 = vmatpush1.msra.mxu0 0.0
    %2203 = vmatprep.subr.mxu0 0.0
    %2204 = vmatpush1.msra.mxu0 0.0
    %2205 = vmatprep.subr.mxu0 0.0
    %2206 = vmatpush1.msra.mxu0 0.0
    %2207 = vmatprep.subr.mxu0 0.0
    %2208 = vmatpush1.msra.mxu0 0.0
    %2209 = vmatprep.subr.mxu0 0.0
    %2210 = vmatpush1.msra.mxu0 0.0
    %2211 = vmatprep.subr.mxu0 0.0
    %2212 = vmatpush1.msra.mxu0 0.0
    %2213 = vmatprep.subr.mxu0 0.0
    %2214 = vmatpush1.msra.mxu0 0.0
    %2215 = vmatprep.subr.mxu0 0.0
    %2216 = vmatpush1.msra.mxu0 0.0
    %2217 = vmatprep.subr.mxu0 0.0
    %2218 = vmatpush1.msra.mxu0 0.0
    %2219 = vmatprep.subr.mxu0 0.0
    %2220 = vmatpush1.msra.mxu0 0.0
    %2221 = vmatprep.subr.mxu0 0.0
    %2222 = vmatpush1.msra.mxu0 0.0
    %2223 = vmatprep.subr.mxu0 0.0
    %2224 = vmatpush1.msra.mxu0 0.0
    %2225 = vmatprep.subr.mxu0 0.0
    %2226 = vmatpush1.msra.mxu0 0.0
    %2227 = vmatprep.subr.mxu0 0.0
    %2228 = vmatpush1.msra.mxu0 0.0
    %2229 = vmatprep.subr.mxu0 0.0
    %2230 = vmatpush1.msra.mxu0 0.0
    %2231 = vmatprep.subr.mxu0 0.0
    %2232 = vmatpush1.msra.mxu0 0.0
    %2233 = vmatprep.subr.mxu0 0.0
    %2234 = vmatpush1.msra.mxu0 0.0
    %2235 = vmatprep.subr.mxu0 0.0
    %2236 = vmatpush1.msra.mxu0 0.0
    %2237 = vmatprep.mubr.f32.mxu0 0.0
    %2238 = vmatmul.mubr.f32.gmra.mrb[0].mxu0 %v2171
    %v2239 = vpop.f32.mrb[0].mxu0
    %v2240 = vadd.f32 0.0, %v2239
    %v2241 = vpop.f32.mrb[0].mxu0
    %v2242 = vadd.f32 0.0, %v2241
    %2243 = vdwg.mxu0
    %v2244 = vadd.f32 %v2166, %v2240
    %v2245 = vadd.f32 %v2167, %v2242
    %v2246 = vxor.u32 %v2244, 2147483648
    %v2247 = vmul.f32 %v2246, 1.442695
    %v2248 = vpow.pop %v2247
    %v2249 = vadd.f32 %v2248, 1.0
    %v2250 = vrcp.pop %v2249
    %v2251 = vmul.f32 1.0, %v2250
    %v2252 = vtanh.pop %v2245
    %v2253 = vxor.u32 %v2245, 2147483648
    %v2254 = vmul.f32 %v2253, 1.442695
    %v2255 = vpow.pop %v2254
    %v2256 = vadd.f32 %v2255, 1.0
    %v2257 = vrcp.pop %v2256
    %v2258 = vmul.f32 1.0, %v2257
    %v2259 = vmul.f32 %v2251, %v2155
    %v2260 = vmul.f32 %v2251, %v2252
    %2262 = vrot.lane.b32.xlu0 %v2260, 64
    %v2263 = vpop.permute.xlu0 %2262
    %v2265 = vadd.f32 %v2259, %v2263
    %v2266 = vtanh.pop %v2265
    %v2267 = vmul.f32 %v2258, %v2266
    %v2268 = vrot.slane %v1586, 6
    %v2269 = vrot.slane %v1588, 6
    %v2272 = vrot.slane %v1592, 5
    %v2273 = vrot.slane %v1594, 5
    %v2276 = vsel %vm1602, %v2268, %v2272
    %v2277 = vsel %vm1602, %v2269, %v2273
    %2279 = vrot.lane.b32.xlu0 %v2267, 64
    %v2280 = vpop.permute.xlu0 %2279
    %v2281 = vsel %vm1621, %v2280, 0
    %2283 = vmatprep.subr.mxu0 %v1606
    %2284 = vmatpush1.msra.mxu0 %v1605
    %2285 = vmatprep.subr.mxu0 %v1608
    %2286 = vmatpush1.msra.mxu0 %v1607
    %2287 = vmatprep.subr.mxu0 %v1610
    %2288 = vmatpush1.msra.mxu0 %v1609
    %2289 = vmatprep.subr.mxu0 %v1612
    %2290 = vmatpush1.msra.mxu0 %v1611
    %2291 = vmatprep.subr.mxu0 %v1614
    %2292 = vmatpush1.msra.mxu0 %v1613
    %2293 = vmatprep.subr.mxu0 %v1616
    %2294 = vmatpush1.msra.mxu0 %v1615
    %2295 = vmatprep.subr.mxu0 %v1618
    %2296 = vmatpush1.msra.mxu0 %v1617
    %2297 = vmatprep.subr.mxu0 %v1620
    %2298 = vmatpush1.msra.mxu0 %v1619
    %2299 = vmatprep.subr.mxu0 0.0
    %2300 = vmatpush1.msra.mxu0 0.0
    %2301 = vmatprep.subr.mxu0 0.0
    %2302 = vmatpush1.msra.mxu0 0.0
    %2303 = vmatprep.subr.mxu0 0.0
    %2304 = vmatpush1.msra.mxu0 0.0
    %2305 = vmatprep.subr.mxu0 0.0
    %2306 = vmatpush1.msra.mxu0 0.0
    %2307 = vmatprep.subr.mxu0 0.0
    %2308 = vmatpush1.msra.mxu0 0.0
    %2309 = vmatprep.subr.mxu0 0.0
    %2310 = vmatpush1.msra.mxu0 0.0
    %2311 = vmatprep.subr.mxu0 0.0
    %2312 = vmatpush1.msra.mxu0 0.0
    %2313 = vmatprep.subr.mxu0 0.0
    %2314 = vmatpush1.msra.mxu0 0.0
    %2315 = vmatprep.subr.mxu0 0.0
    %2316 = vmatpush1.msra.mxu0 0.0
    %2317 = vmatprep.subr.mxu0 0.0
    %2318 = vmatpush1.msra.mxu0 0.0
    %2319 = vmatprep.subr.mxu0 0.0
    %2320 = vmatpush1.msra.mxu0 0.0
    %2321 = vmatprep.subr.mxu0 0.0
    %2322 = vmatpush1.msra.mxu0 0.0
    %2323 = vmatprep.subr.mxu0 0.0
    %2324 = vmatpush1.msra.mxu0 0.0
    %2325 = vmatprep.subr.mxu0 0.0
    %2326 = vmatpush1.msra.mxu0 0.0
    %2327 = vmatprep.subr.mxu0 0.0
    %2328 = vmatpush1.msra.mxu0 0.0
    %2329 = vmatprep.subr.mxu0 0.0
    %2330 = vmatpush1.msra.mxu0 0.0
    %2331 = vmatprep.subr.mxu0 0.0
    %2332 = vmatpush1.msra.mxu0 0.0
    %2333 = vmatprep.subr.mxu0 0.0
    %2334 = vmatpush1.msra.mxu0 0.0
    %2335 = vmatprep.subr.mxu0 0.0
    %2336 = vmatpush1.msra.mxu0 0.0
    %2337 = vmatprep.subr.mxu0 0.0
    %2338 = vmatpush1.msra.mxu0 0.0
    %2339 = vmatprep.subr.mxu0 0.0
    %2340 = vmatpush1.msra.mxu0 0.0
    %2341 = vmatprep.subr.mxu0 0.0
    %2342 = vmatpush1.msra.mxu0 0.0
    %2343 = vmatprep.subr.mxu0 0.0
    %2344 = vmatpush1.msra.mxu0 0.0
    %2345 = vmatprep.subr.mxu0 0.0
    %2346 = vmatpush1.msra.mxu0 0.0
    %2347 = vmatprep.mubr.f32.mxu0 0.0
    %2348 = vmatmul.mubr.f32.gmra.mrb[0].mxu0 %v2281
    %v2349 = vpop.f32.mrb[0].mxu0
    %v2350 = vadd.f32 0.0, %v2349
    %v2351 = vpop.f32.mrb[0].mxu0
    %v2352 = vadd.f32 0.0, %v2351
    %2353 = vdwg.mxu0
    %v2354 = vadd.f32 %v2276, %v2350
    %v2355 = vadd.f32 %v2277, %v2352
    %v2356 = vxor.u32 %v2354, 2147483648
    %v2357 = vmul.f32 %v2356, 1.442695
    %v2358 = vpow.pop %v2357
    %v2359 = vadd.f32 %v2358, 1.0
    %v2360 = vrcp.pop %v2359
    %v2361 = vmul.f32 1.0, %v2360
    %v2362 = vtanh.pop %v2355
    %v2363 = vxor.u32 %v2355, 2147483648
    %v2364 = vmul.f32 %v2363, 1.442695
    %v2365 = vpow.pop %v2364
    %v2366 = vadd.f32 %v2365, 1.0
    %v2367 = vrcp.pop %v2366
    %v2368 = vmul.f32 1.0, %v2367
    %v2369 = vmul.f32 %v2361, %v2265
    %v2370 = vmul.f32 %v2361, %v2362
    %2372 = vrot.lane.b32.xlu0 %v2370, 64
    %v2373 = vpop.permute.xlu0 %2372
    %v2375 = vadd.f32 %v2369, %v2373
    %v2376 = vtanh.pop %v2375
    %v2377 = vmul.f32 %v2368, %v2376
    %v2378 = vrot.slane %v1586, 7
    %v2379 = vrot.slane %v1588, 7
    %v2382 = vrot.slane %v1592, 6
    %v2383 = vrot.slane %v1594, 6
    %v2386 = vsel %vm1602, %v2378, %v2382
    %v2387 = vsel %vm1602, %v2379, %v2383
    %2389 = vrot.lane.b32.xlu0 %v2377, 64
    %v2390 = vpop.permute.xlu0 %2389
    %v2391 = vsel %vm1621, %v2390, 0
    %2393 = vmatprep.subr.mxu0 %v1606
    %2394 = vmatpush1.msra.mxu0 %v1605
    %2395 = vmatprep.subr.mxu0 %v1608
    %2396 = vmatpush1.msra.mxu0 %v1607
    %2397 = vmatprep.subr.mxu0 %v1610
    %2398 = vmatpush1.msra.mxu0 %v1609
    %2399 = vmatprep.subr.mxu0 %v1612
    %2400 = vmatpush1.msra.mxu0 %v1611
    %2401 = vmatprep.subr.mxu0 %v1614
    %2402 = vmatpush1.msra.mxu0 %v1613
    %2403 = vmatprep.subr.mxu0 %v1616
    %2404 = vmatpush1.msra.mxu0 %v1615
    %2405 = vmatprep.subr.mxu0 %v1618
    %2406 = vmatpush1.msra.mxu0 %v1617
    %2407 = vmatprep.subr.mxu0 %v1620
    %2408 = vmatpush1.msra.mxu0 %v1619
    %2409 = vmatprep.subr.mxu0 0.0
    %2410 = vmatpush1.msra.mxu0 0.0
    %2411 = vmatprep.subr.mxu0 0.0
    %2412 = vmatpush1.msra.mxu0 0.0
    %2413 = vmatprep.subr.mxu0 0.0
    %2414 = vmatpush1.msra.mxu0 0.0
    %2415 = vmatprep.subr.mxu0 0.0
    %2416 = vmatpush1.msra.mxu0 0.0
    %2417 = vmatprep.subr.mxu0 0.0
    %2418 = vmatpush1.msra.mxu0 0.0
    %2419 = vmatprep.subr.mxu0 0.0
    %2420 = vmatpush1.msra.mxu0 0.0
    %2421 = vmatprep.subr.mxu0 0.0
    %2422 = vmatpush1.msra.mxu0 0.0
    %2423 = vmatprep.subr.mxu0 0.0
    %2424 = vmatpush1.msra.mxu0 0.0
    %2425 = vmatprep.subr.mxu0 0.0
    %2426 = vmatpush1.msra.mxu0 0.0
    %2427 = vmatprep.subr.mxu0 0.0
    %2428 = vmatpush1.msra.mxu0 0.0
    %2429 = vmatprep.subr.mxu0 0.0
    %2430 = vmatpush1.msra.mxu0 0.0
    %2431 = vmatprep.subr.mxu0 0.0
    %2432 = vmatpush1.msra.mxu0 0.0
    %2433 = vmatprep.subr.mxu0 0.0
    %2434 = vmatpush1.msra.mxu0 0.0
    %2435 = vmatprep.subr.mxu0 0.0
    %2436 = vmatpush1.msra.mxu0 0.0
    %2437 = vmatprep.subr.mxu0 0.0
    %2438 = vmatpush1.msra.mxu0 0.0
    %2439 = vmatprep.subr.mxu0 0.0
    %2440 = vmatpush1.msra.mxu0 0.0
    %2441 = vmatprep.subr.mxu0 0.0
    %2442 = vmatpush1.msra.mxu0 0.0
    %2443 = vmatprep.subr.mxu0 0.0
    %2444 = vmatpush1.msra.mxu0 0.0
    %2445 = vmatprep.subr.mxu0 0.0
    %2446 = vmatpush1.msra.mxu0 0.0
    %2447 = vmatprep.subr.mxu0 0.0
    %2448 = vmatpush1.msra.mxu0 0.0
    %2449 = vmatprep.subr.mxu0 0.0
    %2450 = vmatpush1.msra.mxu0 0.0
    %2451 = vmatprep.subr.mxu0 0.0
    %2452 = vmatpush1.msra.mxu0 0.0
    %2453 = vmatprep.subr.mxu0 0.0
    %2454 = vmatpush1.msra.mxu0 0.0
    %2455 = vmatprep.subr.mxu0 0.0
    %2456 = vmatpush1.msra.mxu0 0.0
    %2457 = vmatprep.mubr.f32.mxu0 0.0
    %2458 = vmatmul.mubr.f32.gmra.mrb[0].mxu0 %v2391
    %v2459 = vpop.f32.mrb[0].mxu0
    %v2460 = vadd.f32 0.0, %v2459
    %v2461 = vpop.f32.mrb[0].mxu0
    %v2462 = vadd.f32 0.0, %v2461
    %2463 = vdwg.mxu0
    %v2464 = vadd.f32 %v2386, %v2460
    %v2465 = vadd.f32 %v2387, %v2462
    %v2466 = vxor.u32 %v2464, 2147483648
    %v2467 = vmul.f32 %v2466, 1.442695
    %v2468 = vpow.pop %v2467
    %v2469 = vadd.f32 %v2468, 1.0
    %v2470 = vrcp.pop %v2469
    %v2471 = vmul.f32 1.0, %v2470
    %v2472 = vtanh.pop %v2465
    %v2473 = vxor.u32 %v2465, 2147483648
    %v2474 = vmul.f32 %v2473, 1.442695
    %v2475 = vpow.pop %v2474
    %v2476 = vadd.f32 %v2475, 1.0
    %v2477 = vrcp.pop %v2476
    %v2478 = vmul.f32 1.0, %v2477
    %v2479 = vmul.f32 %v2471, %v2375
    %v2480 = vmul.f32 %v2471, %v2472
    %2482 = vrot.lane.b32.xlu0 %v2480, 64
    %v2483 = vpop.permute.xlu0 %2482
    %v2485 = vadd.f32 %v2479, %v2483
    %v2486 = vtanh.pop %v2485
    %v2487 = vmul.f32 %v2478, %v2486
    %v2488 = vld [vmem:[%s13] sm:$0xff]
    %v2489 = vld [vmem:[%s13 + $0x8] sm:$0xff]
    %v2490 = vld [vmem:[%s13 + $0x10] sm:$0xff]
    %v2491 = vld [vmem:[%s13 + $0x18] sm:$0xff]
    %v2492 = vld [vmem:[%s13 + $0x20] sm:$0xff]
    %v2493 = vld [vmem:[%s13 + $0x28] sm:$0xff]
    %v2494 = vld [vmem:[%s13 + $0x30] sm:$0xff]
    %v2495 = vld [vmem:[%s13 + $0x38] sm:$0xff]
    %v2496 = vld [vmem:[%s14] sm:$0x1]
    %v2498 = vlaneseq
    %v2499 = vshrl.u32 %v2498, 7
    %v2500 = vsub.s32 0, %v2499
    %v2501 = vrot.slane %v2496, %v2500
    %2504 = vrot.lane.b32.xlu0 %v2487, 64
    %v2505 = vpop.permute.xlu0 %2504
    %v2506 = vsel %vm1621, %v2505, 0
    %2508 = vmatprep.subr.mxu0 0.0
    %2509 = vmatpush1.msra.mxu0 %v2488
    %2510 = vmatprep.subr.mxu0 0.0
    %2511 = vmatpush1.msra.mxu0 %v2489
    %2512 = vmatprep.subr.mxu0 0.0
    %2513 = vmatpush1.msra.mxu0 %v2490
    %2514 = vmatprep.subr.mxu0 0.0
    %2515 = vmatpush1.msra.mxu0 %v2491
    %2516 = vmatprep.subr.mxu0 0.0
    %2517 = vmatpush1.msra.mxu0 %v2492
    %2518 = vmatprep.subr.mxu0 0.0
    %2519 = vmatpush1.msra.mxu0 %v2493
    %2520 = vmatprep.subr.mxu0 0.0
    %2521 = vmatpush1.msra.mxu0 %v2494
    %2522 = vmatprep.subr.mxu0 0.0
    %2523 = vmatpush1.msra.mxu0 %v2495
    %2524 = vmatprep.subr.mxu0 0.0
    %2525 = vmatpush1.msra.mxu0 0.0
    %2526 = vmatprep.subr.mxu0 0.0
    %2527 = vmatpush1.msra.mxu0 0.0
    %2528 = vmatprep.subr.mxu0 0.0
    %2529 = vmatpush1.msra.mxu0 0.0
    %2530 = vmatprep.subr.mxu0 0.0
    %2531 = vmatpush1.msra.mxu0 0.0
    %2532 = vmatprep.subr.mxu0 0.0
    %2533 = vmatpush1.msra.mxu0 0.0
    %2534 = vmatprep.subr.mxu0 0.0
    %2535 = vmatpush1.msra.mxu0 0.0
    %2536 = vmatprep.subr.mxu0 0.0
    %2537 = vmatpush1.msra.mxu0 0.0
    %2538 = vmatprep.subr.mxu0 0.0
    %2539 = vmatpush1.msra.mxu0 0.0
    %2540 = vmatprep.subr.mxu0 0.0
    %2541 = vmatpush1.msra.mxu0 0.0
    %2542 = vmatprep.subr.mxu0 0.0
    %2543 = vmatpush1.msra.mxu0 0.0
    %2544 = vmatprep.subr.mxu0 0.0
    %2545 = vmatpush1.msra.mxu0 0.0
    %2546 = vmatprep.subr.mxu0 0.0
    %2547 = vmatpush1.msra.mxu0 0.0
    %2548 = vmatprep.subr.mxu0 0.0
    %2549 = vmatpush1.msra.mxu0 0.0
    %2550 = vmatprep.subr.mxu0 0.0
    %2551 = vmatpush1.msra.mxu0 0.0
    %2552 = vmatprep.subr.mxu0 0.0
    %2553 = vmatpush1.msra.mxu0 0.0
    %2554 = vmatprep.subr.mxu0 0.0
    %2555 = vmatpush1.msra.mxu0 0.0
    %2556 = vmatprep.subr.mxu0 0.0
    %2557 = vmatpush1.msra.mxu0 0.0
    %2558 = vmatprep.subr.mxu0 0.0
    %2559 = vmatpush1.msra.mxu0 0.0
    %2560 = vmatprep.subr.mxu0 0.0
    %2561 = vmatpush1.msra.mxu0 0.0
    %2562 = vmatprep.subr.mxu0 0.0
    %2563 = vmatpush1.msra.mxu0 0.0
    %2564 = vmatprep.subr.mxu0 0.0
    %2565 = vmatpush1.msra.mxu0 0.0
    %2566 = vmatprep.subr.mxu0 0.0
    %2567 = vmatpush1.msra.mxu0 0.0
    %2568 = vmatprep.subr.mxu0 0.0
    %2569 = vmatpush1.msra.mxu0 0.0
    %2570 = vmatprep.subr.mxu0 0.0
    %2571 = vmatpush1.msra.mxu0 0.0
    %2572 = vmatprep.mubr.f32.mxu0 0.0
    %2573 = vmatmul.mubr.f32.gmra.mrb[0].mxu0 %v2506
    %v2574 = vpop.f32.mrb[0].mxu0
    %v2575 = vadd.f32 %v2501, %v2574
    %v2576 = vpop.f32.mrb[0].mxu0
    %2577 = vdwg.mxu0
    %v2578 = vmax.f32 %v2575, 0.0
    %v2579 = vld [vmem:[%s15] sm:$0xff]
    %v2580 = vld [vmem:[%s15 + $0x8] sm:$0xff]
    %v2581 = vld [vmem:[%s15 + $0x10] sm:$0xff]
    %v2582 = vld [vmem:[%s15 + $0x18] sm:$0xff]
    %v2583 = vld [vmem:[%s15 + $0x20] sm:$0xff]
    %v2584 = vld [vmem:[%s15 + $0x28] sm:$0xff]
    %v2585 = vld [vmem:[%s15 + $0x30] sm:$0xff]
    %v2586 = vld [vmem:[%s15 + $0x38] sm:$0xff]
    %v2587 = vld [vmem:[%s15 + $0x40] sm:$0xff]
    %v2588 = vld [vmem:[%s15 + $0x48] sm:$0xff]
    %v2589 = vld [vmem:[%s15 + $0x50] sm:$0xff]
    %v2590 = vld [vmem:[%s15 + $0x58] sm:$0xff]
    %v2591 = vld [vmem:[%s15 + $0x60] sm:$0xff]
    %v2592 = vld [vmem:[%s15 + $0x68] sm:$0xff]
    %v2593 = vld [vmem:[%s15 + $0x70] sm:$0xff]
    %v2594 = vld [vmem:[%s15 + $0x78] sm:$0xff]
    %v2595 = vld [vmem:[%s16] sm:$0x1]
    %v2597 = vlaneseq
    %v2598 = vshrl.u32 %v2597, 7
    %v2599 = vsub.s32 0, %v2598
    %v2600 = vrot.slane %v2595, %v2599
    %2602 = vmatprep.subr.mxu0 0.0
    %2603 = vmatpush1.msra.mxu0 %v2579
    %2604 = vmatprep.subr.mxu0 0.0
    %2605 = vmatpush1.msra.mxu0 %v2580
    %2606 = vmatprep.subr.mxu0 0.0
    %2607 = vmatpush1.msra.mxu0 %v2581
    %2608 = vmatprep.subr.mxu0 0.0
    %2609 = vmatpush1.msra.mxu0 %v2582
    %2610 = vmatprep.subr.mxu0 0.0
    %2611 = vmatpush1.msra.mxu0 %v2583
    %2612 = vmatprep.subr.mxu0 0.0
    %2613 = vmatpush1.msra.mxu0 %v2584
    %2614 = vmatprep.subr.mxu0 0.0
    %2615 = vmatpush1.msra.mxu0 %v2585
    %2616 = vmatprep.subr.mxu0 0.0
    %2617 = vmatpush1.msra.mxu0 %v2586
    %2618 = vmatprep.subr.mxu0 0.0
    %2619 = vmatpush1.msra.mxu0 %v2587
    %2620 = vmatprep.subr.mxu0 0.0
    %2621 = vmatpush1.msra.mxu0 %v2588
    %2622 = vmatprep.subr.mxu0 0.0
    %2623 = vmatpush1.msra.mxu0 %v2589
    %2624 = vmatprep.subr.mxu0 0.0
    %2625 = vmatpush1.msra.mxu0 %v2590
    %2626 = vmatprep.subr.mxu0 0.0
    %2627 = vmatpush1.msra.mxu0 %v2591
    %2628 = vmatprep.subr.mxu0 0.0
    %2629 = vmatpush1.msra.mxu0 %v2592
    %2630 = vmatprep.subr.mxu0 0.0
    %2631 = vmatpush1.msra.mxu0 %v2593
    %2632 = vmatprep.subr.mxu0 0.0
    %2633 = vmatpush1.msra.mxu0 %v2594
    %2634 = vmatprep.subr.mxu0 0.0
    %2635 = vmatpush1.msra.mxu0 0.0
    %2636 = vmatprep.subr.mxu0 0.0
    %2637 = vmatpush1.msra.mxu0 0.0
    %2638 = vmatprep.subr.mxu0 0.0
    %2639 = vmatpush1.msra.mxu0 0.0
    %2640 = vmatprep.subr.mxu0 0.0
    %2641 = vmatpush1.msra.mxu0 0.0
    %2642 = vmatprep.subr.mxu0 0.0
    %2643 = vmatpush1.msra.mxu0 0.0
    %2644 = vmatprep.subr.mxu0 0.0
    %2645 = vmatpush1.msra.mxu0 0.0
    %2646 = vmatprep.subr.mxu0 0.0
    %2647 = vmatpush1.msra.mxu0 0.0
    %2648 = vmatprep.subr.mxu0 0.0
    %2649 = vmatpush1.msra.mxu0 0.0
    %2650 = vmatprep.subr.mxu0 0.0
    %2651 = vmatpush1.msra.mxu0 0.0
    %2652 = vmatprep.subr.mxu0 0.0
    %2653 = vmatpush1.msra.mxu0 0.0
    %2654 = vmatprep.subr.mxu0 0.0
    %2655 = vmatpush1.msra.mxu0 0.0
    %2656 = vmatprep.subr.mxu0 0.0
    %2657 = vmatpush1.msra.mxu0 0.0
    %2658 = vmatprep.subr.mxu0 0.0
    %2659 = vmatpush1.msra.mxu0 0.0
    %2660 = vmatprep.subr.mxu0 0.0
    %2661 = vmatpush1.msra.mxu0 0.0
    %2662 = vmatprep.subr.mxu0 0.0
    %2663 = vmatpush1.msra.mxu0 0.0
    %2664 = vmatprep.subr.mxu0 0.0
    %2665 = vmatpush1.msra.mxu0 0.0
    %2666 = vmatprep.mubr.f32.mxu0 0.0
    %2667 = vmatmul.mubr.f32.gmra.mrb[0].mxu0 %v2578
    %v2668 = vpop.f32.mrb[0].mxu0
    %v2669 = vadd.f32 %v2600, %v2668
    %v2670 = vpop.f32.mrb[0].mxu0
    %2671 = vdwg.mxu0
    %vm2672 = vcmask 58368
    %2673 = vst.msk [vmem:[#allocation2] sm:$0x3] %vm2672, %v2669
    // Predicated region
    $region70: #{cnn_lstm_forward.1} parent=1 // pred_check
      _
    $region71: #{cnn_lstm_forward.1} parent=1 // pred_check_branch
      %2675 = sbr.rel (0) target = $region73
    $region72: #{cnn_lstm_forward.1} parent=1 // pred_region
      %s2677 = ssub.s32 32, 32
      %2678 = vsyncadd [#allocation3], %s2677
      %s2680 = sshll.u32 [#allocation2], 4
      %s2681 = int_to_ptr.vmem [resolvable:$true] %s2680
      %2683 = dma.vmem_to_hbm [thread:$0]  %s2681, 32, %s17, [#allocation3]
    $region73: #{cnn_lstm_forward.1} parent=1 // pred_fallthru
      _
    // Predicated region
    $region74: #{cnn_lstm_forward.1} parent=1 // pred_check
      _
    $region75: #{cnn_lstm_forward.1} parent=1 // pred_check_branch
      %2685 = sbr.rel (0) target = $region77
    $region76: #{cnn_lstm_forward.1} parent=1 // pred_region
      %2686 = dma.done [#allocation3], 32
    $region77: #{cnn_lstm_forward.1} parent=1 // pred_fallthru
      _
    %2687 = vsyncpa [#allocation3], 1

</llo_original>
